<compile_context>
chip_gen: v5e
topology: v5e:2x2
jax: 0.10.0
libtpu: 0.0.40
codegen_flags: <defaults>
</compile_context>

<pallas_src>
import functools

import jax
import jax.numpy as jnp
import numpy as np
from jax.experimental import pallas as pl
from jax.experimental.pallas import tpu as pltpu


def _round_up(x, m):
    return (x + m - 1) // m * m


def _vmem_limit_bytes():
    """Per-generation scoped-VMEM limit (v5e/v6e: 128 MiB phys, v7x: 64 MiB)."""
    try:
        cap = int(pltpu.get_tpu_info().vmem_capacity_bytes)
    except Exception:
        cap = 64 * 1024 * 1024            # conservative (v7x-sized) fallback
    return max(32 * 1024 * 1024, min(96 * 1024 * 1024, (cap * 3) // 4))


def _compiler_params(vmem_limit):
    return pltpu.CompilerParams(dimension_semantics=("parallel",),
                                vmem_limit_bytes=int(vmem_limit))


def _pick_batch_tile(n, per_item_bytes, budget_bytes, cap):
    """Largest divisor of n (<= cap) fitting the budget, keeping grid >= 2."""
    best = 1
    for t in range(1, min(n, cap) + 1):
        if n % t or t * per_item_bytes > budget_bytes:
            continue
        if n // t >= 2 or n == 1:
            best = t
    return best


# ------------------- pass 1: im2col conv + stats + 2x2 pool ------------------
def _conv_stats_kernel(x_ref, w_ref, mx_ref, mn_ref, st_ref, acc_ref, *,
                       nb, H, W, Wpp, Cpad):
    """Per grid step: nb images.  For each image, 9 shifted MXU matmuls build
    the 3x3 conv output over a width-padded row grid, batch-stat partial sums
    are accumulated, and the 2x2 pool max/min of the raw conv output is staged
    (bf16).  Conv bias is omitted: it cancels exactly under training-mode BN."""
    Hp, Wp = H // 2, W // 2
    R = H * Wpp                                  # conv rows per image (padded W)
    # Mask for the alignment/garbage columns (hoisted out of the image loop).
    col = jax.lax.broadcasted_iota(jnp.int32, (R, 1), 0) % Wpp
    valid = (col < W).astype(jnp.float32)

    s_sum = jnp.zeros((1, Cpad), jnp.float32)
    s_sq = jnp.zeros((1, Cpad), jnp.float32)
    for b in range(nb):
        acc = None
        for k in range(9):
            dy, dx = k // 3, k % 3
            patch = x_ref[b, pl.ds(dy * Wpp + dx, R), :]          # (R, Cin) bf16
            d = jnp.dot(patch, w_ref[k], preferred_element_type=jnp.float32)
            acc = d if acc is None else acc + d

        accm = acc * valid                       # exclude garbage cols from stats
        s_sum = s_sum + jnp.sum(accm, axis=0, keepdims=True)
        s_sq = s_sq + jnp.sum(accm * acc, axis=0, keepdims=True)

        # 2x2 MaxPool folded here: stage channelwise max AND min of the raw
        # conv output; pass 2 picks one per channel by sign(BN scale) (both
        # BN and LeakyReLU are monotone, so this is exact).
        acc_ref[...] = acc.reshape(Hp, 2, Wpp, Cpad)
        even = acc_ref[:, :, pl.ds(0, Wpp // 2, stride=2), :]
        odd = acc_ref[:, :, pl.ds(1, Wpp // 2, stride=2), :]
        wmax = jnp.maximum(even, odd)
        wmin = jnp.minimum(even, odd)
        mx = jnp.maximum(wmax[:, 0], wmax[:, 1])[:, :Wp, :]       # (Hp, Wp, Cpad)
        mn = jnp.minimum(wmin[:, 0], wmin[:, 1])[:, :Wp, :]
        mx_ref[b] = mx.astype(mx_ref.dtype)
        mn_ref[b] = mn.astype(mn_ref.dtype)

    # Packed stats block: rows 0..7 = sum (broadcast), rows 8..15 = sum-of-sq.
    st_ref[0:8, :] = jnp.broadcast_to(s_sum, (8, Cpad))
    st_ref[8:16, :] = jnp.broadcast_to(s_sq, (8, Cpad))


# ----------------- pass 2: folded BN + LeakyReLU on pooled max/min -----------
def _bn_act_kernel(mx_ref, mn_ref, scale_ref, shift_ref, o_ref, *, slope):
    s = scale_ref[...].reshape(1, 1, 1, -1)
    t = shift_ref[...].reshape(1, 1, 1, -1)
    y = jnp.where(s >= 0.0,
                  mx_ref[...].astype(jnp.float32),
                  mn_ref[...].astype(jnp.float32))
    z = y * s + t                                # folded BatchNorm
    o_ref[...] = jnp.maximum(z, slope * z).astype(o_ref.dtype)   # LeakyReLU


def conv_block_forward(x, conv_w, conv_b, gamma, beta, *, eps=1e-5,
                       negative_slope=0.01):
    """x: (N, Cin, H, W) NCHW. conv_w: (Cout, Cin, 3, 3). Returns NCHW pooled."""
    N, Cin, H, W = x.shape
    Cout = conv_w.shape[0]
    if H % 2 or W % 2:
        raise ValueError("H and W must be even (MaxPool2d(2) floors odd sizes).")
    Hp, Wp = H // 2, W // 2
    Cpad = _round_up(Cout, 128)                  # lane-dense output channels
    Wpp = _round_up(W + 2, 8)                    # sublane-aligned padded width
    S = (H + 2) * Wpp + 8                        # flat rows per image (+overrun)
    vmem_limit = _vmem_limit_bytes()
    budget = (vmem_limit * 3) // 5               # headroom for temporaries

    # ---- host prep: single bf16 pass over x, no 9x im2col expansion ---------
    x_nhwc = jnp.transpose(x, (0, 2, 3, 1)).astype(jnp.bfloat16)
    x_p = jnp.pad(x_nhwc, ((0, 0), (1, 1), (1, Wpp - W - 1), (0, 0)))
    x_flat = x_p.reshape(N, (H + 2) * Wpp, Cin)
    x_flat = jnp.pad(x_flat, ((0, 0), (0, 8), (0, 0)))            # (N, S, Cin)

    # Per-tap weights: wmat[k][c, o] = conv_w[o, c, dy, dx], k = dy*3 + dx.
    wmat = jnp.transpose(conv_w, (2, 3, 1, 0)).reshape(9, Cin, Cout)
    wmat = jnp.pad(wmat, ((0, 0), (0, 0), (0, Cpad - Cout))).astype(jnp.bfloat16)

    # ------------------ pass 1: conv + batch stats + pool max/min ------------
    cin_l = _round_up(Cin, 128)                  # VMEM lane padding of the slab
    fixed1 = (2 * 9 * _round_up(Cin, 16) * Cpad * 2     # weights (2 buffers)
              + Hp * 2 * Wpp * Cpad * 4                 # acc scratch
              + 3 * H * Wpp * Cpad * 4                  # acc value + temporaries
              + 2 * (1 << 20))
    per_img1 = (2 * _round_up(S, 16) * cin_l * 2
                + 2 * 2 * Hp * _round_up(Wp, 16) * Cpad * 2)
    nb = _pick_batch_tile(N, per_img1, max(budget - fixed1, per_img1), cap=8)
    grid1 = N // nb

    k1 = functools.partial(_conv_stats_kernel, nb=nb, H=H, W=W, Wpp=Wpp,
                           Cpad=Cpad)
    y_max, y_min, stats = pl.pallas_call(
        k1,
        grid=(grid1,),
        in_specs=[
            pl.BlockSpec((nb, S, Cin), lambda i: (i, 0, 0)),
            pl.BlockSpec((9, Cin, Cpad), lambda i: (0, 0, 0)),
        ],
        out_specs=(
            pl.BlockSpec((nb, Hp, Wp, Cpad), lambda i: (i, 0, 0, 0)),
            pl.BlockSpec((nb, Hp, Wp, Cpad), lambda i: (i, 0, 0, 0)),
            pl.BlockSpec((16, Cpad), lambda i: (i, 0)),
        ),
        out_shape=(
            jax.ShapeDtypeStruct((N, Hp, Wp, Cpad), jnp.bfloat16),   # pool max
            jax.ShapeDtypeStruct((N, Hp, Wp, Cpad), jnp.bfloat16),   # pool min
            jax.ShapeDtypeStruct((grid1 * 16, Cpad), jnp.float32),   # sum/sumsq
        ),
        scratch_shapes=[pltpu.VMEM((Hp, 2, Wpp, Cpad), jnp.float32)],
        compiler_params=_compiler_params(vmem_limit),
    )(x_flat, wmat)

    # ------------- host: finalize folded BatchNorm scale / shift -------------
    count = jnp.float32(N * H * W)
    st = stats.reshape(grid1, 2, 8, Cpad)[:, :, 0, :]     # (grid1, 2, Cpad)
    mean = st[:, 0, :].sum(axis=0) / count
    var = jnp.maximum(st[:, 1, :].sum(axis=0) / count - mean * mean, 0.0)
    gamma_p = jnp.pad(gamma.astype(jnp.float32), (0, Cpad - Cout))
    beta_p = jnp.pad(beta.astype(jnp.float32), (0, Cpad - Cout))
    scale = gamma_p * jax.lax.rsqrt(var + eps)
    # conv_b shifts the batch mean by the same per-channel constant, so it
    # cancels exactly under training-mode BatchNorm and never enters the math.
    shift = beta_p - mean * scale
    scale2 = scale.reshape(1, Cpad)
    shift2 = shift.reshape(1, Cpad)

    # --------------- pass 2: pick max/min, BN scale/shift, LeakyReLU ---------
    per_img2 = (2 * 2 * Hp * _round_up(Wp, 16) * Cpad * 2
                + 2 * Hp * _round_up(Wp, 8) * Cpad * 4)
    nb2 = _pick_batch_tile(N, per_img2, budget, cap=32)
    grid2 = N // nb2
    k2 = functools.partial(_bn_act_kernel, slope=negative_slope)
    out_nhwc = pl.pallas_call(
        k2,
        grid=(grid2,),
        in_specs=[
            pl.BlockSpec((nb2, Hp, Wp, Cpad), lambda i: (i, 0, 0, 0)),
            pl.BlockSpec((nb2, Hp, Wp, Cpad), lambda i: (i, 0, 0, 0)),
            pl.BlockSpec((1, Cpad), lambda i: (0, 0)),
            pl.BlockSpec((1, Cpad), lambda i: (0, 0)),
        ],
        out_specs=pl.BlockSpec((nb2, Hp, Wp, Cpad), lambda i: (i, 0, 0, 0)),
        out_shape=jax.ShapeDtypeStruct((N, Hp, Wp, Cpad), jnp.float32),
        compiler_params=_compiler_params(vmem_limit),
    )(y_max, y_min, scale2, shift2)

    out = out_nhwc[:, :, :, :Cout]                        # drop lane padding
    return jnp.transpose(out, (0, 3, 1, 2))               # NHWC -> NCHW


def _reference(x, conv_w, conv_b, gamma, beta, *, eps=1e-5, slope=0.01):
    y = jax.lax.conv_general_dilated(
        x, conv_w, window_strides=(1, 1), padding=((1, 1), (1, 1)),
        dimension_numbers=("NCHW", "OIHW", "NCHW"))
    y = y + conv_b.reshape(1, -1, 1, 1)
    mean = jnp.mean(y, axis=(0, 2, 3), keepdims=True)
    var = jnp.mean(jnp.square(y - mean), axis=(0, 2, 3), keepdims=True)
    y = (y - mean) * jax.lax.rsqrt(var + eps)
    y = y * gamma.reshape(1, -1, 1, 1) + beta.reshape(1, -1, 1, 1)
    y = jnp.where(y > 0, y, slope * y)
    N, C, H, W = y.shape
    return y.reshape(N, C, H // 2, 2, W // 2, 2).max(axis=(3, 5))


if __name__ == "__main__":
    key = jax.random.PRNGKey(0)
    k_x, k_w, k_b = jax.random.split(key, 3)

    N, Cin, Cout, H, W = 2, 4, 8, 16, 16
    x = jax.random.normal(k_x, (N, Cin, H, W), jnp.float32)
    conv_w = jax.random.normal(k_w, (Cout, Cin, 3, 3), jnp.float32) * 0.1
    conv_b = jax.random.normal(k_b, (Cout,), jnp.float32) * 0.1
    # Mixed-sign gamma exercises both the max- and min-staging paths (the BN
    # scale sign selects which one pass 2 consumes).
    gamma = jnp.where(jnp.arange(Cout) % 3 == 0, -0.75, 1.25).astype(jnp.float32)
    beta = jnp.linspace(-0.2, 0.3, Cout).astype(jnp.float32)

    fwd = jax.jit(conv_block_forward)
    out = jax.block_until_ready(fwd(x, conv_w, conv_b, gamma, beta))
    ref = jax.block_until_ready(_reference(x, conv_w, conv_b, gamma, beta))

    assert out.shape == (N, Cout, H // 2, W // 2)
    # bf16 MXU operands + bf16 pooled staging => looser-than-f32 tolerance.
    np.testing.assert_allclose(np.asarray(out), np.asarray(ref),
                               rtol=4e-2, atol=4e-2)
    print("KERNEL_OK")
</pallas_src>

<mosaic_0001>
module attributes {stable_mosaic.version = 11 : i64} {
  func.func @_conv_stats_kernel(%arg0: i32, %arg1: memref<1x440x4xbf16, #tpu.memory_space<vmem>>, %arg2: memref<9x4x128xbf16, #tpu.memory_space<vmem>>, %arg3: memref<1x8x8x128xbf16, #tpu.memory_space<vmem>>, %arg4: memref<1x8x8x128xbf16, #tpu.memory_space<vmem>>, %arg5: memref<16x128xf32, #tpu.memory_space<vmem>>, %arg6: memref<8x2x24x128xf32, #tpu.memory_space<vmem>>) attributes {dimension_semantics = [#tpu.dimension_semantics<parallel>], iteration_bounds = array<i64: 2>, scalar_prefetch = 0 : i64, scratch_operands = 1 : i64, tpu.core_type = #tpu.core_type<tc>, window_params = [{transform_indices = @transform_0, window_bounds = array<i64: 1, 440, 4>}, {pipeline_mode = #tpu.pipeline_mode<synchronous>, transform_indices = @transform_1, window_bounds = array<i64: 9, 4, 128>}, {transform_indices = @transform_2, window_bounds = array<i64: 1, 8, 8, 128>}, {transform_indices = @transform_3, window_bounds = array<i64: 1, 8, 8, 128>}, {transform_indices = @transform_4, window_bounds = array<i64: 16, 128>}]} {
    %0 = tpu.iota {dimensions = array<i32: 0>} : vector<384x1xi32>
    %c24_i32 = arith.constant 24 : i32
    %c0_i32 = arith.constant 0 : i32
    %1 = arith.cmpi eq, %c24_i32, %c0_i32 : i32
    %c1_i32 = arith.constant 1 : i32
    %2 = arith.select %1, %c1_i32, %c24_i32 : i32
    %3 = vector.broadcast %2 : i32 to vector<384x1xi32>
    %4 = arith.remsi %0, %3 : vector<384x1xi32>
    %c0_i32_0 = arith.constant 0 : i32
    %5 = vector.broadcast %c0_i32_0 : i32 to vector<384x1xi32>
    %6 = arith.cmpi ne, %4, %5 : vector<384x1xi32>
    %c0_i32_1 = arith.constant 0 : i32
    %7 = vector.broadcast %c0_i32_1 : i32 to vector<384x1xi32>
    %8 = arith.cmpi slt, %4, %7 : vector<384x1xi32>
    %c0_i32_2 = arith.constant 0 : i32
    %9 = arith.cmpi slt, %2, %c0_i32_2 : i32
    %10 = vector.broadcast %9 : i1 to vector<384x1xi1>
    %11 = vector.broadcast %10 : vector<384x1xi1> to vector<384x1xi1>
    %12 = arith.xori %8, %11 : vector<384x1xi1>
    %13 = arith.andi %12, %6 : vector<384x1xi1>
    %14 = vector.broadcast %2 : i32 to vector<384x1xi32>
    %15 = arith.addi %4, %14 : vector<384x1xi32>
    %16 = arith.select %13, %15, %4 : vector<384x1xi1>, vector<384x1xi32>
    %c16_i32 = arith.constant 16 : i32
    %17 = vector.broadcast %c16_i32 : i32 to vector<384x1xi32>
    %18 = arith.cmpi slt, %16, %17 : vector<384x1xi32>
    %19 = arith.extui %18 : vector<384x1xi1> to vector<384x1xi32>
    %20 = arith.sitofp %19 : vector<384x1xi32> to vector<384x1xf32>
    %cst = arith.constant 0.000000e+00 : f32
    %21 = vector.broadcast %cst : f32 to vector<1x128xf32>
    %cst_3 = arith.constant 0.000000e+00 : f32
    %22 = vector.broadcast %cst_3 : f32 to vector<1x128xf32>
    %c0 = arith.constant 0 : index
    %c0_4 = arith.constant 0 : index
    %c0_5 = arith.constant 0 : index
    %23 = vector.load %arg1[%c0, %c0_4, %c0_5] : memref<1x440x4xbf16, #tpu.memory_space<vmem>>, vector<1x384x4xbf16>
    %24 = vector.shape_cast %23 : vector<1x384x4xbf16> to vector<384x4xbf16>
    %c0_6 = arith.constant 0 : index
    %c0_7 = arith.constant 0 : index
    %c0_8 = arith.constant 0 : index
    %25 = vector.load %arg2[%c0_6, %c0_7, %c0_8] : memref<9x4x128xbf16, #tpu.memory_space<vmem>>, vector<1x4x128xbf16>
    %26 = vector.shape_cast %25 : vector<1x4x128xbf16> to vector<4x128xbf16>
    %cst_9 = arith.constant dense<0.000000e+00> : vector<384x128xf32>
    %27 = tpu.matmul %24, %26, %cst_9 {dimension_numbers = #tpu.dot_dimension_numbers<[1], [0], [0], [1], [0, 0, 1, 1], [], []>} : vector<384x4xbf16>, vector<4x128xbf16>, vector<384x128xf32> -> vector<384x128xf32>
    %c0_10 = arith.constant 0 : index
    %c1 = arith.constant 1 : index
    %c0_11 = arith.constant 0 : index
    %28 = vector.load %arg1[%c0_10, %c1, %c0_11] : memref<1x440x4xbf16, #tpu.memory_space<vmem>>, vector<1x384x4xbf16>
    %29 = vector.shape_cast %28 : vector<1x384x4xbf16> to vector<384x4xbf16>
    %c1_12 = arith.constant 1 : index
    %c0_13 = arith.constant 0 : index
    %c0_14 = arith.constant 0 : index
    %30 = vector.load %arg2[%c1_12, %c0_13, %c0_14] : memref<9x4x128xbf16, #tpu.memory_space<vmem>>, vector<1x4x128xbf16>
    %31 = vector.shape_cast %30 : vector<1x4x128xbf16> to vector<4x128xbf16>
    %cst_15 = arith.constant dense<0.000000e+00> : vector<384x128xf32>
    %32 = tpu.matmul %29, %31, %cst_15 {dimension_numbers = #tpu.dot_dimension_numbers<[1], [0], [0], [1], [0, 0, 1, 1], [], []>} : vector<384x4xbf16>, vector<4x128xbf16>, vector<384x128xf32> -> vector<384x128xf32>
    %33 = arith.addf %27, %32 : vector<384x128xf32>
    %c0_16 = arith.constant 0 : index
    %c2 = arith.constant 2 : index
    %c0_17 = arith.constant 0 : index
    %34 = vector.load %arg1[%c0_16, %c2, %c0_17] : memref<1x440x4xbf16, #tpu.memory_space<vmem>>, vector<1x384x4xbf16>
    %35 = vector.shape_cast %34 : vector<1x384x4xbf16> to vector<384x4xbf16>
    %c2_18 = arith.constant 2 : index
    %c0_19 = arith.constant 0 : index
    %c0_20 = arith.constant 0 : index
    %36 = vector.load %arg2[%c2_18, %c0_19, %c0_20] : memref<9x4x128xbf16, #tpu.memory_space<vmem>>, vector<1x4x128xbf16>
    %37 = vector.shape_cast %36 : vector<1x4x128xbf16> to vector<4x128xbf16>
    %cst_21 = arith.constant dense<0.000000e+00> : vector<384x128xf32>
    %38 = tpu.matmul %35, %37, %cst_21 {dimension_numbers = #tpu.dot_dimension_numbers<[1], [0], [0], [1], [0, 0, 1, 1], [], []>} : vector<384x4xbf16>, vector<4x128xbf16>, vector<384x128xf32> -> vector<384x128xf32>
    %39 = arith.addf %33, %38 : vector<384x128xf32>
    %c0_22 = arith.constant 0 : index
    %c24 = arith.constant 24 : index
    %c0_23 = arith.constant 0 : index
    %40 = vector.load %arg1[%c0_22, %c24, %c0_23] : memref<1x440x4xbf16, #tpu.memory_space<vmem>>, vector<1x384x4xbf16>
    %41 = vector.shape_cast %40 : vector<1x384x4xbf16> to vector<384x4xbf16>
    %c3 = arith.constant 3 : index
    %c0_24 = arith.constant 0 : index
    %c0_25 = arith.constant 0 : index
    %42 = vector.load %arg2[%c3, %c0_24, %c0_25] : memref<9x4x128xbf16, #tpu.memory_space<vmem>>, vector<1x4x128xbf16>
    %43 = vector.shape_cast %42 : vector<1x4x128xbf16> to vector<4x128xbf16>
    %cst_26 = arith.constant dense<0.000000e+00> : vector<384x128xf32>
    %44 = tpu.matmul %41, %43, %cst_26 {dimension_numbers = #tpu.dot_dimension_numbers<[1], [0], [0], [1], [0, 0, 1, 1], [], []>} : vector<384x4xbf16>, vector<4x128xbf16>, vector<384x128xf32> -> vector<384x128xf32>
    %45 = arith.addf %39, %44 : vector<384x128xf32>
    %c0_27 = arith.constant 0 : index
    %c25 = arith.constant 25 : index
    %c0_28 = arith.constant 0 : index
    %46 = vector.load %arg1[%c0_27, %c25, %c0_28] : memref<1x440x4xbf16, #tpu.memory_space<vmem>>, vector<1x384x4xbf16>
    %47 = vector.shape_cast %46 : vector<1x384x4xbf16> to vector<384x4xbf16>
    %c4 = arith.constant 4 : index
    %c0_29 = arith.constant 0 : index
    %c0_30 = arith.constant 0 : index
    %48 = vector.load %arg2[%c4, %c0_29, %c0_30] : memref<9x4x128xbf16, #tpu.memory_space<vmem>>, vector<1x4x128xbf16>
    %49 = vector.shape_cast %48 : vector<1x4x128xbf16> to vector<4x128xbf16>
    %cst_31 = arith.constant dense<0.000000e+00> : vector<384x128xf32>
    %50 = tpu.matmul %47, %49, %cst_31 {dimension_numbers = #tpu.dot_dimension_numbers<[1], [0], [0], [1], [0, 0, 1, 1], [], []>} : vector<384x4xbf16>, vector<4x128xbf16>, vector<384x128xf32> -> vector<384x128xf32>
    %51 = arith.addf %45, %50 : vector<384x128xf32>
    %c0_32 = arith.constant 0 : index
    %c26 = arith.constant 26 : index
    %c0_33 = arith.constant 0 : index
    %52 = vector.load %arg1[%c0_32, %c26, %c0_33] : memref<1x440x4xbf16, #tpu.memory_space<vmem>>, vector<1x384x4xbf16>
    %53 = vector.shape_cast %52 : vector<1x384x4xbf16> to vector<384x4xbf16>
    %c5 = arith.constant 5 : index
    %c0_34 = arith.constant 0 : index
    %c0_35 = arith.constant 0 : index
    %54 = vector.load %arg2[%c5, %c0_34, %c0_35] : memref<9x4x128xbf16, #tpu.memory_space<vmem>>, vector<1x4x128xbf16>
    %55 = vector.shape_cast %54 : vector<1x4x128xbf16> to vector<4x128xbf16>
    %cst_36 = arith.constant dense<0.000000e+00> : vector<384x128xf32>
    %56 = tpu.matmul %53, %55, %cst_36 {dimension_numbers = #tpu.dot_dimension_numbers<[1], [0], [0], [1], [0, 0, 1, 1], [], []>} : vector<384x4xbf16>, vector<4x128xbf16>, vector<384x128xf32> -> vector<384x128xf32>
    %57 = arith.addf %51, %56 : vector<384x128xf32>
    %c0_37 = arith.constant 0 : index
    %c48 = arith.constant 48 : index
    %c0_38 = arith.constant 0 : index
    %58 = vector.load %arg1[%c0_37, %c48, %c0_38] : memref<1x440x4xbf16, #tpu.memory_space<vmem>>, vector<1x384x4xbf16>
    %59 = vector.shape_cast %58 : vector<1x384x4xbf16> to vector<384x4xbf16>
    %c6 = arith.constant 6 : index
    %c0_39 = arith.constant 0 : index
    %c0_40 = arith.constant 0 : index
    %60 = vector.load %arg2[%c6, %c0_39, %c0_40] : memref<9x4x128xbf16, #tpu.memory_space<vmem>>, vector<1x4x128xbf16>
    %61 = vector.shape_cast %60 : vector<1x4x128xbf16> to vector<4x128xbf16>
    %cst_41 = arith.constant dense<0.000000e+00> : vector<384x128xf32>
    %62 = tpu.matmul %59, %61, %cst_41 {dimension_numbers = #tpu.dot_dimension_numbers<[1], [0], [0], [1], [0, 0, 1, 1], [], []>} : vector<384x4xbf16>, vector<4x128xbf16>, vector<384x128xf32> -> vector<384x128xf32>
    %63 = arith.addf %57, %62 : vector<384x128xf32>
    %c0_42 = arith.constant 0 : index
    %c49 = arith.constant 49 : index
    %c0_43 = arith.constant 0 : index
    %64 = vector.load %arg1[%c0_42, %c49, %c0_43] : memref<1x440x4xbf16, #tpu.memory_space<vmem>>, vector<1x384x4xbf16>
    %65 = vector.shape_cast %64 : vector<1x384x4xbf16> to vector<384x4xbf16>
    %c7 = arith.constant 7 : index
    %c0_44 = arith.constant 0 : index
    %c0_45 = arith.constant 0 : index
    %66 = vector.load %arg2[%c7, %c0_44, %c0_45] : memref<9x4x128xbf16, #tpu.memory_space<vmem>>, vector<1x4x128xbf16>
    %67 = vector.shape_cast %66 : vector<1x4x128xbf16> to vector<4x128xbf16>
    %cst_46 = arith.constant dense<0.000000e+00> : vector<384x128xf32>
    %68 = tpu.matmul %65, %67, %cst_46 {dimension_numbers = #tpu.dot_dimension_numbers<[1], [0], [0], [1], [0, 0, 1, 1], [], []>} : vector<384x4xbf16>, vector<4x128xbf16>, vector<384x128xf32> -> vector<384x128xf32>
    %69 = arith.addf %63, %68 : vector<384x128xf32>
    %c0_47 = arith.constant 0 : index
    %c50 = arith.constant 50 : index
    %c0_48 = arith.constant 0 : index
    %70 = vector.load %arg1[%c0_47, %c50, %c0_48] : memref<1x440x4xbf16, #tpu.memory_space<vmem>>, vector<1x384x4xbf16>
    %71 = vector.shape_cast %70 : vector<1x384x4xbf16> to vector<384x4xbf16>
    %c8 = arith.constant 8 : index
    %c0_49 = arith.constant 0 : index
    %c0_50 = arith.constant 0 : index
    %72 = vector.load %arg2[%c8, %c0_49, %c0_50] : memref<9x4x128xbf16, #tpu.memory_space<vmem>>, vector<1x4x128xbf16>
    %73 = vector.shape_cast %72 : vector<1x4x128xbf16> to vector<4x128xbf16>
    %cst_51 = arith.constant dense<0.000000e+00> : vector<384x128xf32>
    %74 = tpu.matmul %71, %73, %cst_51 {dimension_numbers = #tpu.dot_dimension_numbers<[1], [0], [0], [1], [0, 0, 1, 1], [], []>} : vector<384x4xbf16>, vector<4x128xbf16>, vector<384x128xf32> -> vector<384x128xf32>
    %75 = arith.addf %69, %74 : vector<384x128xf32>
    %76 = vector.broadcast %20 : vector<384x1xf32> to vector<384x128xf32>
    %77 = arith.mulf %75, %76 : vector<384x128xf32>
    %cst_52 = arith.constant dense<0.000000e+00> : vector<128xf32>
    %78 = vector.multi_reduction <add>, %77, %cst_52 [0] : vector<384x128xf32> to vector<128xf32>
    %79 = vector.shape_cast %78 : vector<128xf32> to vector<1x128xf32>
    %80 = arith.addf %21, %79 : vector<1x128xf32>
    %81 = arith.mulf %77, %75 : vector<384x128xf32>
    %cst_53 = arith.constant dense<0.000000e+00> : vector<128xf32>
    %82 = vector.multi_reduction <add>, %81, %cst_53 [0] : vector<384x128xf32> to vector<128xf32>
    %83 = vector.shape_cast %82 : vector<128xf32> to vector<1x128xf32>
    %84 = arith.addf %22, %83 : vector<1x128xf32>
    %85 = vector.shape_cast %75 : vector<384x128xf32> to vector<8x2x24x128xf32>
    %c0_54 = arith.constant 0 : index
    %c0_55 = arith.constant 0 : index
    %c0_56 = arith.constant 0 : index
    %c0_57 = arith.constant 0 : index
    %86 = vector.load %arg6[%c0_54, %c0_55, %c0_56, %c0_57] : memref<8x2x24x128xf32, #tpu.memory_space<vmem>>, vector<8x2x24x128xf32>
    tpu.vector_store %arg6[%c0_54, %c0_55, %c0_56, %c0_57], %85 {strides = array<i32>} : memref<8x2x24x128xf32, #tpu.memory_space<vmem>>, vector<8x2x24x128xf32>,
    %c0_58 = arith.constant 0 : index
    %c0_59 = arith.constant 0 : index
    %c0_60 = arith.constant 0 : index
    %c0_61 = arith.constant 0 : index
    %87 = tpu.strided_load %arg6[%c0_58, %c0_59, %c0_60, %c0_61] {strides = array<i32: 1, 1, 2, 1>} : memref<8x2x24x128xf32, #tpu.memory_space<vmem>>, vector<8x2x12x128xf32>
    %c0_62 = arith.constant 0 : index
    %c0_63 = arith.constant 0 : index
    %c1_64 = arith.constant 1 : index
    %c0_65 = arith.constant 0 : index
    %88 = tpu.strided_load %arg6[%c0_62, %c0_63, %c1_64, %c0_65] {strides = array<i32: 1, 1, 2, 1>} : memref<8x2x24x128xf32, #tpu.memory_space<vmem>>, vector<8x2x12x128xf32>
    %89 = arith.maximumf %87, %88 : vector<8x2x12x128xf32>
    %90 = arith.minimumf %87, %88 : vector<8x2x12x128xf32>
    %91 = vector.extract_strided_slice %89 {offsets = [0, 0, 0, 0], sizes = [8, 1, 12, 128], strides = [1, 1, 1, 1]} : vector<8x2x12x128xf32> to vector<8x1x12x128xf32>
    %92 = vector.shape_cast %91 : vector<8x1x12x128xf32> to vector<8x12x128xf32>
    %93 = vector.extract_strided_slice %89 {offsets = [0, 1, 0, 0], sizes = [8, 1, 12, 128], strides = [1, 1, 1, 1]} : vector<8x2x12x128xf32> to vector<8x1x12x128xf32>
    %94 = vector.shape_cast %93 : vector<8x1x12x128xf32> to vector<8x12x128xf32>
    %95 = arith.maximumf %92, %94 : vector<8x12x128xf32>
    %96 = vector.extract_strided_slice %95 {offsets = [0, 0, 0], sizes = [8, 8, 128], strides = [1, 1, 1]} : vector<8x12x128xf32> to vector<8x8x128xf32>
    %97 = vector.extract_strided_slice %90 {offsets = [0, 0, 0, 0], sizes = [8, 1, 12, 128], strides = [1, 1, 1, 1]} : vector<8x2x12x128xf32> to vector<8x1x12x128xf32>
    %98 = vector.shape_cast %97 : vector<8x1x12x128xf32> to vector<8x12x128xf32>
    %99 = vector.extract_strided_slice %90 {offsets = [0, 1, 0, 0], sizes = [8, 1, 12, 128], strides = [1, 1, 1, 1]} : vector<8x2x12x128xf32> to vector<8x1x12x128xf32>
    %100 = vector.shape_cast %99 : vector<8x1x12x128xf32> to vector<8x12x128xf32>
    %101 = arith.minimumf %98, %100 : vector<8x12x128xf32>
    %102 = vector.extract_strided_slice %101 {offsets = [0, 0, 0], sizes = [8, 8, 128], strides = [1, 1, 1]} : vector<8x12x128xf32> to vector<8x8x128xf32>
    %103 = arith.truncf %96 : vector<8x8x128xf32> to vector<8x8x128xbf16>
    %c0_66 = arith.constant 0 : index
    %c0_67 = arith.constant 0 : index
    %c0_68 = arith.constant 0 : index
    %c0_69 = arith.constant 0 : index
    %104 = vector.load %arg3[%c0_66, %c0_67, %c0_68, %c0_69] : memref<1x8x8x128xbf16, #tpu.memory_space<vmem>>, vector<1x8x8x128xbf16>
    %105 = vector.shape_cast %104 : vector<1x8x8x128xbf16> to vector<8x8x128xbf16>
    %106 = vector.shape_cast %103 : vector<8x8x128xbf16> to vector<1x8x8x128xbf16>
    tpu.vector_store %arg3[%c0_66, %c0_67, %c0_68, %c0_69], %106 {strides = array<i32>} : memref<1x8x8x128xbf16, #tpu.memory_space<vmem>>, vector<1x8x8x128xbf16>,
    %107 = arith.truncf %102 : vector<8x8x128xf32> to vector<8x8x128xbf16>
    %c0_70 = arith.constant 0 : index
    %c0_71 = arith.constant 0 : index
    %c0_72 = arith.constant 0 : index
    %c0_73 = arith.constant 0 : index
    %108 = vector.load %arg4[%c0_70, %c0_71, %c0_72, %c0_73] : memref<1x8x8x128xbf16, #tpu.memory_space<vmem>>, vector<1x8x8x128xbf16>
    %109 = vector.shape_cast %108 : vector<1x8x8x128xbf16> to vector<8x8x128xbf16>
    %110 = vector.shape_cast %107 : vector<8x8x128xbf16> to vector<1x8x8x128xbf16>
    tpu.vector_store %arg4[%c0_70, %c0_71, %c0_72, %c0_73], %110 {strides = array<i32>} : memref<1x8x8x128xbf16, #tpu.memory_space<vmem>>, vector<1x8x8x128xbf16>,
    %111 = vector.shape_cast %80 : vector<1x128xf32> to vector<1x128xf32>
    %112 = vector.broadcast %111 : vector<1x128xf32> to vector<8x128xf32>
    %c0_74 = arith.constant 0 : index
    %c0_75 = arith.constant 0 : index
    %113 = vector.load %arg5[%c0_74, %c0_75] : memref<16x128xf32, #tpu.memory_space<vmem>>, vector<8x128xf32>
    tpu.vector_store %arg5[%c0_74, %c0_75], %112 {strides = array<i32>} : memref<16x128xf32, #tpu.memory_space<vmem>>, vector<8x128xf32>,
    %114 = vector.shape_cast %84 : vector<1x128xf32> to vector<1x128xf32>
    %115 = vector.broadcast %114 : vector<1x128xf32> to vector<8x128xf32>
    %c8_76 = arith.constant 8 : index
    %c0_77 = arith.constant 0 : index
    %116 = vector.load %arg5[%c8_76, %c0_77] : memref<16x128xf32, #tpu.memory_space<vmem>>, vector<8x128xf32>
    tpu.vector_store %arg5[%c8_76, %c0_77], %115 {strides = array<i32>} : memref<16x128xf32, #tpu.memory_space<vmem>>, vector<8x128xf32>,
    return
  }
  func.func @transform_0(%arg0: i32) -> (i32, i32, i32) {
    %c0_i32 = arith.constant 0 : i32
    %c0_i32_0 = arith.constant 0 : i32
    %c0_i32_1 = arith.constant 0 : i32
    return %arg0, %c0_i32, %c0_i32_0 : i32, i32, i32
  }
  func.func @transform_1(%arg0: i32) -> (i32, i32, i32) {
    %c0_i32 = arith.constant 0 : i32
    %c0_i32_0 = arith.constant 0 : i32
    %c0_i32_1 = arith.constant 0 : i32
    %c0_i32_2 = arith.constant 0 : i32
    return %c0_i32, %c0_i32_0, %c0_i32_1 : i32, i32, i32
  }
  func.func @transform_2(%arg0: i32) -> (i32, i32, i32, i32) {
    %c0_i32 = arith.constant 0 : i32
    %c0_i32_0 = arith.constant 0 : i32
    %c0_i32_1 = arith.constant 0 : i32
    %c0_i32_2 = arith.constant 0 : i32
    return %arg0, %c0_i32, %c0_i32_0, %c0_i32_1 : i32, i32, i32, i32
  }
  func.func @transform_3(%arg0: i32) -> (i32, i32, i32, i32) {
    %c0_i32 = arith.constant 0 : i32
    %c0_i32_0 = arith.constant 0 : i32
    %c0_i32_1 = arith.constant 0 : i32
    %c0_i32_2 = arith.constant 0 : i32
    return %arg0, %c0_i32, %c0_i32_0, %c0_i32_1 : i32, i32, i32, i32
  }
  func.func @transform_4(%arg0: i32) -> (i32, i32) {
    %c0_i32 = arith.constant 0 : i32
    %c0_i32_0 = arith.constant 0 : i32
    return %arg0, %c0_i32 : i32, i32
  }
}

module attributes {stable_mosaic.version = 11 : i64} {
  func.func @_bn_act_kernel(%arg0: i32, %arg1: memref<1x8x8x128xbf16, #tpu.memory_space<vmem>>, %arg2: memref<1x8x8x128xbf16, #tpu.memory_space<vmem>>, %arg3: memref<1x128xf32, #tpu.memory_space<vmem>>, %arg4: memref<1x128xf32, #tpu.memory_space<vmem>>, %arg5: memref<1x8x8x128xf32, #tpu.memory_space<vmem>>) attributes {dimension_semantics = [#tpu.dimension_semantics<parallel>], iteration_bounds = array<i64: 2>, scalar_prefetch = 0 : i64, scratch_operands = 0 : i64, tpu.core_type = #tpu.core_type<tc>, window_params = [{transform_indices = @transform_0, window_bounds = array<i64: 1, 8, 8, 128>}, {transform_indices = @transform_1, window_bounds = array<i64: 1, 8, 8, 128>}, {pipeline_mode = #tpu.pipeline_mode<synchronous>, transform_indices = @transform_2, window_bounds = array<i64: 1, 128>}, {pipeline_mode = #tpu.pipeline_mode<synchronous>, transform_indices = @transform_3, window_bounds = array<i64: 1, 128>}, {transform_indices = @transform_4, window_bounds = array<i64: 1, 8, 8, 128>}]} {
    %c0 = arith.constant 0 : index
    %c0_0 = arith.constant 0 : index
    %0 = vector.load %arg3[%c0, %c0_0] : memref<1x128xf32, #tpu.memory_space<vmem>>, vector<1x128xf32>
    %1 = vector.shape_cast %0 : vector<1x128xf32> to vector<1x1x1x128xf32>
    %c0_1 = arith.constant 0 : index
    %c0_2 = arith.constant 0 : index
    %2 = vector.load %arg4[%c0_1, %c0_2] : memref<1x128xf32, #tpu.memory_space<vmem>>, vector<1x128xf32>
    %3 = vector.shape_cast %2 : vector<1x128xf32> to vector<1x1x1x128xf32>
    %cst = arith.constant 0.000000e+00 : f32
    %4 = vector.broadcast %cst : f32 to vector<1x1x1x128xf32>
    %5 = arith.cmpf oge, %1, %4 : vector<1x1x1x128xf32>
    %c0_3 = arith.constant 0 : index
    %c0_4 = arith.constant 0 : index
    %c0_5 = arith.constant 0 : index
    %c0_6 = arith.constant 0 : index
    %6 = vector.load %arg1[%c0_3, %c0_4, %c0_5, %c0_6] : memref<1x8x8x128xbf16, #tpu.memory_space<vmem>>, vector<1x8x8x128xbf16>
    %7 = arith.extf %6 : vector<1x8x8x128xbf16> to vector<1x8x8x128xf32>
    %c0_7 = arith.constant 0 : index
    %c0_8 = arith.constant 0 : index
    %c0_9 = arith.constant 0 : index
    %c0_10 = arith.constant 0 : index
    %8 = vector.load %arg2[%c0_7, %c0_8, %c0_9, %c0_10] : memref<1x8x8x128xbf16, #tpu.memory_space<vmem>>, vector<1x8x8x128xbf16>
    %9 = arith.extf %8 : vector<1x8x8x128xbf16> to vector<1x8x8x128xf32>
    %10 = vector.shape_cast %5 : vector<1x1x1x128xi1> to vector<1x1x1x128xi1>
    %11 = vector.broadcast %10 : vector<1x1x1x128xi1> to vector<1x8x8x128xi1>
    %12 = arith.select %11, %7, %9 : vector<1x8x8x128xi1>, vector<1x8x8x128xf32>
    %13 = vector.broadcast %1 : vector<1x1x1x128xf32> to vector<1x8x8x128xf32>
    %14 = arith.mulf %12, %13 : vector<1x8x8x128xf32>
    %15 = vector.broadcast %3 : vector<1x1x1x128xf32> to vector<1x8x8x128xf32>
    %16 = arith.addf %14, %15 : vector<1x8x8x128xf32>
    %cst_11 = arith.constant 0.00999999977 : f32
    %17 = vector.broadcast %cst_11 : f32 to vector<1x8x8x128xf32>
    %18 = arith.mulf %17, %16 : vector<1x8x8x128xf32>
    %19 = arith.maximumf %16, %18 : vector<1x8x8x128xf32>
    %c0_12 = arith.constant 0 : index
    %c0_13 = arith.constant 0 : index
    %c0_14 = arith.constant 0 : index
    %c0_15 = arith.constant 0 : index
    %20 = vector.load %arg5[%c0_12, %c0_13, %c0_14, %c0_15] : memref<1x8x8x128xf32, #tpu.memory_space<vmem>>, vector<1x8x8x128xf32>
    tpu.vector_store %arg5[%c0_12, %c0_13, %c0_14, %c0_15], %19 {strides = array<i32>} : memref<1x8x8x128xf32, #tpu.memory_space<vmem>>, vector<1x8x8x128xf32>,
    return
  }
  func.func @transform_0(%arg0: i32) -> (i32, i32, i32, i32) {
    %c0_i32 = arith.constant 0 : i32
    %c0_i32_0 = arith.constant 0 : i32
    %c0_i32_1 = arith.constant 0 : i32
    %c0_i32_2 = arith.constant 0 : i32
    return %arg0, %c0_i32, %c0_i32_0, %c0_i32_1 : i32, i32, i32, i32
  }
  func.func @transform_1(%arg0: i32) -> (i32, i32, i32, i32) {
    %c0_i32 = arith.constant 0 : i32
    %c0_i32_0 = arith.constant 0 : i32
    %c0_i32_1 = arith.constant 0 : i32
    %c0_i32_2 = arith.constant 0 : i32
    return %arg0, %c0_i32, %c0_i32_0, %c0_i32_1 : i32, i32, i32, i32
  }
  func.func @transform_2(%arg0: i32) -> (i32, i32) {
    %c0_i32 = arith.constant 0 : i32
    %c0_i32_0 = arith.constant 0 : i32
    %c0_i32_1 = arith.constant 0 : i32
    return %c0_i32, %c0_i32_0 : i32, i32
  }
  func.func @transform_3(%arg0: i32) -> (i32, i32) {
    %c0_i32 = arith.constant 0 : i32
    %c0_i32_0 = arith.constant 0 : i32
    %c0_i32_1 = arith.constant 0 : i32
    return %c0_i32, %c0_i32_0 : i32, i32
  }
  func.func @transform_4(%arg0: i32) -> (i32, i32, i32, i32) {
    %c0_i32 = arith.constant 0 : i32
    %c0_i32_0 = arith.constant 0 : i32
    %c0_i32_1 = arith.constant 0 : i32
    %c0_i32_2 = arith.constant 0 : i32
    return %arg0, %c0_i32, %c0_i32_0, %c0_i32_1 : i32, i32, i32, i32
  }
}

</mosaic_0001>

<llo_original>
// kernel: conv_block_forward.3
$region0: #{conv_block_forward.3}
  #allocation0 [shape = 'u32[]', space=smem, size = 0x4, offset = 0x4, fixed_abs, tag = 'smem constant byte address 0x4 - core index']
  #allocation1 [shape = 'u32[72,128]{1,0:T(1,128)}', space=vmem, size = 0x9000, scoped, tag = 'internal scratch']
  %s0 = inlined_call_operand.vmem [shape: bf16[2,8,8,128], index: 0, kind: input, shape index: {}]
  %s1 = inlined_call_operand.vmem [shape: bf16[2,8,8,128], index: 1, kind: input, shape index: {}]
  %s2 = inlined_call_operand.vmem [shape: f32[1,128], index: 2, kind: input, shape index: {}]
  %s3 = inlined_call_operand.vmem [shape: f32[1,128], index: 3, kind: input, shape index: {}]
  %s4 = inlined_call_operand.vmem [shape: f32[2,8,8,128], index: 4, kind: output, shape index: {}]
  %s5 = sld [smem:[#allocation0]]
  $region49: #{conv_block_forward.3} parent=0
    _
  %s7 = ssub.s32 1, %s5
  %s8 = scalar_select 0, %s7, %s5
  loop: start=0, step=1, limit=4
  $region2: #{conv_block_forward.3} parent=0 // loop_pre_header
    _
  $region3: #{conv_block_forward.3} parent=0 // loop_header
    %s10 = sphi 0, %s14
    %p11 = scmp.ge.s32.totalorder %s10, 4
    %s20 = sphi 0, %s22
    %s23 = sphi 0, %s20
    %s24 = sphi 0, %s23
    %s40 = sphi 0, %s24
    %s46 = sphi 0, %s48
    %s49 = sphi 0, %s46
    %s50 = sphi 0, %s49
    %s66 = sphi 0, %s50
    %s70 = sphi 0, %s70
    %s72 = sphi 0, %s70
    %s73 = sphi 0, %s72
    %s87 = sphi 0, %s73
    %s91 = sphi 0, %s91
    %s93 = sphi 0, %s91
    %s94 = sphi 0, %s93
    %s108 = sphi 0, %s94
    %s114 = sphi 0, %s116
    %s117 = sphi 0, %s114
    %s118 = sphi 0, %s117
    %s134 = sphi 0, %s118
  $region4: #{conv_block_forward.3} parent=0 // loop_header_branch
    %13 = sbr.rel (%p11) target = $region8
  $region5: #{conv_block_forward.3} parent=0 // loop_body
    %s15 = ssub.s32 %s10, 1
    %s16 = ssub.s32 %s10, 2
    %s17 = sadd.s32 %s10, 1
    %s18 = ssub.s32 %s10, %s17
    %p19 = scmp.eq.s32.totalorder %s18, 0
    %s21 = sadd.s32 %s20, 1
    %s22 = scalar_select %p19, %s20, %s21
    %p25 = pneg %p19
    %p26 = scmp.eq.s32.totalorder %s10, 1
    %p27 = por %p25, %p26
    %p28 = scmp.ne.s32.totalorder %s20, %s23
    %p29 = scmp.eq.s32.totalorder %s10, 0
    %p30 = por %p28, %p29
    %p31 = scmp.ne.s32.totalorder %s20, %s23
    %p32 = scmp.eq.s32.totalorder %s15, 1
    %p33 = por %p31, %p32
    %p34 = scmp.ne.s32.totalorder %s23, %s24
    %p35 = scmp.eq.s32.totalorder %s15, 0
    %p36 = por %p34, %p35
    %p37 = scmp.ne.s32.totalorder %s23, %s24
    %p38 = scmp.eq.s32.totalorder %s16, 1
    %p39 = por %p37, %p38
    %p41 = scmp.ne.s32.totalorder %s24, %s40
    %p42 = scmp.eq.s32.totalorder %s16, 0
    %p43 = por %p41, %p42
    %s44 = ssub.s32 %s10, %s17
    %p45 = scmp.eq.s32.totalorder %s44, 0
    %s47 = sadd.s32 %s46, 1
    %s48 = scalar_select %p45, %s46, %s47
    %p51 = pneg %p45
    %p52 = scmp.eq.s32.totalorder %s10, 1
    %p53 = por %p51, %p52
    %p54 = scmp.ne.s32.totalorder %s46, %s49
    %p55 = scmp.eq.s32.totalorder %s10, 0
    %p56 = por %p54, %p55
    %p57 = scmp.ne.s32.totalorder %s46, %s49
    %p58 = scmp.eq.s32.totalorder %s15, 1
    %p59 = por %p57, %p58
    %p60 = scmp.ne.s32.totalorder %s49, %s50
    %p61 = scmp.eq.s32.totalorder %s15, 0
    %p62 = por %p60, %p61
    %p63 = scmp.ne.s32.totalorder %s49, %s50
    %p64 = scmp.eq.s32.totalorder %s16, 1
    %p65 = por %p63, %p64
    %p67 = scmp.ne.s32.totalorder %s50, %s66
    %p68 = scmp.eq.s32.totalorder %s16, 0
    %p69 = por %p67, %p68
    %s71 = sadd.s32 %s70, 1
    %p74 = scmp.eq.s32.totalorder %s10, 1
    %p75 = scmp.ne.s32.totalorder %s70, %s72
    %p76 = scmp.eq.s32.totalorder %s10, 0
    %p77 = por %p75, %p76
    %p78 = scmp.ne.s32.totalorder %s70, %s72
    %p79 = scmp.eq.s32.totalorder %s15, 1
    %p80 = por %p78, %p79
    %p81 = scmp.ne.s32.totalorder %s72, %s73
    %p82 = scmp.eq.s32.totalorder %s15, 0
    %p83 = por %p81, %p82
    %p84 = scmp.ne.s32.totalorder %s72, %s73
    %p85 = scmp.eq.s32.totalorder %s16, 1
    %p86 = por %p84, %p85
    %p88 = scmp.ne.s32.totalorder %s73, %s87
    %p89 = scmp.eq.s32.totalorder %s16, 0
    %p90 = por %p88, %p89
    %s92 = sadd.s32 %s91, 1
    %p95 = scmp.eq.s32.totalorder %s10, 1
    %p96 = scmp.ne.s32.totalorder %s91, %s93
    %p97 = scmp.eq.s32.totalorder %s10, 0
    %p98 = por %p96, %p97
    %p99 = scmp.ne.s32.totalorder %s91, %s93
    %p100 = scmp.eq.s32.totalorder %s15, 1
    %p101 = por %p99, %p100
    %p102 = scmp.ne.s32.totalorder %s93, %s94
    %p103 = scmp.eq.s32.totalorder %s15, 0
    %p104 = por %p102, %p103
    %p105 = scmp.ne.s32.totalorder %s93, %s94
    %p106 = scmp.eq.s32.totalorder %s16, 1
    %p107 = por %p105, %p106
    %p109 = scmp.ne.s32.totalorder %s94, %s108
    %p110 = scmp.eq.s32.totalorder %s16, 0
    %p111 = por %p109, %p110
    %s112 = ssub.s32 %s10, %s17
    %p113 = scmp.eq.s32.totalorder %s112, 0
    %s115 = sadd.s32 %s114, 1
    %s116 = scalar_select %p113, %s114, %s115
    %p119 = pneg %p113
    %p120 = scmp.eq.s32.totalorder %s10, 1
    %p121 = por %p119, %p120
    %p122 = scmp.ne.s32.totalorder %s114, %s117
    %p123 = scmp.eq.s32.totalorder %s10, 0
    %p124 = por %p122, %p123
    %p125 = scmp.ne.s32.totalorder %s114, %s117
    %p126 = scmp.eq.s32.totalorder %s15, 1
    %p127 = por %p125, %p126
    %p128 = scmp.ne.s32.totalorder %s117, %s118
    %p129 = scmp.eq.s32.totalorder %s15, 0
    %p130 = por %p128, %p129
    %p131 = scmp.ne.s32.totalorder %s117, %s118
    %p132 = scmp.eq.s32.totalorder %s16, 1
    %p133 = por %p131, %p132
    %p135 = scmp.ne.s32.totalorder %s118, %s134
    %p136 = scmp.eq.s32.totalorder %s16, 0
    %p137 = por %p135, %p136
    %p138 = scmp.le.s32.totalorder 1, %s10
    %p139 = scmp.lt.s32.totalorder %s10, 3
    %p140 = pnand %p138, %p139
    %p141 = pneg %p140
    // Predicated region
    $region9: #{conv_block_forward.3} parent=5 // pred_check
      _
    $region10: #{conv_block_forward.3} parent=5 // pred_check_branch
      %143 = sbr.rel (%p140) target = $region12
    $region11: #{conv_block_forward.3} parent=5 // pred_region
      %s144 = ssub.s32 %s10, 1
      // Predicated region
      $region13: #{conv_block_forward.3} parent=11 // pred_check
        %p145 = pneg %p83
      $region14: #{conv_block_forward.3} parent=11 // pred_check_branch
        %147 = sbr.rel (%p145) target = $region16
      $region15: #{conv_block_forward.3} parent=11 // pred_region
        _
      $region16: #{conv_block_forward.3} parent=11 // pred_fallthru
        _
      // Predicated region
      $region17: #{conv_block_forward.3} parent=11 // pred_check
        %p148 = pneg %p104
      $region18: #{conv_block_forward.3} parent=11 // pred_check_branch
        %150 = sbr.rel (%p148) target = $region20
      $region19: #{conv_block_forward.3} parent=11 // pred_region
        _
      $region20: #{conv_block_forward.3} parent=11 // pred_fallthru
        _
    $region12: #{conv_block_forward.3} parent=5 // pred_fallthru
      _
    %p151 = scmp.lt.s32.totalorder %s10, 2
    // Predicated region
    $region21: #{conv_block_forward.3} parent=5 // pred_check
      %p152 = pneg %p151
    $region22: #{conv_block_forward.3} parent=5 // pred_check_branch
      %154 = sbr.rel (%p152) target = $region24
    $region23: #{conv_block_forward.3} parent=5 // pred_region
      // Predicated region
      $region25: #{conv_block_forward.3} parent=23 // pred_check
        %p155 = pneg %p30
      $region26: #{conv_block_forward.3} parent=23 // pred_check_branch
        %157 = sbr.rel (%p155) target = $region28
      $region27: #{conv_block_forward.3} parent=23 // pred_region
        %p158 = scmp.lt.s32.totalorder %s10, 1
        %s159 = scalar_select %p158, %s10, 1
        %s160 = smul.addr %s159, 8
        %s161 = smul.addr %s160, 4
        %s162 = scalar_lea.vmem %s0, %s161
      $region28: #{conv_block_forward.3} parent=23 // pred_fallthru
        _
      // Predicated region
      $region29: #{conv_block_forward.3} parent=23 // pred_check
        %p163 = pneg %p56
      $region30: #{conv_block_forward.3} parent=23 // pred_check_branch
        %165 = sbr.rel (%p163) target = $region32
      $region31: #{conv_block_forward.3} parent=23 // pred_region
        %p166 = scmp.lt.s32.totalorder %s10, 1
        %s167 = scalar_select %p166, %s10, 1
        %s168 = smul.addr %s167, 8
        %s169 = smul.addr %s168, 4
        %s170 = scalar_lea.vmem %s1, %s169
      $region32: #{conv_block_forward.3} parent=23 // pred_fallthru
        _
    $region24: #{conv_block_forward.3} parent=5 // pred_fallthru
      _
    %p171 = scmp.le.s32.totalorder 1, %s10
    %p172 = scmp.lt.s32.totalorder %s10, 3
    %p173 = pnand %p171, %p172
    %p174 = pneg %p173
    // Predicated region
    $region33: #{conv_block_forward.3} parent=5 // pred_check
      _
    $region34: #{conv_block_forward.3} parent=5 // pred_check_branch
      %176 = sbr.rel (%p173) target = $region36
    $region35: #{conv_block_forward.3} parent=5 // pred_region
      %s177 = ssub.s32 %s10, 1
      %p178 = scmp.lt.s32.totalorder %s15, 1
      %s179 = scalar_select %p178, %s15, 1
      %s180 = smul.addr %s179, 8
      %s181 = smul.addr %s180, 4
      %s182 = scalar_lea.vmem %s0, %s181
      %p183 = pneg %p36
      %p184 = pneg %p33
      %p185 = scmp.lt.s32.totalorder %s15, 1
      %s186 = scalar_select %p185, %s15, 1
      %s187 = smul.addr %s186, 8
      %s188 = smul.addr %s187, 4
      %s189 = scalar_lea.vmem %s1, %s188
      %p190 = pneg %p62
      %p191 = pneg %p59
      %p192 = pneg %p83
      %p193 = pneg %p80
      %p194 = pneg %p104
      %p195 = pneg %p101
      %p196 = pneg %p130
      %p197 = pneg %p127
      %p198 = scmp.lt.s32.totalorder %s15, 1
      %s199 = scalar_select %p198, %s15, 1
      %s200 = smul.addr %s199, 8
      %s201 = smul.addr %s200, 8
      %s202 = scalar_lea.vmem %s4, %s201
      %p203 = scmp.lt.s32.totalorder %s15, 1
      %s204 = scalar_select %p203, %s15, 1
      %s205 = smul.addr %s204, 8
      %s206 = smul.addr %s205, 4
      %s207 = scalar_lea.vmem %s0, %s206
      %p208 = scmp.lt.s32.totalorder %s15, 1
      %s209 = scalar_select %p208, %s15, 1
      %s210 = smul.addr %s209, 8
      %s211 = smul.addr %s210, 4
      %s212 = scalar_lea.vmem %s1, %s211
      %p213 = scmp.lt.s32.totalorder %s15, 1
      %s214 = scalar_select %p213, %s15, 1
      %s215 = smul.addr %s214, 8
      %s216 = smul.addr %s215, 8
      %s217 = scalar_lea.vmem %s4, %s216
      %v218 = vld [vmem:[%s2] sm:$0x1]
      %v219 = vld [vmem:[%s3] sm:$0x1]
      %vm220 = vcmp.ge.f32.partialorder %v218, 0.0
      %v221 = vld [vmem:[%s207] sm:$0xf]
      %v222 = vld [vmem:[%s207 + $0x4] sm:$0xf]
      %v223 = vld [vmem:[%s207 + $0x8] sm:$0xf]
      %v224 = vld [vmem:[%s207 + $0xc] sm:$0xf]
      %v225 = vld [vmem:[%s207 + $0x10] sm:$0xf]
      %v226 = vld [vmem:[%s207 + $0x14] sm:$0xf]
      %v227 = vld [vmem:[%s207 + $0x18] sm:$0xf]
      %v228 = vld [vmem:[%s207 + $0x1c] sm:$0xf]
      %v229 = vunpack.c.l.bf16 %v221
      %v230 = vunpack.c.l.bf16 %v222
      %v231 = vunpack.c.l.bf16 %v223
      %v232 = vunpack.c.l.bf16 %v224
      %v233 = vunpack.c.l.bf16 %v225
      %v234 = vunpack.c.l.bf16 %v226
      %v235 = vunpack.c.l.bf16 %v227
      %v236 = vunpack.c.l.bf16 %v228
      %v237 = vld [vmem:[%s212] sm:$0xf]
      %v238 = vld [vmem:[%s212 + $0x4] sm:$0xf]
      %v239 = vld [vmem:[%s212 + $0x8] sm:$0xf]
      %v240 = vld [vmem:[%s212 + $0xc] sm:$0xf]
      %v241 = vld [vmem:[%s212 + $0x10] sm:$0xf]
      %v242 = vld [vmem:[%s212 + $0x14] sm:$0xf]
      %v243 = vld [vmem:[%s212 + $0x18] sm:$0xf]
      %v244 = vld [vmem:[%s212 + $0x1c] sm:$0xf]
      %v245 = vunpack.c.l.bf16 %v237
      %v246 = vunpack.c.l.bf16 %v238
      %v247 = vunpack.c.l.bf16 %v239
      %v248 = vunpack.c.l.bf16 %v240
      %v249 = vunpack.c.l.bf16 %v241
      %v250 = vunpack.c.l.bf16 %v242
      %v251 = vunpack.c.l.bf16 %v243
      %v252 = vunpack.c.l.bf16 %v244
      %v253 = vsel %vm220, 1, 0
      %v254 = vperm.slane %v253, 0
      %vm255 = vcmp.eq.s32.totalorder %v254, 1
      %v256 = vsel %vm255, %v229, %v245
      %v257 = vsel %vm255, %v230, %v246
      %v258 = vsel %vm255, %v231, %v247
      %v259 = vsel %vm255, %v232, %v248
      %v260 = vsel %vm255, %v233, %v249
      %v261 = vsel %vm255, %v234, %v250
      %v262 = vsel %vm255, %v235, %v251
      %v263 = vsel %vm255, %v236, %v252
      %v265 = vperm.slane %v218, 0
      %v267 = vmul.f32 %v256, %v265
      %v268 = vmul.f32 %v257, %v265
      %v269 = vmul.f32 %v258, %v265
      %v270 = vmul.f32 %v259, %v265
      %v271 = vmul.f32 %v260, %v265
      %v272 = vmul.f32 %v261, %v265
      %v273 = vmul.f32 %v262, %v265
      %v274 = vmul.f32 %v263, %v265
      %v276 = vperm.slane %v219, 0
      %v278 = vadd.f32 %v267, %v276
      %v279 = vadd.f32 %v268, %v276
      %v280 = vadd.f32 %v269, %v276
      %v281 = vadd.f32 %v270, %v276
      %v282 = vadd.f32 %v271, %v276
      %v283 = vadd.f32 %v272, %v276
      %v284 = vadd.f32 %v273, %v276
      %v285 = vadd.f32 %v274, %v276
      %v286 = vmul.f32 %v278, 0.01
      %v287 = vmul.f32 %v279, 0.01
      %v288 = vmul.f32 %v280, 0.01
      %v289 = vmul.f32 %v281, 0.01
      %v290 = vmul.f32 %v282, 0.01
      %v291 = vmul.f32 %v283, 0.01
      %v292 = vmul.f32 %v284, 0.01
      %v293 = vmul.f32 %v285, 0.01
      %v294 = vmax.f32 %v278, %v286
      %v295 = vmax.f32 %v279, %v287
      %v296 = vmax.f32 %v280, %v288
      %v297 = vmax.f32 %v281, %v289
      %v298 = vmax.f32 %v282, %v290
      %v299 = vmax.f32 %v283, %v291
      %v300 = vmax.f32 %v284, %v292
      %v301 = vmax.f32 %v285, %v293
      %302 = vst [vmem:[%s217] sm:$0xff] %v294
      %303 = vst [vmem:[%s217 + $0x8] sm:$0xff] %v295
      %304 = vst [vmem:[%s217 + $0x10] sm:$0xff] %v296
      %305 = vst [vmem:[%s217 + $0x18] sm:$0xff] %v297
      %306 = vst [vmem:[%s217 + $0x20] sm:$0xff] %v298
      %307 = vst [vmem:[%s217 + $0x28] sm:$0xff] %v299
      %308 = vst [vmem:[%s217 + $0x30] sm:$0xff] %v300
      %309 = vst [vmem:[%s217 + $0x38] sm:$0xff] %v301
      %p310 = scmp.lt.s32.totalorder %s15, 1
      %s311 = scalar_select %p310, %s15, 1
      %s312 = smul.addr %s311, 8
      %s313 = smul.addr %s312, 8
      %s314 = scalar_lea.vmem %s4, %s313
      // Predicated region
      $region37: #{conv_block_forward.3} parent=35 // pred_check
        %p315 = pneg %p127
      $region38: #{conv_block_forward.3} parent=35 // pred_check_branch
        %317 = sbr.rel (%p315) target = $region40
      $region39: #{conv_block_forward.3} parent=35 // pred_region
        _
      $region40: #{conv_block_forward.3} parent=35 // pred_fallthru
        _
    $region36: #{conv_block_forward.3} parent=5 // pred_fallthru
      _
    %p318 = scmp.le.s32.totalorder 2, %s10
    // Predicated region
    $region41: #{conv_block_forward.3} parent=5 // pred_check
      %p319 = pneg %p318
    $region42: #{conv_block_forward.3} parent=5 // pred_check_branch
      %321 = sbr.rel (%p319) target = $region44
    $region43: #{conv_block_forward.3} parent=5 // pred_region
      %s322 = ssub.s32 %s10, 2
      // Predicated region
      $region45: #{conv_block_forward.3} parent=43 // pred_check
        %p323 = pneg %p133
      $region46: #{conv_block_forward.3} parent=43 // pred_check_branch
        %325 = sbr.rel (%p323) target = $region48
      $region47: #{conv_block_forward.3} parent=43 // pred_region
        %p326 = scmp.lt.s32.totalorder %s16, 1
        %s327 = scalar_select %p326, %s16, 1
        %s328 = smul.addr %s327, 8
        %s329 = smul.addr %s328, 8
        %s330 = scalar_lea.vmem %s4, %s329
      $region48: #{conv_block_forward.3} parent=43 // pred_fallthru
        _
    $region44: #{conv_block_forward.3} parent=5 // pred_fallthru
      _
  $region6: #{conv_block_forward.3} parent=0 // loop_footer
    %s14 = sadd.s32 1, %s10
  $region7: #{conv_block_forward.3} parent=0 // loop_footer_branch
    %9 = sbr.rel target = $region3
  $region8: #{conv_block_forward.3} parent=0 // loop_exit
    _

// kernel: conv_block_forward.2
$region0: #{conv_block_forward.2}
  #allocation0 [shape = 'u32[]', space=smem, size = 0x4, offset = 0x4, fixed_abs, tag = 'smem constant byte address 0x4 - core index']
  #allocation1 [shape = 'u32[72,128]{1,0:T(1,128)}', space=vmem, size = 0x9000, scoped, tag = 'internal scratch']
  #allocation2 [shape = 'f32[8,2,24,128]{3,2,1,0:T(8,128)}', space=vmem, size = 0x30000, scoped, tag = 'scratch operand']
  %s0 = inlined_call_operand.vmem [shape: bf16[2,440,4], index: 0, kind: input, shape index: {}]
  %s1 = inlined_call_operand.vmem [shape: bf16[9,4,128], index: 1, kind: input, shape index: {}]
  %s2 = inlined_call_operand.vmem [shape: bf16[2,8,8,128], index: 2, kind: output, shape index: {0}]
  %s3 = inlined_call_operand.vmem [shape: bf16[2,8,8,128], index: 3, kind: output, shape index: {1}]
  %s4 = inlined_call_operand.vmem [shape: f32[32,128], index: 4, kind: output, shape index: {2}]
  %5 = xla_tuple %s2, %s3, %s4
  %s6 = sld [smem:[#allocation0]]
  $region57: #{conv_block_forward.2} parent=0
    _
  %s8 = ssub.s32 1, %s6
  %s9 = scalar_select 0, %s8, %s6
  loop: start=0, step=1, limit=4
  $region2: #{conv_block_forward.2} parent=0 // loop_pre_header
    _
  $region3: #{conv_block_forward.2} parent=0 // loop_header
    %s11 = sphi 0, %s15
    %p12 = scmp.ge.s32.totalorder %s11, 4
    %s21 = sphi 0, %s23
    %s24 = sphi 0, %s21
    %s25 = sphi 0, %s24
    %s41 = sphi 0, %s25
    %s45 = sphi 0, %s45
    %s47 = sphi 0, %s45
    %s48 = sphi 0, %s47
    %s62 = sphi 0, %s48
    %s68 = sphi 0, %s70
    %s71 = sphi 0, %s68
    %s72 = sphi 0, %s71
    %s88 = sphi 0, %s72
    %s94 = sphi 0, %s96
    %s97 = sphi 0, %s94
    %s98 = sphi 0, %s97
    %s114 = sphi 0, %s98
    %s120 = sphi 0, %s122
    %s123 = sphi 0, %s120
    %s124 = sphi 0, %s123
    %s140 = sphi 0, %s124
  $region4: #{conv_block_forward.2} parent=0 // loop_header_branch
    %14 = sbr.rel (%p12) target = $region8
  $region5: #{conv_block_forward.2} parent=0 // loop_body
    %s16 = ssub.s32 %s11, 1
    %s17 = ssub.s32 %s11, 2
    %s18 = sadd.s32 %s11, 1
    %s19 = ssub.s32 %s11, %s18
    %p20 = scmp.eq.s32.totalorder %s19, 0
    %s22 = sadd.s32 %s21, 1
    %s23 = scalar_select %p20, %s21, %s22
    %p26 = pneg %p20
    %p27 = scmp.eq.s32.totalorder %s11, 1
    %p28 = por %p26, %p27
    %p29 = scmp.ne.s32.totalorder %s21, %s24
    %p30 = scmp.eq.s32.totalorder %s11, 0
    %p31 = por %p29, %p30
    %p32 = scmp.ne.s32.totalorder %s21, %s24
    %p33 = scmp.eq.s32.totalorder %s16, 1
    %p34 = por %p32, %p33
    %p35 = scmp.ne.s32.totalorder %s24, %s25
    %p36 = scmp.eq.s32.totalorder %s16, 0
    %p37 = por %p35, %p36
    %p38 = scmp.ne.s32.totalorder %s24, %s25
    %p39 = scmp.eq.s32.totalorder %s17, 1
    %p40 = por %p38, %p39
    %p42 = scmp.ne.s32.totalorder %s25, %s41
    %p43 = scmp.eq.s32.totalorder %s17, 0
    %p44 = por %p42, %p43
    %s46 = sadd.s32 %s45, 1
    %p49 = scmp.eq.s32.totalorder %s11, 1
    %p50 = scmp.ne.s32.totalorder %s45, %s47
    %p51 = scmp.eq.s32.totalorder %s11, 0
    %p52 = por %p50, %p51
    %p53 = scmp.ne.s32.totalorder %s45, %s47
    %p54 = scmp.eq.s32.totalorder %s16, 1
    %p55 = por %p53, %p54
    %p56 = scmp.ne.s32.totalorder %s47, %s48
    %p57 = scmp.eq.s32.totalorder %s16, 0
    %p58 = por %p56, %p57
    %p59 = scmp.ne.s32.totalorder %s47, %s48
    %p60 = scmp.eq.s32.totalorder %s17, 1
    %p61 = por %p59, %p60
    %p63 = scmp.ne.s32.totalorder %s48, %s62
    %p64 = scmp.eq.s32.totalorder %s17, 0
    %p65 = por %p63, %p64
    %s66 = ssub.s32 %s11, %s18
    %p67 = scmp.eq.s32.totalorder %s66, 0
    %s69 = sadd.s32 %s68, 1
    %s70 = scalar_select %p67, %s68, %s69
    %p73 = pneg %p67
    %p74 = scmp.eq.s32.totalorder %s11, 1
    %p75 = por %p73, %p74
    %p76 = scmp.ne.s32.totalorder %s68, %s71
    %p77 = scmp.eq.s32.totalorder %s11, 0
    %p78 = por %p76, %p77
    %p79 = scmp.ne.s32.totalorder %s68, %s71
    %p80 = scmp.eq.s32.totalorder %s16, 1
    %p81 = por %p79, %p80
    %p82 = scmp.ne.s32.totalorder %s71, %s72
    %p83 = scmp.eq.s32.totalorder %s16, 0
    %p84 = por %p82, %p83
    %p85 = scmp.ne.s32.totalorder %s71, %s72
    %p86 = scmp.eq.s32.totalorder %s17, 1
    %p87 = por %p85, %p86
    %p89 = scmp.ne.s32.totalorder %s72, %s88
    %p90 = scmp.eq.s32.totalorder %s17, 0
    %p91 = por %p89, %p90
    %s92 = ssub.s32 %s11, %s18
    %p93 = scmp.eq.s32.totalorder %s92, 0
    %s95 = sadd.s32 %s94, 1
    %s96 = scalar_select %p93, %s94, %s95
    %p99 = pneg %p93
    %p100 = scmp.eq.s32.totalorder %s11, 1
    %p101 = por %p99, %p100
    %p102 = scmp.ne.s32.totalorder %s94, %s97
    %p103 = scmp.eq.s32.totalorder %s11, 0
    %p104 = por %p102, %p103
    %p105 = scmp.ne.s32.totalorder %s94, %s97
    %p106 = scmp.eq.s32.totalorder %s16, 1
    %p107 = por %p105, %p106
    %p108 = scmp.ne.s32.totalorder %s97, %s98
    %p109 = scmp.eq.s32.totalorder %s16, 0
    %p110 = por %p108, %p109
    %p111 = scmp.ne.s32.totalorder %s97, %s98
    %p112 = scmp.eq.s32.totalorder %s17, 1
    %p113 = por %p111, %p112
    %p115 = scmp.ne.s32.totalorder %s98, %s114
    %p116 = scmp.eq.s32.totalorder %s17, 0
    %p117 = por %p115, %p116
    %s118 = ssub.s32 %s11, %s18
    %p119 = scmp.eq.s32.totalorder %s118, 0
    %s121 = sadd.s32 %s120, 1
    %s122 = scalar_select %p119, %s120, %s121
    %p125 = pneg %p119
    %p126 = scmp.eq.s32.totalorder %s11, 1
    %p127 = por %p125, %p126
    %p128 = scmp.ne.s32.totalorder %s120, %s123
    %p129 = scmp.eq.s32.totalorder %s11, 0
    %p130 = por %p128, %p129
    %p131 = scmp.ne.s32.totalorder %s120, %s123
    %p132 = scmp.eq.s32.totalorder %s16, 1
    %p133 = por %p131, %p132
    %p134 = scmp.ne.s32.totalorder %s123, %s124
    %p135 = scmp.eq.s32.totalorder %s16, 0
    %p136 = por %p134, %p135
    %p137 = scmp.ne.s32.totalorder %s123, %s124
    %p138 = scmp.eq.s32.totalorder %s17, 1
    %p139 = por %p137, %p138
    %p141 = scmp.ne.s32.totalorder %s124, %s140
    %p142 = scmp.eq.s32.totalorder %s17, 0
    %p143 = por %p141, %p142
    %p144 = scmp.le.s32.totalorder 1, %s11
    %p145 = scmp.lt.s32.totalorder %s11, 3
    %p146 = pnand %p144, %p145
    %p147 = pneg %p146
    // Predicated region
    $region9: #{conv_block_forward.2} parent=5 // pred_check
      _
    $region10: #{conv_block_forward.2} parent=5 // pred_check_branch
      %149 = sbr.rel (%p146) target = $region12
    $region11: #{conv_block_forward.2} parent=5 // pred_region
      %s150 = ssub.s32 %s11, 1
      // Predicated region
      $region13: #{conv_block_forward.2} parent=11 // pred_check
        %p151 = pneg %p58
      $region14: #{conv_block_forward.2} parent=11 // pred_check_branch
        %153 = sbr.rel (%p151) target = $region16
      $region15: #{conv_block_forward.2} parent=11 // pred_region
        _
      $region16: #{conv_block_forward.2} parent=11 // pred_fallthru
        _
    $region12: #{conv_block_forward.2} parent=5 // pred_fallthru
      _
    %p154 = scmp.lt.s32.totalorder %s11, 2
    // Predicated region
    $region17: #{conv_block_forward.2} parent=5 // pred_check
      %p155 = pneg %p154
    $region18: #{conv_block_forward.2} parent=5 // pred_check_branch
      %157 = sbr.rel (%p155) target = $region20
    $region19: #{conv_block_forward.2} parent=5 // pred_region
      // Predicated region
      $region21: #{conv_block_forward.2} parent=19 // pred_check
        %p158 = pneg %p31
      $region22: #{conv_block_forward.2} parent=19 // pred_check_branch
        %160 = sbr.rel (%p158) target = $region24
      $region23: #{conv_block_forward.2} parent=19 // pred_region
        %p161 = scmp.lt.s32.totalorder %s11, 1
        %s162 = scalar_select %p161, %s11, 1
        %s163 = smul.addr %s162, 55
        %s164 = smul.addr %s163, 4
        %s165 = scalar_lea.vmem %s0, %s164
      $region24: #{conv_block_forward.2} parent=19 // pred_fallthru
        _
    $region20: #{conv_block_forward.2} parent=5 // pred_fallthru
      _
    %p166 = scmp.le.s32.totalorder 1, %s11
    %p167 = scmp.lt.s32.totalorder %s11, 3
    %p168 = pnand %p166, %p167
    %p169 = pneg %p168
    // Predicated region
    $region25: #{conv_block_forward.2} parent=5 // pred_check
      _
    $region26: #{conv_block_forward.2} parent=5 // pred_check_branch
      %171 = sbr.rel (%p168) target = $region28
    $region27: #{conv_block_forward.2} parent=5 // pred_region
      %s172 = ssub.s32 %s11, 1
      %p173 = scmp.lt.s32.totalorder %s16, 1
      %s174 = scalar_select %p173, %s16, 1
      %s175 = smul.addr %s174, 55
      %s176 = smul.addr %s175, 4
      %s177 = scalar_lea.vmem %s0, %s176
      %p178 = pneg %p37
      %p179 = pneg %p34
      %p180 = pneg %p58
      %p181 = pneg %p55
      %p182 = pneg %p84
      %p183 = pneg %p81
      %p184 = scmp.lt.s32.totalorder %s16, 1
      %s185 = scalar_select %p184, %s16, 1
      %s186 = smul.addr %s185, 8
      %s187 = smul.addr %s186, 4
      %s188 = scalar_lea.vmem %s2, %s187
      %p189 = pneg %p110
      %p190 = pneg %p107
      %p191 = scmp.lt.s32.totalorder %s16, 1
      %s192 = scalar_select %p191, %s16, 1
      %s193 = smul.addr %s192, 8
      %s194 = smul.addr %s193, 4
      %s195 = scalar_lea.vmem %s3, %s194
      %p196 = pneg %p136
      %p197 = pneg %p133
      %s198 = smul.u32 2, %s16
      %p199 = scmp.lt.s32.totalorder %s198, 3
      %s200 = scalar_select %p199, %s198, 3
      %s201 = smul.addr %s200, 8
      %s202 = scalar_lea.vmem %s4, %s201
      %p203 = scmp.lt.s32.totalorder %s16, 1
      %s204 = scalar_select %p203, %s16, 1
      %s205 = smul.addr %s204, 55
      %s206 = smul.addr %s205, 4
      %s207 = scalar_lea.vmem %s0, %s206
      %p208 = scmp.lt.s32.totalorder %s16, 1
      %s209 = scalar_select %p208, %s16, 1
      %s210 = smul.addr %s209, 8
      %s211 = smul.addr %s210, 4
      %s212 = scalar_lea.vmem %s2, %s211
      %p213 = scmp.lt.s32.totalorder %s16, 1
      %s214 = scalar_select %p213, %s16, 1
      %s215 = smul.addr %s214, 8
      %s216 = smul.addr %s215, 4
      %s217 = scalar_lea.vmem %s3, %s216
      %s218 = smul.u32 2, %s16
      %p219 = scmp.lt.s32.totalorder %s218, 3
      %s220 = scalar_select %p219, %s218, 3
      %s221 = smul.addr %s220, 8
      %s222 = scalar_lea.vmem %s4, %s221
      %s223 = smul.u32 2, %s16
      %v225 = vlaneseq
      %v226 = vshrl.u32 %v225, 7
      %v227 = vadd.s32 %v226, 8
      %v228 = vadd.s32 %v226, 16
      %v229 = vadd.s32 %v226, 24
      %v230 = vadd.s32 %v226, 32
      %v231 = vadd.s32 %v226, 40
      %v232 = vadd.s32 %v226, 48
      %v233 = vadd.s32 %v226, 56
      %v234 = vadd.s32 %v226, 64
      %v235 = vadd.s32 %v226, 72
      %v236 = vadd.s32 %v226, 80
      %v237 = vadd.s32 %v226, 88
      %v238 = vadd.s32 %v226, 96
      %v239 = vadd.s32 %v226, 104
      %v240 = vadd.s32 %v226, 112
      %v241 = vadd.s32 %v226, 120
      %v242 = vadd.s32 %v226, 128
      %v243 = vadd.s32 %v226, 136
      %v244 = vadd.s32 %v226, 144
      %v245 = vadd.s32 %v226, 152
      %v246 = vadd.s32 %v226, 160
      %v247 = vadd.s32 %v226, 168
      %v248 = vadd.s32 %v226, 176
      %v249 = vadd.s32 %v226, 184
      %v250 = vadd.s32 %v226, 192
      %v251 = vadd.s32 %v226, 200
      %v252 = vadd.s32 %v226, 208
      %v253 = vadd.s32 %v226, 216
      %v254 = vadd.s32 %v226, 224
      %v255 = vadd.s32 %v226, 232
      %v256 = vadd.s32 %v226, 240
      %v257 = vadd.s32 %v226, 248
      %v258 = vadd.s32 %v226, 256
      %v259 = vadd.s32 %v226, 264
      %v260 = vadd.s32 %v226, 272
      %v261 = vadd.s32 %v226, 280
      %v262 = vadd.s32 %v226, 288
      %v263 = vadd.s32 %v226, 296
      %v264 = vadd.s32 %v226, 304
      %v265 = vadd.s32 %v226, 312
      %v266 = vadd.s32 %v226, 320
      %v267 = vadd.s32 %v226, 328
      %v268 = vadd.s32 %v226, 336
      %v269 = vadd.s32 %v226, 344
      %v270 = vadd.s32 %v226, 352
      %v271 = vadd.s32 %v226, 360
      %v272 = vadd.s32 %v226, 368
      %v273 = vadd.s32 %v226, 376
      %vm274 = vcmp.lt.s32.totalorder %v226, 0
      %v275 = vsub.s32 0, %v226
      %v276 = vsel %vm274, %v275, %v226
      %v277 = vand.u32 %v276, 65535
      %v278 = vshrl.u32 %v276, 16
      %v280 = vmul.u32 %v277, 43691
      %v281 = vmul.u32 %v277, 43690
      %v282 = vmul.u32 %v278, 43691
      %v283 = vmul.u32 %v278, 43690
      %v284 = vshll.u32 %v281, 16
      %v285 = vshrl.u32 %v281, 16
      %v286 = vshll.u32 %v282, 16
      %v287 = vshrl.u32 %v282, 16
      %vm288 = vc.u32 %v280, %v284
      %v289 = vsel %vm288, 1, 0
      %v290 = vadd.s32 %v280, %v284
      %v291 = vadd.s32 %v283, %v289
      %vm292 = vc.u32 %v290, %v286
      %v293 = vsel %vm292, 1, 0
      %v294 = vadd.s32 %v290, %v286
      %v295 = vadd.s32 %v291, %v293
      %v296 = vadd.s32 %v295, %v285
      %v297 = vadd.s32 %v296, %v287
      %v298 = vshrl.u32 %v297, 4
      %v299 = vmul.u32 %v298, 24
      %v300 = vsub.s32 %v276, %v299
      %v301 = vsub.s32 0, %v300
      %v302 = vsel %vm274, %v301, %v300
      %vm303 = vcmp.lt.s32.totalorder %v227, 0
      %v304 = vsub.s32 0, %v227
      %v305 = vsel %vm303, %v304, %v227
      %v306 = vand.u32 %v305, 65535
      %v307 = vshrl.u32 %v305, 16
      %v309 = vmul.u32 %v306, 43691
      %v310 = vmul.u32 %v306, 43690
      %v311 = vmul.u32 %v307, 43691
      %v312 = vmul.u32 %v307, 43690
      %v313 = vshll.u32 %v310, 16
      %v314 = vshrl.u32 %v310, 16
      %v315 = vshll.u32 %v311, 16
      %v316 = vshrl.u32 %v311, 16
      %vm317 = vc.u32 %v309, %v313
      %v318 = vsel %vm317, 1, 0
      %v319 = vadd.s32 %v309, %v313
      %v320 = vadd.s32 %v312, %v318
      %vm321 = vc.u32 %v319, %v315
      %v322 = vsel %vm321, 1, 0
      %v323 = vadd.s32 %v319, %v315
      %v324 = vadd.s32 %v320, %v322
      %v325 = vadd.s32 %v324, %v314
      %v326 = vadd.s32 %v325, %v316
      %v327 = vshrl.u32 %v326, 4
      %v328 = vmul.u32 %v327, 24
      %v329 = vsub.s32 %v305, %v328
      %v330 = vsub.s32 0, %v329
      %v331 = vsel %vm303, %v330, %v329
      %vm332 = vcmp.lt.s32.totalorder %v228, 0
      %v333 = vsub.s32 0, %v228
      %v334 = vsel %vm332, %v333, %v228
      %v335 = vand.u32 %v334, 65535
      %v336 = vshrl.u32 %v334, 16
      %v338 = vmul.u32 %v335, 43691
      %v339 = vmul.u32 %v335, 43690
      %v340 = vmul.u32 %v336, 43691
      %v341 = vmul.u32 %v336, 43690
      %v342 = vshll.u32 %v339, 16
      %v343 = vshrl.u32 %v339, 16
      %v344 = vshll.u32 %v340, 16
      %v345 = vshrl.u32 %v340, 16
      %vm346 = vc.u32 %v338, %v342
      %v347 = vsel %vm346, 1, 0
      %v348 = vadd.s32 %v338, %v342
      %v349 = vadd.s32 %v341, %v347
      %vm350 = vc.u32 %v348, %v344
      %v351 = vsel %vm350, 1, 0
      %v352 = vadd.s32 %v348, %v344
      %v353 = vadd.s32 %v349, %v351
      %v354 = vadd.s32 %v353, %v343
      %v355 = vadd.s32 %v354, %v345
      %v356 = vshrl.u32 %v355, 4
      %v357 = vmul.u32 %v356, 24
      %v358 = vsub.s32 %v334, %v357
      %v359 = vsub.s32 0, %v358
      %v360 = vsel %vm332, %v359, %v358
      %vm361 = vcmp.lt.s32.totalorder %v229, 0
      %v362 = vsub.s32 0, %v229
      %v363 = vsel %vm361, %v362, %v229
      %v364 = vand.u32 %v363, 65535
      %v365 = vshrl.u32 %v363, 16
      %v367 = vmul.u32 %v364, 43691
      %v368 = vmul.u32 %v364, 43690
      %v369 = vmul.u32 %v365, 43691
      %v370 = vmul.u32 %v365, 43690
      %v371 = vshll.u32 %v368, 16
      %v372 = vshrl.u32 %v368, 16
      %v373 = vshll.u32 %v369, 16
      %v374 = vshrl.u32 %v369, 16
      %vm375 = vc.u32 %v367, %v371
      %v376 = vsel %vm375, 1, 0
      %v377 = vadd.s32 %v367, %v371
      %v378 = vadd.s32 %v370, %v376
      %vm379 = vc.u32 %v377, %v373
      %v380 = vsel %vm379, 1, 0
      %v381 = vadd.s32 %v377, %v373
      %v382 = vadd.s32 %v378, %v380
      %v383 = vadd.s32 %v382, %v372
      %v384 = vadd.s32 %v383, %v374
      %v385 = vshrl.u32 %v384, 4
      %v386 = vmul.u32 %v385, 24
      %v387 = vsub.s32 %v363, %v386
      %v388 = vsub.s32 0, %v387
      %v389 = vsel %vm361, %v388, %v387
      %vm390 = vcmp.lt.s32.totalorder %v230, 0
      %v391 = vsub.s32 0, %v230
      %v392 = vsel %vm390, %v391, %v230
      %v393 = vand.u32 %v392, 65535
      %v394 = vshrl.u32 %v392, 16
      %v396 = vmul.u32 %v393, 43691
      %v397 = vmul.u32 %v393, 43690
      %v398 = vmul.u32 %v394, 43691
      %v399 = vmul.u32 %v394, 43690
      %v400 = vshll.u32 %v397, 16
      %v401 = vshrl.u32 %v397, 16
      %v402 = vshll.u32 %v398, 16
      %v403 = vshrl.u32 %v398, 16
      %vm404 = vc.u32 %v396, %v400
      %v405 = vsel %vm404, 1, 0
      %v406 = vadd.s32 %v396, %v400
      %v407 = vadd.s32 %v399, %v405
      %vm408 = vc.u32 %v406, %v402
      %v409 = vsel %vm408, 1, 0
      %v410 = vadd.s32 %v406, %v402
      %v411 = vadd.s32 %v407, %v409
      %v412 = vadd.s32 %v411, %v401
      %v413 = vadd.s32 %v412, %v403
      %v414 = vshrl.u32 %v413, 4
      %v415 = vmul.u32 %v414, 24
      %v416 = vsub.s32 %v392, %v415
      %v417 = vsub.s32 0, %v416
      %v418 = vsel %vm390, %v417, %v416
      %vm419 = vcmp.lt.s32.totalorder %v231, 0
      %v420 = vsub.s32 0, %v231
      %v421 = vsel %vm419, %v420, %v231
      %v422 = vand.u32 %v421, 65535
      %v423 = vshrl.u32 %v421, 16
      %v425 = vmul.u32 %v422, 43691
      %v426 = vmul.u32 %v422, 43690
      %v427 = vmul.u32 %v423, 43691
      %v428 = vmul.u32 %v423, 43690
      %v429 = vshll.u32 %v426, 16
      %v430 = vshrl.u32 %v426, 16
      %v431 = vshll.u32 %v427, 16
      %v432 = vshrl.u32 %v427, 16
      %vm433 = vc.u32 %v425, %v429
      %v434 = vsel %vm433, 1, 0
      %v435 = vadd.s32 %v425, %v429
      %v436 = vadd.s32 %v428, %v434
      %vm437 = vc.u32 %v435, %v431
      %v438 = vsel %vm437, 1, 0
      %v439 = vadd.s32 %v435, %v431
      %v440 = vadd.s32 %v436, %v438
      %v441 = vadd.s32 %v440, %v430
      %v442 = vadd.s32 %v441, %v432
      %v443 = vshrl.u32 %v442, 4
      %v444 = vmul.u32 %v443, 24
      %v445 = vsub.s32 %v421, %v444
      %v446 = vsub.s32 0, %v445
      %v447 = vsel %vm419, %v446, %v445
      %vm448 = vcmp.lt.s32.totalorder %v232, 0
      %v449 = vsub.s32 0, %v232
      %v450 = vsel %vm448, %v449, %v232
      %v451 = vand.u32 %v450, 65535
      %v452 = vshrl.u32 %v450, 16
      %v454 = vmul.u32 %v451, 43691
      %v455 = vmul.u32 %v451, 43690
      %v456 = vmul.u32 %v452, 43691
      %v457 = vmul.u32 %v452, 43690
      %v458 = vshll.u32 %v455, 16
      %v459 = vshrl.u32 %v455, 16
      %v460 = vshll.u32 %v456, 16
      %v461 = vshrl.u32 %v456, 16
      %vm462 = vc.u32 %v454, %v458
      %v463 = vsel %vm462, 1, 0
      %v464 = vadd.s32 %v454, %v458
      %v465 = vadd.s32 %v457, %v463
      %vm466 = vc.u32 %v464, %v460
      %v467 = vsel %vm466, 1, 0
      %v468 = vadd.s32 %v464, %v460
      %v469 = vadd.s32 %v465, %v467
      %v470 = vadd.s32 %v469, %v459
      %v471 = vadd.s32 %v470, %v461
      %v472 = vshrl.u32 %v471, 4
      %v473 = vmul.u32 %v472, 24
      %v474 = vsub.s32 %v450, %v473
      %v475 = vsub.s32 0, %v474
      %v476 = vsel %vm448, %v475, %v474
      %vm477 = vcmp.lt.s32.totalorder %v233, 0
      %v478 = vsub.s32 0, %v233
      %v479 = vsel %vm477, %v478, %v233
      %v480 = vand.u32 %v479, 65535
      %v481 = vshrl.u32 %v479, 16
      %v483 = vmul.u32 %v480, 43691
      %v484 = vmul.u32 %v480, 43690
      %v485 = vmul.u32 %v481, 43691
      %v486 = vmul.u32 %v481, 43690
      %v487 = vshll.u32 %v484, 16
      %v488 = vshrl.u32 %v484, 16
      %v489 = vshll.u32 %v485, 16
      %v490 = vshrl.u32 %v485, 16
      %vm491 = vc.u32 %v483, %v487
      %v492 = vsel %vm491, 1, 0
      %v493 = vadd.s32 %v483, %v487
      %v494 = vadd.s32 %v486, %v492
      %vm495 = vc.u32 %v493, %v489
      %v496 = vsel %vm495, 1, 0
      %v497 = vadd.s32 %v493, %v489
      %v498 = vadd.s32 %v494, %v496
      %v499 = vadd.s32 %v498, %v488
      %v500 = vadd.s32 %v499, %v490
      %v501 = vshrl.u32 %v500, 4
      %v502 = vmul.u32 %v501, 24
      %v503 = vsub.s32 %v479, %v502
      %v504 = vsub.s32 0, %v503
      %v505 = vsel %vm477, %v504, %v503
      %vm506 = vcmp.lt.s32.totalorder %v234, 0
      %v507 = vsub.s32 0, %v234
      %v508 = vsel %vm506, %v507, %v234
      %v509 = vand.u32 %v508, 65535
      %v510 = vshrl.u32 %v508, 16
      %v512 = vmul.u32 %v509, 43691
      %v513 = vmul.u32 %v509, 43690
      %v514 = vmul.u32 %v510, 43691
      %v515 = vmul.u32 %v510, 43690
      %v516 = vshll.u32 %v513, 16
      %v517 = vshrl.u32 %v513, 16
      %v518 = vshll.u32 %v514, 16
      %v519 = vshrl.u32 %v514, 16
      %vm520 = vc.u32 %v512, %v516
      %v521 = vsel %vm520, 1, 0
      %v522 = vadd.s32 %v512, %v516
      %v523 = vadd.s32 %v515, %v521
      %vm524 = vc.u32 %v522, %v518
      %v525 = vsel %vm524, 1, 0
      %v526 = vadd.s32 %v522, %v518
      %v527 = vadd.s32 %v523, %v525
      %v528 = vadd.s32 %v527, %v517
      %v529 = vadd.s32 %v528, %v519
      %v530 = vshrl.u32 %v529, 4
      %v531 = vmul.u32 %v530, 24
      %v532 = vsub.s32 %v508, %v531
      %v533 = vsub.s32 0, %v532
      %v534 = vsel %vm506, %v533, %v532
      %vm535 = vcmp.lt.s32.totalorder %v235, 0
      %v536 = vsub.s32 0, %v235
      %v537 = vsel %vm535, %v536, %v235
      %v538 = vand.u32 %v537, 65535
      %v539 = vshrl.u32 %v537, 16
      %v541 = vmul.u32 %v538, 43691
      %v542 = vmul.u32 %v538, 43690
      %v543 = vmul.u32 %v539, 43691
      %v544 = vmul.u32 %v539, 43690
      %v545 = vshll.u32 %v542, 16
      %v546 = vshrl.u32 %v542, 16
      %v547 = vshll.u32 %v543, 16
      %v548 = vshrl.u32 %v543, 16
      %vm549 = vc.u32 %v541, %v545
      %v550 = vsel %vm549, 1, 0
      %v551 = vadd.s32 %v541, %v545
      %v552 = vadd.s32 %v544, %v550
      %vm553 = vc.u32 %v551, %v547
      %v554 = vsel %vm553, 1, 0
      %v555 = vadd.s32 %v551, %v547
      %v556 = vadd.s32 %v552, %v554
      %v557 = vadd.s32 %v556, %v546
      %v558 = vadd.s32 %v557, %v548
      %v559 = vshrl.u32 %v558, 4
      %v560 = vmul.u32 %v559, 24
      %v561 = vsub.s32 %v537, %v560
      %v562 = vsub.s32 0, %v561
      %v563 = vsel %vm535, %v562, %v561
      %vm564 = vcmp.lt.s32.totalorder %v236, 0
      %v565 = vsub.s32 0, %v236
      %v566 = vsel %vm564, %v565, %v236
      %v567 = vand.u32 %v566, 65535
      %v568 = vshrl.u32 %v566, 16
      %v570 = vmul.u32 %v567, 43691
      %v571 = vmul.u32 %v567, 43690
      %v572 = vmul.u32 %v568, 43691
      %v573 = vmul.u32 %v568, 43690
      %v574 = vshll.u32 %v571, 16
      %v575 = vshrl.u32 %v571, 16
      %v576 = vshll.u32 %v572, 16
      %v577 = vshrl.u32 %v572, 16
      %vm578 = vc.u32 %v570, %v574
      %v579 = vsel %vm578, 1, 0
      %v580 = vadd.s32 %v570, %v574
      %v581 = vadd.s32 %v573, %v579
      %vm582 = vc.u32 %v580, %v576
      %v583 = vsel %vm582, 1, 0
      %v584 = vadd.s32 %v580, %v576
      %v585 = vadd.s32 %v581, %v583
      %v586 = vadd.s32 %v585, %v575
      %v587 = vadd.s32 %v586, %v577
      %v588 = vshrl.u32 %v587, 4
      %v589 = vmul.u32 %v588, 24
      %v590 = vsub.s32 %v566, %v589
      %v591 = vsub.s32 0, %v590
      %v592 = vsel %vm564, %v591, %v590
      %vm593 = vcmp.lt.s32.totalorder %v237, 0
      %v594 = vsub.s32 0, %v237
      %v595 = vsel %vm593, %v594, %v237
      %v596 = vand.u32 %v595, 65535
      %v597 = vshrl.u32 %v595, 16
      %v599 = vmul.u32 %v596, 43691
      %v600 = vmul.u32 %v596, 43690
      %v601 = vmul.u32 %v597, 43691
      %v602 = vmul.u32 %v597, 43690
      %v603 = vshll.u32 %v600, 16
      %v604 = vshrl.u32 %v600, 16
      %v605 = vshll.u32 %v601, 16
      %v606 = vshrl.u32 %v601, 16
      %vm607 = vc.u32 %v599, %v603
      %v608 = vsel %vm607, 1, 0
      %v609 = vadd.s32 %v599, %v603
      %v610 = vadd.s32 %v602, %v608
      %vm611 = vc.u32 %v609, %v605
      %v612 = vsel %vm611, 1, 0
      %v613 = vadd.s32 %v609, %v605
      %v614 = vadd.s32 %v610, %v612
      %v615 = vadd.s32 %v614, %v604
      %v616 = vadd.s32 %v615, %v606
      %v617 = vshrl.u32 %v616, 4
      %v618 = vmul.u32 %v617, 24
      %v619 = vsub.s32 %v595, %v618
      %v620 = vsub.s32 0, %v619
      %v621 = vsel %vm593, %v620, %v619
      %vm622 = vcmp.lt.s32.totalorder %v238, 0
      %v623 = vsub.s32 0, %v238
      %v624 = vsel %vm622, %v623, %v238
      %v625 = vand.u32 %v624, 65535
      %v626 = vshrl.u32 %v624, 16
      %v628 = vmul.u32 %v625, 43691
      %v629 = vmul.u32 %v625, 43690
      %v630 = vmul.u32 %v626, 43691
      %v631 = vmul.u32 %v626, 43690
      %v632 = vshll.u32 %v629, 16
      %v633 = vshrl.u32 %v629, 16
      %v634 = vshll.u32 %v630, 16
      %v635 = vshrl.u32 %v630, 16
      %vm636 = vc.u32 %v628, %v632
      %v637 = vsel %vm636, 1, 0
      %v638 = vadd.s32 %v628, %v632
      %v639 = vadd.s32 %v631, %v637
      %vm640 = vc.u32 %v638, %v634
      %v641 = vsel %vm640, 1, 0
      %v642 = vadd.s32 %v638, %v634
      %v643 = vadd.s32 %v639, %v641
      %v644 = vadd.s32 %v643, %v633
      %v645 = vadd.s32 %v644, %v635
      %v646 = vshrl.u32 %v645, 4
      %v647 = vmul.u32 %v646, 24
      %v648 = vsub.s32 %v624, %v647
      %v649 = vsub.s32 0, %v648
      %v650 = vsel %vm622, %v649, %v648
      %vm651 = vcmp.lt.s32.totalorder %v239, 0
      %v652 = vsub.s32 0, %v239
      %v653 = vsel %vm651, %v652, %v239
      %v654 = vand.u32 %v653, 65535
      %v655 = vshrl.u32 %v653, 16
      %v657 = vmul.u32 %v654, 43691
      %v658 = vmul.u32 %v654, 43690
      %v659 = vmul.u32 %v655, 43691
      %v660 = vmul.u32 %v655, 43690
      %v661 = vshll.u32 %v658, 16
      %v662 = vshrl.u32 %v658, 16
      %v663 = vshll.u32 %v659, 16
      %v664 = vshrl.u32 %v659, 16
      %vm665 = vc.u32 %v657, %v661
      %v666 = vsel %vm665, 1, 0
      %v667 = vadd.s32 %v657, %v661
      %v668 = vadd.s32 %v660, %v666
      %vm669 = vc.u32 %v667, %v663
      %v670 = vsel %vm669, 1, 0
      %v671 = vadd.s32 %v667, %v663
      %v672 = vadd.s32 %v668, %v670
      %v673 = vadd.s32 %v672, %v662
      %v674 = vadd.s32 %v673, %v664
      %v675 = vshrl.u32 %v674, 4
      %v676 = vmul.u32 %v675, 24
      %v677 = vsub.s32 %v653, %v676
      %v678 = vsub.s32 0, %v677
      %v679 = vsel %vm651, %v678, %v677
      %vm680 = vcmp.lt.s32.totalorder %v240, 0
      %v681 = vsub.s32 0, %v240
      %v682 = vsel %vm680, %v681, %v240
      %v683 = vand.u32 %v682, 65535
      %v684 = vshrl.u32 %v682, 16
      %v686 = vmul.u32 %v683, 43691
      %v687 = vmul.u32 %v683, 43690
      %v688 = vmul.u32 %v684, 43691
      %v689 = vmul.u32 %v684, 43690
      %v690 = vshll.u32 %v687, 16
      %v691 = vshrl.u32 %v687, 16
      %v692 = vshll.u32 %v688, 16
      %v693 = vshrl.u32 %v688, 16
      %vm694 = vc.u32 %v686, %v690
      %v695 = vsel %vm694, 1, 0
      %v696 = vadd.s32 %v686, %v690
      %v697 = vadd.s32 %v689, %v695
      %vm698 = vc.u32 %v696, %v692
      %v699 = vsel %vm698, 1, 0
      %v700 = vadd.s32 %v696, %v692
      %v701 = vadd.s32 %v697, %v699
      %v702 = vadd.s32 %v701, %v691
      %v703 = vadd.s32 %v702, %v693
      %v704 = vshrl.u32 %v703, 4
      %v705 = vmul.u32 %v704, 24
      %v706 = vsub.s32 %v682, %v705
      %v707 = vsub.s32 0, %v706
      %v708 = vsel %vm680, %v707, %v706
      %vm709 = vcmp.lt.s32.totalorder %v241, 0
      %v710 = vsub.s32 0, %v241
      %v711 = vsel %vm709, %v710, %v241
      %v712 = vand.u32 %v711, 65535
      %v713 = vshrl.u32 %v711, 16
      %v715 = vmul.u32 %v712, 43691
      %v716 = vmul.u32 %v712, 43690
      %v717 = vmul.u32 %v713, 43691
      %v718 = vmul.u32 %v713, 43690
      %v719 = vshll.u32 %v716, 16
      %v720 = vshrl.u32 %v716, 16
      %v721 = vshll.u32 %v717, 16
      %v722 = vshrl.u32 %v717, 16
      %vm723 = vc.u32 %v715, %v719
      %v724 = vsel %vm723, 1, 0
      %v725 = vadd.s32 %v715, %v719
      %v726 = vadd.s32 %v718, %v724
      %vm727 = vc.u32 %v725, %v721
      %v728 = vsel %vm727, 1, 0
      %v729 = vadd.s32 %v725, %v721
      %v730 = vadd.s32 %v726, %v728
      %v731 = vadd.s32 %v730, %v720
      %v732 = vadd.s32 %v731, %v722
      %v733 = vshrl.u32 %v732, 4
      %v734 = vmul.u32 %v733, 24
      %v735 = vsub.s32 %v711, %v734
      %v736 = vsub.s32 0, %v735
      %v737 = vsel %vm709, %v736, %v735
      %vm738 = vcmp.lt.s32.totalorder %v242, 0
      %v739 = vsub.s32 0, %v242
      %v740 = vsel %vm738, %v739, %v242
      %v741 = vand.u32 %v740, 65535
      %v742 = vshrl.u32 %v740, 16
      %v744 = vmul.u32 %v741, 43691
      %v745 = vmul.u32 %v741, 43690
      %v746 = vmul.u32 %v742, 43691
      %v747 = vmul.u32 %v742, 43690
      %v748 = vshll.u32 %v745, 16
      %v749 = vshrl.u32 %v745, 16
      %v750 = vshll.u32 %v746, 16
      %v751 = vshrl.u32 %v746, 16
      %vm752 = vc.u32 %v744, %v748
      %v753 = vsel %vm752, 1, 0
      %v754 = vadd.s32 %v744, %v748
      %v755 = vadd.s32 %v747, %v753
      %vm756 = vc.u32 %v754, %v750
      %v757 = vsel %vm756, 1, 0
      %v758 = vadd.s32 %v754, %v750
      %v759 = vadd.s32 %v755, %v757
      %v760 = vadd.s32 %v759, %v749
      %v761 = vadd.s32 %v760, %v751
      %v762 = vshrl.u32 %v761, 4
      %v763 = vmul.u32 %v762, 24
      %v764 = vsub.s32 %v740, %v763
      %v765 = vsub.s32 0, %v764
      %v766 = vsel %vm738, %v765, %v764
      %vm767 = vcmp.lt.s32.totalorder %v243, 0
      %v768 = vsub.s32 0, %v243
      %v769 = vsel %vm767, %v768, %v243
      %v770 = vand.u32 %v769, 65535
      %v771 = vshrl.u32 %v769, 16
      %v773 = vmul.u32 %v770, 43691
      %v774 = vmul.u32 %v770, 43690
      %v775 = vmul.u32 %v771, 43691
      %v776 = vmul.u32 %v771, 43690
      %v777 = vshll.u32 %v774, 16
      %v778 = vshrl.u32 %v774, 16
      %v779 = vshll.u32 %v775, 16
      %v780 = vshrl.u32 %v775, 16
      %vm781 = vc.u32 %v773, %v777
      %v782 = vsel %vm781, 1, 0
      %v783 = vadd.s32 %v773, %v777
      %v784 = vadd.s32 %v776, %v782
      %vm785 = vc.u32 %v783, %v779
      %v786 = vsel %vm785, 1, 0
      %v787 = vadd.s32 %v783, %v779
      %v788 = vadd.s32 %v784, %v786
      %v789 = vadd.s32 %v788, %v778
      %v790 = vadd.s32 %v789, %v780
      %v791 = vshrl.u32 %v790, 4
      %v792 = vmul.u32 %v791, 24
      %v793 = vsub.s32 %v769, %v792
      %v794 = vsub.s32 0, %v793
      %v795 = vsel %vm767, %v794, %v793
      %vm796 = vcmp.lt.s32.totalorder %v244, 0
      %v797 = vsub.s32 0, %v244
      %v798 = vsel %vm796, %v797, %v244
      %v799 = vand.u32 %v798, 65535
      %v800 = vshrl.u32 %v798, 16
      %v802 = vmul.u32 %v799, 43691
      %v803 = vmul.u32 %v799, 43690
      %v804 = vmul.u32 %v800, 43691
      %v805 = vmul.u32 %v800, 43690
      %v806 = vshll.u32 %v803, 16
      %v807 = vshrl.u32 %v803, 16
      %v808 = vshll.u32 %v804, 16
      %v809 = vshrl.u32 %v804, 16
      %vm810 = vc.u32 %v802, %v806
      %v811 = vsel %vm810, 1, 0
      %v812 = vadd.s32 %v802, %v806
      %v813 = vadd.s32 %v805, %v811
      %vm814 = vc.u32 %v812, %v808
      %v815 = vsel %vm814, 1, 0
      %v816 = vadd.s32 %v812, %v808
      %v817 = vadd.s32 %v813, %v815
      %v818 = vadd.s32 %v817, %v807
      %v819 = vadd.s32 %v818, %v809
      %v820 = vshrl.u32 %v819, 4
      %v821 = vmul.u32 %v820, 24
      %v822 = vsub.s32 %v798, %v821
      %v823 = vsub.s32 0, %v822
      %v824 = vsel %vm796, %v823, %v822
      %vm825 = vcmp.lt.s32.totalorder %v245, 0
      %v826 = vsub.s32 0, %v245
      %v827 = vsel %vm825, %v826, %v245
      %v828 = vand.u32 %v827, 65535
      %v829 = vshrl.u32 %v827, 16
      %v831 = vmul.u32 %v828, 43691
      %v832 = vmul.u32 %v828, 43690
      %v833 = vmul.u32 %v829, 43691
      %v834 = vmul.u32 %v829, 43690
      %v835 = vshll.u32 %v832, 16
      %v836 = vshrl.u32 %v832, 16
      %v837 = vshll.u32 %v833, 16
      %v838 = vshrl.u32 %v833, 16
      %vm839 = vc.u32 %v831, %v835
      %v840 = vsel %vm839, 1, 0
      %v841 = vadd.s32 %v831, %v835
      %v842 = vadd.s32 %v834, %v840
      %vm843 = vc.u32 %v841, %v837
      %v844 = vsel %vm843, 1, 0
      %v845 = vadd.s32 %v841, %v837
      %v846 = vadd.s32 %v842, %v844
      %v847 = vadd.s32 %v846, %v836
      %v848 = vadd.s32 %v847, %v838
      %v849 = vshrl.u32 %v848, 4
      %v850 = vmul.u32 %v849, 24
      %v851 = vsub.s32 %v827, %v850
      %v852 = vsub.s32 0, %v851
      %v853 = vsel %vm825, %v852, %v851
      %vm854 = vcmp.lt.s32.totalorder %v246, 0
      %v855 = vsub.s32 0, %v246
      %v856 = vsel %vm854, %v855, %v246
      %v857 = vand.u32 %v856, 65535
      %v858 = vshrl.u32 %v856, 16
      %v860 = vmul.u32 %v857, 43691
      %v861 = vmul.u32 %v857, 43690
      %v862 = vmul.u32 %v858, 43691
      %v863 = vmul.u32 %v858, 43690
      %v864 = vshll.u32 %v861, 16
      %v865 = vshrl.u32 %v861, 16
      %v866 = vshll.u32 %v862, 16
      %v867 = vshrl.u32 %v862, 16
      %vm868 = vc.u32 %v860, %v864
      %v869 = vsel %vm868, 1, 0
      %v870 = vadd.s32 %v860, %v864
      %v871 = vadd.s32 %v863, %v869
      %vm872 = vc.u32 %v870, %v866
      %v873 = vsel %vm872, 1, 0
      %v874 = vadd.s32 %v870, %v866
      %v875 = vadd.s32 %v871, %v873
      %v876 = vadd.s32 %v875, %v865
      %v877 = vadd.s32 %v876, %v867
      %v878 = vshrl.u32 %v877, 4
      %v879 = vmul.u32 %v878, 24
      %v880 = vsub.s32 %v856, %v879
      %v881 = vsub.s32 0, %v880
      %v882 = vsel %vm854, %v881, %v880
      %vm883 = vcmp.lt.s32.totalorder %v247, 0
      %v884 = vsub.s32 0, %v247
      %v885 = vsel %vm883, %v884, %v247
      %v886 = vand.u32 %v885, 65535
      %v887 = vshrl.u32 %v885, 16
      %v889 = vmul.u32 %v886, 43691
      %v890 = vmul.u32 %v886, 43690
      %v891 = vmul.u32 %v887, 43691
      %v892 = vmul.u32 %v887, 43690
      %v893 = vshll.u32 %v890, 16
      %v894 = vshrl.u32 %v890, 16
      %v895 = vshll.u32 %v891, 16
      %v896 = vshrl.u32 %v891, 16
      %vm897 = vc.u32 %v889, %v893
      %v898 = vsel %vm897, 1, 0
      %v899 = vadd.s32 %v889, %v893
      %v900 = vadd.s32 %v892, %v898
      %vm901 = vc.u32 %v899, %v895
      %v902 = vsel %vm901, 1, 0
      %v903 = vadd.s32 %v899, %v895
      %v904 = vadd.s32 %v900, %v902
      %v905 = vadd.s32 %v904, %v894
      %v906 = vadd.s32 %v905, %v896
      %v907 = vshrl.u32 %v906, 4
      %v908 = vmul.u32 %v907, 24
      %v909 = vsub.s32 %v885, %v908
      %v910 = vsub.s32 0, %v909
      %v911 = vsel %vm883, %v910, %v909
      %vm912 = vcmp.lt.s32.totalorder %v248, 0
      %v913 = vsub.s32 0, %v248
      %v914 = vsel %vm912, %v913, %v248
      %v915 = vand.u32 %v914, 65535
      %v916 = vshrl.u32 %v914, 16
      %v918 = vmul.u32 %v915, 43691
      %v919 = vmul.u32 %v915, 43690
      %v920 = vmul.u32 %v916, 43691
      %v921 = vmul.u32 %v916, 43690
      %v922 = vshll.u32 %v919, 16
      %v923 = vshrl.u32 %v919, 16
      %v924 = vshll.u32 %v920, 16
      %v925 = vshrl.u32 %v920, 16
      %vm926 = vc.u32 %v918, %v922
      %v927 = vsel %vm926, 1, 0
      %v928 = vadd.s32 %v918, %v922
      %v929 = vadd.s32 %v921, %v927
      %vm930 = vc.u32 %v928, %v924
      %v931 = vsel %vm930, 1, 0
      %v932 = vadd.s32 %v928, %v924
      %v933 = vadd.s32 %v929, %v931
      %v934 = vadd.s32 %v933, %v923
      %v935 = vadd.s32 %v934, %v925
      %v936 = vshrl.u32 %v935, 4
      %v937 = vmul.u32 %v936, 24
      %v938 = vsub.s32 %v914, %v937
      %v939 = vsub.s32 0, %v938
      %v940 = vsel %vm912, %v939, %v938
      %vm941 = vcmp.lt.s32.totalorder %v249, 0
      %v942 = vsub.s32 0, %v249
      %v943 = vsel %vm941, %v942, %v249
      %v944 = vand.u32 %v943, 65535
      %v945 = vshrl.u32 %v943, 16
      %v947 = vmul.u32 %v944, 43691
      %v948 = vmul.u32 %v944, 43690
      %v949 = vmul.u32 %v945, 43691
      %v950 = vmul.u32 %v945, 43690
      %v951 = vshll.u32 %v948, 16
      %v952 = vshrl.u32 %v948, 16
      %v953 = vshll.u32 %v949, 16
      %v954 = vshrl.u32 %v949, 16
      %vm955 = vc.u32 %v947, %v951
      %v956 = vsel %vm955, 1, 0
      %v957 = vadd.s32 %v947, %v951
      %v958 = vadd.s32 %v950, %v956
      %vm959 = vc.u32 %v957, %v953
      %v960 = vsel %vm959, 1, 0
      %v961 = vadd.s32 %v957, %v953
      %v962 = vadd.s32 %v958, %v960
      %v963 = vadd.s32 %v962, %v952
      %v964 = vadd.s32 %v963, %v954
      %v965 = vshrl.u32 %v964, 4
      %v966 = vmul.u32 %v965, 24
      %v967 = vsub.s32 %v943, %v966
      %v968 = vsub.s32 0, %v967
      %v969 = vsel %vm941, %v968, %v967
      %vm970 = vcmp.lt.s32.totalorder %v250, 0
      %v971 = vsub.s32 0, %v250
      %v972 = vsel %vm970, %v971, %v250
      %v973 = vand.u32 %v972, 65535
      %v974 = vshrl.u32 %v972, 16
      %v976 = vmul.u32 %v973, 43691
      %v977 = vmul.u32 %v973, 43690
      %v978 = vmul.u32 %v974, 43691
      %v979 = vmul.u32 %v974, 43690
      %v980 = vshll.u32 %v977, 16
      %v981 = vshrl.u32 %v977, 16
      %v982 = vshll.u32 %v978, 16
      %v983 = vshrl.u32 %v978, 16
      %vm984 = vc.u32 %v976, %v980
      %v985 = vsel %vm984, 1, 0
      %v986 = vadd.s32 %v976, %v980
      %v987 = vadd.s32 %v979, %v985
      %vm988 = vc.u32 %v986, %v982
      %v989 = vsel %vm988, 1, 0
      %v990 = vadd.s32 %v986, %v982
      %v991 = vadd.s32 %v987, %v989
      %v992 = vadd.s32 %v991, %v981
      %v993 = vadd.s32 %v992, %v983
      %v994 = vshrl.u32 %v993, 4
      %v995 = vmul.u32 %v994, 24
      %v996 = vsub.s32 %v972, %v995
      %v997 = vsub.s32 0, %v996
      %v998 = vsel %vm970, %v997, %v996
      %vm999 = vcmp.lt.s32.totalorder %v251, 0
      %v1000 = vsub.s32 0, %v251
      %v1001 = vsel %vm999, %v1000, %v251
      %v1002 = vand.u32 %v1001, 65535
      %v1003 = vshrl.u32 %v1001, 16
      %v1005 = vmul.u32 %v1002, 43691
      %v1006 = vmul.u32 %v1002, 43690
      %v1007 = vmul.u32 %v1003, 43691
      %v1008 = vmul.u32 %v1003, 43690
      %v1009 = vshll.u32 %v1006, 16
      %v1010 = vshrl.u32 %v1006, 16
      %v1011 = vshll.u32 %v1007, 16
      %v1012 = vshrl.u32 %v1007, 16
      %vm1013 = vc.u32 %v1005, %v1009
      %v1014 = vsel %vm1013, 1, 0
      %v1015 = vadd.s32 %v1005, %v1009
      %v1016 = vadd.s32 %v1008, %v1014
      %vm1017 = vc.u32 %v1015, %v1011
      %v1018 = vsel %vm1017, 1, 0
      %v1019 = vadd.s32 %v1015, %v1011
      %v1020 = vadd.s32 %v1016, %v1018
      %v1021 = vadd.s32 %v1020, %v1010
      %v1022 = vadd.s32 %v1021, %v1012
      %v1023 = vshrl.u32 %v1022, 4
      %v1024 = vmul.u32 %v1023, 24
      %v1025 = vsub.s32 %v1001, %v1024
      %v1026 = vsub.s32 0, %v1025
      %v1027 = vsel %vm999, %v1026, %v1025
      %vm1028 = vcmp.lt.s32.totalorder %v252, 0
      %v1029 = vsub.s32 0, %v252
      %v1030 = vsel %vm1028, %v1029, %v252
      %v1031 = vand.u32 %v1030, 65535
      %v1032 = vshrl.u32 %v1030, 16
      %v1034 = vmul.u32 %v1031, 43691
      %v1035 = vmul.u32 %v1031, 43690
      %v1036 = vmul.u32 %v1032, 43691
      %v1037 = vmul.u32 %v1032, 43690
      %v1038 = vshll.u32 %v1035, 16
      %v1039 = vshrl.u32 %v1035, 16
      %v1040 = vshll.u32 %v1036, 16
      %v1041 = vshrl.u32 %v1036, 16
      %vm1042 = vc.u32 %v1034, %v1038
      %v1043 = vsel %vm1042, 1, 0
      %v1044 = vadd.s32 %v1034, %v1038
      %v1045 = vadd.s32 %v1037, %v1043
      %vm1046 = vc.u32 %v1044, %v1040
      %v1047 = vsel %vm1046, 1, 0
      %v1048 = vadd.s32 %v1044, %v1040
      %v1049 = vadd.s32 %v1045, %v1047
      %v1050 = vadd.s32 %v1049, %v1039
      %v1051 = vadd.s32 %v1050, %v1041
      %v1052 = vshrl.u32 %v1051, 4
      %v1053 = vmul.u32 %v1052, 24
      %v1054 = vsub.s32 %v1030, %v1053
      %v1055 = vsub.s32 0, %v1054
      %v1056 = vsel %vm1028, %v1055, %v1054
      %vm1057 = vcmp.lt.s32.totalorder %v253, 0
      %v1058 = vsub.s32 0, %v253
      %v1059 = vsel %vm1057, %v1058, %v253
      %v1060 = vand.u32 %v1059, 65535
      %v1061 = vshrl.u32 %v1059, 16
      %v1063 = vmul.u32 %v1060, 43691
      %v1064 = vmul.u32 %v1060, 43690
      %v1065 = vmul.u32 %v1061, 43691
      %v1066 = vmul.u32 %v1061, 43690
      %v1067 = vshll.u32 %v1064, 16
      %v1068 = vshrl.u32 %v1064, 16
      %v1069 = vshll.u32 %v1065, 16
      %v1070 = vshrl.u32 %v1065, 16
      %vm1071 = vc.u32 %v1063, %v1067
      %v1072 = vsel %vm1071, 1, 0
      %v1073 = vadd.s32 %v1063, %v1067
      %v1074 = vadd.s32 %v1066, %v1072
      %vm1075 = vc.u32 %v1073, %v1069
      %v1076 = vsel %vm1075, 1, 0
      %v1077 = vadd.s32 %v1073, %v1069
      %v1078 = vadd.s32 %v1074, %v1076
      %v1079 = vadd.s32 %v1078, %v1068
      %v1080 = vadd.s32 %v1079, %v1070
      %v1081 = vshrl.u32 %v1080, 4
      %v1082 = vmul.u32 %v1081, 24
      %v1083 = vsub.s32 %v1059, %v1082
      %v1084 = vsub.s32 0, %v1083
      %v1085 = vsel %vm1057, %v1084, %v1083
      %vm1086 = vcmp.lt.s32.totalorder %v254, 0
      %v1087 = vsub.s32 0, %v254
      %v1088 = vsel %vm1086, %v1087, %v254
      %v1089 = vand.u32 %v1088, 65535
      %v1090 = vshrl.u32 %v1088, 16
      %v1092 = vmul.u32 %v1089, 43691
      %v1093 = vmul.u32 %v1089, 43690
      %v1094 = vmul.u32 %v1090, 43691
      %v1095 = vmul.u32 %v1090, 43690
      %v1096 = vshll.u32 %v1093, 16
      %v1097 = vshrl.u32 %v1093, 16
      %v1098 = vshll.u32 %v1094, 16
      %v1099 = vshrl.u32 %v1094, 16
      %vm1100 = vc.u32 %v1092, %v1096
      %v1101 = vsel %vm1100, 1, 0
      %v1102 = vadd.s32 %v1092, %v1096
      %v1103 = vadd.s32 %v1095, %v1101
      %vm1104 = vc.u32 %v1102, %v1098
      %v1105 = vsel %vm1104, 1, 0
      %v1106 = vadd.s32 %v1102, %v1098
      %v1107 = vadd.s32 %v1103, %v1105
      %v1108 = vadd.s32 %v1107, %v1097
      %v1109 = vadd.s32 %v1108, %v1099
      %v1110 = vshrl.u32 %v1109, 4
      %v1111 = vmul.u32 %v1110, 24
      %v1112 = vsub.s32 %v1088, %v1111
      %v1113 = vsub.s32 0, %v1112
      %v1114 = vsel %vm1086, %v1113, %v1112
      %vm1115 = vcmp.lt.s32.totalorder %v255, 0
      %v1116 = vsub.s32 0, %v255
      %v1117 = vsel %vm1115, %v1116, %v255
      %v1118 = vand.u32 %v1117, 65535
      %v1119 = vshrl.u32 %v1117, 16
      %v1121 = vmul.u32 %v1118, 43691
      %v1122 = vmul.u32 %v1118, 43690
      %v1123 = vmul.u32 %v1119, 43691
      %v1124 = vmul.u32 %v1119, 43690
      %v1125 = vshll.u32 %v1122, 16
      %v1126 = vshrl.u32 %v1122, 16
      %v1127 = vshll.u32 %v1123, 16
      %v1128 = vshrl.u32 %v1123, 16
      %vm1129 = vc.u32 %v1121, %v1125
      %v1130 = vsel %vm1129, 1, 0
      %v1131 = vadd.s32 %v1121, %v1125
      %v1132 = vadd.s32 %v1124, %v1130
      %vm1133 = vc.u32 %v1131, %v1127
      %v1134 = vsel %vm1133, 1, 0
      %v1135 = vadd.s32 %v1131, %v1127
      %v1136 = vadd.s32 %v1132, %v1134
      %v1137 = vadd.s32 %v1136, %v1126
      %v1138 = vadd.s32 %v1137, %v1128
      %v1139 = vshrl.u32 %v1138, 4
      %v1140 = vmul.u32 %v1139, 24
      %v1141 = vsub.s32 %v1117, %v1140
      %v1142 = vsub.s32 0, %v1141
      %v1143 = vsel %vm1115, %v1142, %v1141
      %vm1144 = vcmp.lt.s32.totalorder %v256, 0
      %v1145 = vsub.s32 0, %v256
      %v1146 = vsel %vm1144, %v1145, %v256
      %v1147 = vand.u32 %v1146, 65535
      %v1148 = vshrl.u32 %v1146, 16
      %v1150 = vmul.u32 %v1147, 43691
      %v1151 = vmul.u32 %v1147, 43690
      %v1152 = vmul.u32 %v1148, 43691
      %v1153 = vmul.u32 %v1148, 43690
      %v1154 = vshll.u32 %v1151, 16
      %v1155 = vshrl.u32 %v1151, 16
      %v1156 = vshll.u32 %v1152, 16
      %v1157 = vshrl.u32 %v1152, 16
      %vm1158 = vc.u32 %v1150, %v1154
      %v1159 = vsel %vm1158, 1, 0
      %v1160 = vadd.s32 %v1150, %v1154
      %v1161 = vadd.s32 %v1153, %v1159
      %vm1162 = vc.u32 %v1160, %v1156
      %v1163 = vsel %vm1162, 1, 0
      %v1164 = vadd.s32 %v1160, %v1156
      %v1165 = vadd.s32 %v1161, %v1163
      %v1166 = vadd.s32 %v1165, %v1155
      %v1167 = vadd.s32 %v1166, %v1157
      %v1168 = vshrl.u32 %v1167, 4
      %v1169 = vmul.u32 %v1168, 24
      %v1170 = vsub.s32 %v1146, %v1169
      %v1171 = vsub.s32 0, %v1170
      %v1172 = vsel %vm1144, %v1171, %v1170
      %vm1173 = vcmp.lt.s32.totalorder %v257, 0
      %v1174 = vsub.s32 0, %v257
      %v1175 = vsel %vm1173, %v1174, %v257
      %v1176 = vand.u32 %v1175, 65535
      %v1177 = vshrl.u32 %v1175, 16
      %v1179 = vmul.u32 %v1176, 43691
      %v1180 = vmul.u32 %v1176, 43690
      %v1181 = vmul.u32 %v1177, 43691
      %v1182 = vmul.u32 %v1177, 43690
      %v1183 = vshll.u32 %v1180, 16
      %v1184 = vshrl.u32 %v1180, 16
      %v1185 = vshll.u32 %v1181, 16
      %v1186 = vshrl.u32 %v1181, 16
      %vm1187 = vc.u32 %v1179, %v1183
      %v1188 = vsel %vm1187, 1, 0
      %v1189 = vadd.s32 %v1179, %v1183
      %v1190 = vadd.s32 %v1182, %v1188
      %vm1191 = vc.u32 %v1189, %v1185
      %v1192 = vsel %vm1191, 1, 0
      %v1193 = vadd.s32 %v1189, %v1185
      %v1194 = vadd.s32 %v1190, %v1192
      %v1195 = vadd.s32 %v1194, %v1184
      %v1196 = vadd.s32 %v1195, %v1186
      %v1197 = vshrl.u32 %v1196, 4
      %v1198 = vmul.u32 %v1197, 24
      %v1199 = vsub.s32 %v1175, %v1198
      %v1200 = vsub.s32 0, %v1199
      %v1201 = vsel %vm1173, %v1200, %v1199
      %vm1202 = vcmp.lt.s32.totalorder %v258, 0
      %v1203 = vsub.s32 0, %v258
      %v1204 = vsel %vm1202, %v1203, %v258
      %v1205 = vand.u32 %v1204, 65535
      %v1206 = vshrl.u32 %v1204, 16
      %v1208 = vmul.u32 %v1205, 43691
      %v1209 = vmul.u32 %v1205, 43690
      %v1210 = vmul.u32 %v1206, 43691
      %v1211 = vmul.u32 %v1206, 43690
      %v1212 = vshll.u32 %v1209, 16
      %v1213 = vshrl.u32 %v1209, 16
      %v1214 = vshll.u32 %v1210, 16
      %v1215 = vshrl.u32 %v1210, 16
      %vm1216 = vc.u32 %v1208, %v1212
      %v1217 = vsel %vm1216, 1, 0
      %v1218 = vadd.s32 %v1208, %v1212
      %v1219 = vadd.s32 %v1211, %v1217
      %vm1220 = vc.u32 %v1218, %v1214
      %v1221 = vsel %vm1220, 1, 0
      %v1222 = vadd.s32 %v1218, %v1214
      %v1223 = vadd.s32 %v1219, %v1221
      %v1224 = vadd.s32 %v1223, %v1213
      %v1225 = vadd.s32 %v1224, %v1215
      %v1226 = vshrl.u32 %v1225, 4
      %v1227 = vmul.u32 %v1226, 24
      %v1228 = vsub.s32 %v1204, %v1227
      %v1229 = vsub.s32 0, %v1228
      %v1230 = vsel %vm1202, %v1229, %v1228
      %vm1231 = vcmp.lt.s32.totalorder %v259, 0
      %v1232 = vsub.s32 0, %v259
      %v1233 = vsel %vm1231, %v1232, %v259
      %v1234 = vand.u32 %v1233, 65535
      %v1235 = vshrl.u32 %v1233, 16
      %v1237 = vmul.u32 %v1234, 43691
      %v1238 = vmul.u32 %v1234, 43690
      %v1239 = vmul.u32 %v1235, 43691
      %v1240 = vmul.u32 %v1235, 43690
      %v1241 = vshll.u32 %v1238, 16
      %v1242 = vshrl.u32 %v1238, 16
      %v1243 = vshll.u32 %v1239, 16
      %v1244 = vshrl.u32 %v1239, 16
      %vm1245 = vc.u32 %v1237, %v1241
      %v1246 = vsel %vm1245, 1, 0
      %v1247 = vadd.s32 %v1237, %v1241
      %v1248 = vadd.s32 %v1240, %v1246
      %vm1249 = vc.u32 %v1247, %v1243
      %v1250 = vsel %vm1249, 1, 0
      %v1251 = vadd.s32 %v1247, %v1243
      %v1252 = vadd.s32 %v1248, %v1250
      %v1253 = vadd.s32 %v1252, %v1242
      %v1254 = vadd.s32 %v1253, %v1244
      %v1255 = vshrl.u32 %v1254, 4
      %v1256 = vmul.u32 %v1255, 24
      %v1257 = vsub.s32 %v1233, %v1256
      %v1258 = vsub.s32 0, %v1257
      %v1259 = vsel %vm1231, %v1258, %v1257
      %vm1260 = vcmp.lt.s32.totalorder %v260, 0
      %v1261 = vsub.s32 0, %v260
      %v1262 = vsel %vm1260, %v1261, %v260
      %v1263 = vand.u32 %v1262, 65535
      %v1264 = vshrl.u32 %v1262, 16
      %v1266 = vmul.u32 %v1263, 43691
      %v1267 = vmul.u32 %v1263, 43690
      %v1268 = vmul.u32 %v1264, 43691
      %v1269 = vmul.u32 %v1264, 43690
      %v1270 = vshll.u32 %v1267, 16
      %v1271 = vshrl.u32 %v1267, 16
      %v1272 = vshll.u32 %v1268, 16
      %v1273 = vshrl.u32 %v1268, 16
      %vm1274 = vc.u32 %v1266, %v1270
      %v1275 = vsel %vm1274, 1, 0
      %v1276 = vadd.s32 %v1266, %v1270
      %v1277 = vadd.s32 %v1269, %v1275
      %vm1278 = vc.u32 %v1276, %v1272
      %v1279 = vsel %vm1278, 1, 0
      %v1280 = vadd.s32 %v1276, %v1272
      %v1281 = vadd.s32 %v1277, %v1279
      %v1282 = vadd.s32 %v1281, %v1271
      %v1283 = vadd.s32 %v1282, %v1273
      %v1284 = vshrl.u32 %v1283, 4
      %v1285 = vmul.u32 %v1284, 24
      %v1286 = vsub.s32 %v1262, %v1285
      %v1287 = vsub.s32 0, %v1286
      %v1288 = vsel %vm1260, %v1287, %v1286
      %vm1289 = vcmp.lt.s32.totalorder %v261, 0
      %v1290 = vsub.s32 0, %v261
      %v1291 = vsel %vm1289, %v1290, %v261
      %v1292 = vand.u32 %v1291, 65535
      %v1293 = vshrl.u32 %v1291, 16
      %v1295 = vmul.u32 %v1292, 43691
      %v1296 = vmul.u32 %v1292, 43690
      %v1297 = vmul.u32 %v1293, 43691
      %v1298 = vmul.u32 %v1293, 43690
      %v1299 = vshll.u32 %v1296, 16
      %v1300 = vshrl.u32 %v1296, 16
      %v1301 = vshll.u32 %v1297, 16
      %v1302 = vshrl.u32 %v1297, 16
      %vm1303 = vc.u32 %v1295, %v1299
      %v1304 = vsel %vm1303, 1, 0
      %v1305 = vadd.s32 %v1295, %v1299
      %v1306 = vadd.s32 %v1298, %v1304
      %vm1307 = vc.u32 %v1305, %v1301
      %v1308 = vsel %vm1307, 1, 0
      %v1309 = vadd.s32 %v1305, %v1301
      %v1310 = vadd.s32 %v1306, %v1308
      %v1311 = vadd.s32 %v1310, %v1300
      %v1312 = vadd.s32 %v1311, %v1302
      %v1313 = vshrl.u32 %v1312, 4
      %v1314 = vmul.u32 %v1313, 24
      %v1315 = vsub.s32 %v1291, %v1314
      %v1316 = vsub.s32 0, %v1315
      %v1317 = vsel %vm1289, %v1316, %v1315
      %vm1318 = vcmp.lt.s32.totalorder %v262, 0
      %v1319 = vsub.s32 0, %v262
      %v1320 = vsel %vm1318, %v1319, %v262
      %v1321 = vand.u32 %v1320, 65535
      %v1322 = vshrl.u32 %v1320, 16
      %v1324 = vmul.u32 %v1321, 43691
      %v1325 = vmul.u32 %v1321, 43690
      %v1326 = vmul.u32 %v1322, 43691
      %v1327 = vmul.u32 %v1322, 43690
      %v1328 = vshll.u32 %v1325, 16
      %v1329 = vshrl.u32 %v1325, 16
      %v1330 = vshll.u32 %v1326, 16
      %v1331 = vshrl.u32 %v1326, 16
      %vm1332 = vc.u32 %v1324, %v1328
      %v1333 = vsel %vm1332, 1, 0
      %v1334 = vadd.s32 %v1324, %v1328
      %v1335 = vadd.s32 %v1327, %v1333
      %vm1336 = vc.u32 %v1334, %v1330
      %v1337 = vsel %vm1336, 1, 0
      %v1338 = vadd.s32 %v1334, %v1330
      %v1339 = vadd.s32 %v1335, %v1337
      %v1340 = vadd.s32 %v1339, %v1329
      %v1341 = vadd.s32 %v1340, %v1331
      %v1342 = vshrl.u32 %v1341, 4
      %v1343 = vmul.u32 %v1342, 24
      %v1344 = vsub.s32 %v1320, %v1343
      %v1345 = vsub.s32 0, %v1344
      %v1346 = vsel %vm1318, %v1345, %v1344
      %vm1347 = vcmp.lt.s32.totalorder %v263, 0
      %v1348 = vsub.s32 0, %v263
      %v1349 = vsel %vm1347, %v1348, %v263
      %v1350 = vand.u32 %v1349, 65535
      %v1351 = vshrl.u32 %v1349, 16
      %v1353 = vmul.u32 %v1350, 43691
      %v1354 = vmul.u32 %v1350, 43690
      %v1355 = vmul.u32 %v1351, 43691
      %v1356 = vmul.u32 %v1351, 43690
      %v1357 = vshll.u32 %v1354, 16
      %v1358 = vshrl.u32 %v1354, 16
      %v1359 = vshll.u32 %v1355, 16
      %v1360 = vshrl.u32 %v1355, 16
      %vm1361 = vc.u32 %v1353, %v1357
      %v1362 = vsel %vm1361, 1, 0
      %v1363 = vadd.s32 %v1353, %v1357
      %v1364 = vadd.s32 %v1356, %v1362
      %vm1365 = vc.u32 %v1363, %v1359
      %v1366 = vsel %vm1365, 1, 0
      %v1367 = vadd.s32 %v1363, %v1359
      %v1368 = vadd.s32 %v1364, %v1366
      %v1369 = vadd.s32 %v1368, %v1358
      %v1370 = vadd.s32 %v1369, %v1360
      %v1371 = vshrl.u32 %v1370, 4
      %v1372 = vmul.u32 %v1371, 24
      %v1373 = vsub.s32 %v1349, %v1372
      %v1374 = vsub.s32 0, %v1373
      %v1375 = vsel %vm1347, %v1374, %v1373
      %vm1376 = vcmp.lt.s32.totalorder %v264, 0
      %v1377 = vsub.s32 0, %v264
      %v1378 = vsel %vm1376, %v1377, %v264
      %v1379 = vand.u32 %v1378, 65535
      %v1380 = vshrl.u32 %v1378, 16
      %v1382 = vmul.u32 %v1379, 43691
      %v1383 = vmul.u32 %v1379, 43690
      %v1384 = vmul.u32 %v1380, 43691
      %v1385 = vmul.u32 %v1380, 43690
      %v1386 = vshll.u32 %v1383, 16
      %v1387 = vshrl.u32 %v1383, 16
      %v1388 = vshll.u32 %v1384, 16
      %v1389 = vshrl.u32 %v1384, 16
      %vm1390 = vc.u32 %v1382, %v1386
      %v1391 = vsel %vm1390, 1, 0
      %v1392 = vadd.s32 %v1382, %v1386
      %v1393 = vadd.s32 %v1385, %v1391
      %vm1394 = vc.u32 %v1392, %v1388
      %v1395 = vsel %vm1394, 1, 0
      %v1396 = vadd.s32 %v1392, %v1388
      %v1397 = vadd.s32 %v1393, %v1395
      %v1398 = vadd.s32 %v1397, %v1387
      %v1399 = vadd.s32 %v1398, %v1389
      %v1400 = vshrl.u32 %v1399, 4
      %v1401 = vmul.u32 %v1400, 24
      %v1402 = vsub.s32 %v1378, %v1401
      %v1403 = vsub.s32 0, %v1402
      %v1404 = vsel %vm1376, %v1403, %v1402
      %vm1405 = vcmp.lt.s32.totalorder %v265, 0
      %v1406 = vsub.s32 0, %v265
      %v1407 = vsel %vm1405, %v1406, %v265
      %v1408 = vand.u32 %v1407, 65535
      %v1409 = vshrl.u32 %v1407, 16
      %v1411 = vmul.u32 %v1408, 43691
      %v1412 = vmul.u32 %v1408, 43690
      %v1413 = vmul.u32 %v1409, 43691
      %v1414 = vmul.u32 %v1409, 43690
      %v1415 = vshll.u32 %v1412, 16
      %v1416 = vshrl.u32 %v1412, 16
      %v1417 = vshll.u32 %v1413, 16
      %v1418 = vshrl.u32 %v1413, 16
      %vm1419 = vc.u32 %v1411, %v1415
      %v1420 = vsel %vm1419, 1, 0
      %v1421 = vadd.s32 %v1411, %v1415
      %v1422 = vadd.s32 %v1414, %v1420
      %vm1423 = vc.u32 %v1421, %v1417
      %v1424 = vsel %vm1423, 1, 0
      %v1425 = vadd.s32 %v1421, %v1417
      %v1426 = vadd.s32 %v1422, %v1424
      %v1427 = vadd.s32 %v1426, %v1416
      %v1428 = vadd.s32 %v1427, %v1418
      %v1429 = vshrl.u32 %v1428, 4
      %v1430 = vmul.u32 %v1429, 24
      %v1431 = vsub.s32 %v1407, %v1430
      %v1432 = vsub.s32 0, %v1431
      %v1433 = vsel %vm1405, %v1432, %v1431
      %vm1434 = vcmp.lt.s32.totalorder %v266, 0
      %v1435 = vsub.s32 0, %v266
      %v1436 = vsel %vm1434, %v1435, %v266
      %v1437 = vand.u32 %v1436, 65535
      %v1438 = vshrl.u32 %v1436, 16
      %v1440 = vmul.u32 %v1437, 43691
      %v1441 = vmul.u32 %v1437, 43690
      %v1442 = vmul.u32 %v1438, 43691
      %v1443 = vmul.u32 %v1438, 43690
      %v1444 = vshll.u32 %v1441, 16
      %v1445 = vshrl.u32 %v1441, 16
      %v1446 = vshll.u32 %v1442, 16
      %v1447 = vshrl.u32 %v1442, 16
      %vm1448 = vc.u32 %v1440, %v1444
      %v1449 = vsel %vm1448, 1, 0
      %v1450 = vadd.s32 %v1440, %v1444
      %v1451 = vadd.s32 %v1443, %v1449
      %vm1452 = vc.u32 %v1450, %v1446
      %v1453 = vsel %vm1452, 1, 0
      %v1454 = vadd.s32 %v1450, %v1446
      %v1455 = vadd.s32 %v1451, %v1453
      %v1456 = vadd.s32 %v1455, %v1445
      %v1457 = vadd.s32 %v1456, %v1447
      %v1458 = vshrl.u32 %v1457, 4
      %v1459 = vmul.u32 %v1458, 24
      %v1460 = vsub.s32 %v1436, %v1459
      %v1461 = vsub.s32 0, %v1460
      %v1462 = vsel %vm1434, %v1461, %v1460
      %vm1463 = vcmp.lt.s32.totalorder %v267, 0
      %v1464 = vsub.s32 0, %v267
      %v1465 = vsel %vm1463, %v1464, %v267
      %v1466 = vand.u32 %v1465, 65535
      %v1467 = vshrl.u32 %v1465, 16
      %v1469 = vmul.u32 %v1466, 43691
      %v1470 = vmul.u32 %v1466, 43690
      %v1471 = vmul.u32 %v1467, 43691
      %v1472 = vmul.u32 %v1467, 43690
      %v1473 = vshll.u32 %v1470, 16
      %v1474 = vshrl.u32 %v1470, 16
      %v1475 = vshll.u32 %v1471, 16
      %v1476 = vshrl.u32 %v1471, 16
      %vm1477 = vc.u32 %v1469, %v1473
      %v1478 = vsel %vm1477, 1, 0
      %v1479 = vadd.s32 %v1469, %v1473
      %v1480 = vadd.s32 %v1472, %v1478
      %vm1481 = vc.u32 %v1479, %v1475
      %v1482 = vsel %vm1481, 1, 0
      %v1483 = vadd.s32 %v1479, %v1475
      %v1484 = vadd.s32 %v1480, %v1482
      %v1485 = vadd.s32 %v1484, %v1474
      %v1486 = vadd.s32 %v1485, %v1476
      %v1487 = vshrl.u32 %v1486, 4
      %v1488 = vmul.u32 %v1487, 24
      %v1489 = vsub.s32 %v1465, %v1488
      %v1490 = vsub.s32 0, %v1489
      %v1491 = vsel %vm1463, %v1490, %v1489
      %vm1492 = vcmp.lt.s32.totalorder %v268, 0
      %v1493 = vsub.s32 0, %v268
      %v1494 = vsel %vm1492, %v1493, %v268
      %v1495 = vand.u32 %v1494, 65535
      %v1496 = vshrl.u32 %v1494, 16
      %v1498 = vmul.u32 %v1495, 43691
      %v1499 = vmul.u32 %v1495, 43690
      %v1500 = vmul.u32 %v1496, 43691
      %v1501 = vmul.u32 %v1496, 43690
      %v1502 = vshll.u32 %v1499, 16
      %v1503 = vshrl.u32 %v1499, 16
      %v1504 = vshll.u32 %v1500, 16
      %v1505 = vshrl.u32 %v1500, 16
      %vm1506 = vc.u32 %v1498, %v1502
      %v1507 = vsel %vm1506, 1, 0
      %v1508 = vadd.s32 %v1498, %v1502
      %v1509 = vadd.s32 %v1501, %v1507
      %vm1510 = vc.u32 %v1508, %v1504
      %v1511 = vsel %vm1510, 1, 0
      %v1512 = vadd.s32 %v1508, %v1504
      %v1513 = vadd.s32 %v1509, %v1511
      %v1514 = vadd.s32 %v1513, %v1503
      %v1515 = vadd.s32 %v1514, %v1505
      %v1516 = vshrl.u32 %v1515, 4
      %v1517 = vmul.u32 %v1516, 24
      %v1518 = vsub.s32 %v1494, %v1517
      %v1519 = vsub.s32 0, %v1518
      %v1520 = vsel %vm1492, %v1519, %v1518
      %vm1521 = vcmp.lt.s32.totalorder %v269, 0
      %v1522 = vsub.s32 0, %v269
      %v1523 = vsel %vm1521, %v1522, %v269
      %v1524 = vand.u32 %v1523, 65535
      %v1525 = vshrl.u32 %v1523, 16
      %v1527 = vmul.u32 %v1524, 43691
      %v1528 = vmul.u32 %v1524, 43690
      %v1529 = vmul.u32 %v1525, 43691
      %v1530 = vmul.u32 %v1525, 43690
      %v1531 = vshll.u32 %v1528, 16
      %v1532 = vshrl.u32 %v1528, 16
      %v1533 = vshll.u32 %v1529, 16
      %v1534 = vshrl.u32 %v1529, 16
      %vm1535 = vc.u32 %v1527, %v1531
      %v1536 = vsel %vm1535, 1, 0
      %v1537 = vadd.s32 %v1527, %v1531
      %v1538 = vadd.s32 %v1530, %v1536
      %vm1539 = vc.u32 %v1537, %v1533
      %v1540 = vsel %vm1539, 1, 0
      %v1541 = vadd.s32 %v1537, %v1533
      %v1542 = vadd.s32 %v1538, %v1540
      %v1543 = vadd.s32 %v1542, %v1532
      %v1544 = vadd.s32 %v1543, %v1534
      %v1545 = vshrl.u32 %v1544, 4
      %v1546 = vmul.u32 %v1545, 24
      %v1547 = vsub.s32 %v1523, %v1546
      %v1548 = vsub.s32 0, %v1547
      %v1549 = vsel %vm1521, %v1548, %v1547
      %vm1550 = vcmp.lt.s32.totalorder %v270, 0
      %v1551 = vsub.s32 0, %v270
      %v1552 = vsel %vm1550, %v1551, %v270
      %v1553 = vand.u32 %v1552, 65535
      %v1554 = vshrl.u32 %v1552, 16
      %v1556 = vmul.u32 %v1553, 43691
      %v1557 = vmul.u32 %v1553, 43690
      %v1558 = vmul.u32 %v1554, 43691
      %v1559 = vmul.u32 %v1554, 43690
      %v1560 = vshll.u32 %v1557, 16
      %v1561 = vshrl.u32 %v1557, 16
      %v1562 = vshll.u32 %v1558, 16
      %v1563 = vshrl.u32 %v1558, 16
      %vm1564 = vc.u32 %v1556, %v1560
      %v1565 = vsel %vm1564, 1, 0
      %v1566 = vadd.s32 %v1556, %v1560
      %v1567 = vadd.s32 %v1559, %v1565
      %vm1568 = vc.u32 %v1566, %v1562
      %v1569 = vsel %vm1568, 1, 0
      %v1570 = vadd.s32 %v1566, %v1562
      %v1571 = vadd.s32 %v1567, %v1569
      %v1572 = vadd.s32 %v1571, %v1561
      %v1573 = vadd.s32 %v1572, %v1563
      %v1574 = vshrl.u32 %v1573, 4
      %v1575 = vmul.u32 %v1574, 24
      %v1576 = vsub.s32 %v1552, %v1575
      %v1577 = vsub.s32 0, %v1576
      %v1578 = vsel %vm1550, %v1577, %v1576
      %vm1579 = vcmp.lt.s32.totalorder %v271, 0
      %v1580 = vsub.s32 0, %v271
      %v1581 = vsel %vm1579, %v1580, %v271
      %v1582 = vand.u32 %v1581, 65535
      %v1583 = vshrl.u32 %v1581, 16
      %v1585 = vmul.u32 %v1582, 43691
      %v1586 = vmul.u32 %v1582, 43690
      %v1587 = vmul.u32 %v1583, 43691
      %v1588 = vmul.u32 %v1583, 43690
      %v1589 = vshll.u32 %v1586, 16
      %v1590 = vshrl.u32 %v1586, 16
      %v1591 = vshll.u32 %v1587, 16
      %v1592 = vshrl.u32 %v1587, 16
      %vm1593 = vc.u32 %v1585, %v1589
      %v1594 = vsel %vm1593, 1, 0
      %v1595 = vadd.s32 %v1585, %v1589
      %v1596 = vadd.s32 %v1588, %v1594
      %vm1597 = vc.u32 %v1595, %v1591
      %v1598 = vsel %vm1597, 1, 0
      %v1599 = vadd.s32 %v1595, %v1591
      %v1600 = vadd.s32 %v1596, %v1598
      %v1601 = vadd.s32 %v1600, %v1590
      %v1602 = vadd.s32 %v1601, %v1592
      %v1603 = vshrl.u32 %v1602, 4
      %v1604 = vmul.u32 %v1603, 24
      %v1605 = vsub.s32 %v1581, %v1604
      %v1606 = vsub.s32 0, %v1605
      %v1607 = vsel %vm1579, %v1606, %v1605
      %vm1608 = vcmp.lt.s32.totalorder %v272, 0
      %v1609 = vsub.s32 0, %v272
      %v1610 = vsel %vm1608, %v1609, %v272
      %v1611 = vand.u32 %v1610, 65535
      %v1612 = vshrl.u32 %v1610, 16
      %v1614 = vmul.u32 %v1611, 43691
      %v1615 = vmul.u32 %v1611, 43690
      %v1616 = vmul.u32 %v1612, 43691
      %v1617 = vmul.u32 %v1612, 43690
      %v1618 = vshll.u32 %v1615, 16
      %v1619 = vshrl.u32 %v1615, 16
      %v1620 = vshll.u32 %v1616, 16
      %v1621 = vshrl.u32 %v1616, 16
      %vm1622 = vc.u32 %v1614, %v1618
      %v1623 = vsel %vm1622, 1, 0
      %v1624 = vadd.s32 %v1614, %v1618
      %v1625 = vadd.s32 %v1617, %v1623
      %vm1626 = vc.u32 %v1624, %v1620
      %v1627 = vsel %vm1626, 1, 0
      %v1628 = vadd.s32 %v1624, %v1620
      %v1629 = vadd.s32 %v1625, %v1627
      %v1630 = vadd.s32 %v1629, %v1619
      %v1631 = vadd.s32 %v1630, %v1621
      %v1632 = vshrl.u32 %v1631, 4
      %v1633 = vmul.u32 %v1632, 24
      %v1634 = vsub.s32 %v1610, %v1633
      %v1635 = vsub.s32 0, %v1634
      %v1636 = vsel %vm1608, %v1635, %v1634
      %vm1637 = vcmp.lt.s32.totalorder %v273, 0
      %v1638 = vsub.s32 0, %v273
      %v1639 = vsel %vm1637, %v1638, %v273
      %v1640 = vand.u32 %v1639, 65535
      %v1641 = vshrl.u32 %v1639, 16
      %v1643 = vmul.u32 %v1640, 43691
      %v1644 = vmul.u32 %v1640, 43690
      %v1645 = vmul.u32 %v1641, 43691
      %v1646 = vmul.u32 %v1641, 43690
      %v1647 = vshll.u32 %v1644, 16
      %v1648 = vshrl.u32 %v1644, 16
      %v1649 = vshll.u32 %v1645, 16
      %v1650 = vshrl.u32 %v1645, 16
      %vm1651 = vc.u32 %v1643, %v1647
      %v1652 = vsel %vm1651, 1, 0
      %v1653 = vadd.s32 %v1643, %v1647
      %v1654 = vadd.s32 %v1646, %v1652
      %vm1655 = vc.u32 %v1653, %v1649
      %v1656 = vsel %vm1655, 1, 0
      %v1657 = vadd.s32 %v1653, %v1649
      %v1658 = vadd.s32 %v1654, %v1656
      %v1659 = vadd.s32 %v1658, %v1648
      %v1660 = vadd.s32 %v1659, %v1650
      %v1661 = vshrl.u32 %v1660, 4
      %v1662 = vmul.u32 %v1661, 24
      %v1663 = vsub.s32 %v1639, %v1662
      %v1664 = vsub.s32 0, %v1663
      %v1665 = vsel %vm1637, %v1664, %v1663
      %vm1666 = vcmp.ne.s32.totalorder %v302, 0
      %vm1667 = vcmp.ne.s32.totalorder %v331, 0
      %vm1668 = vcmp.ne.s32.totalorder %v360, 0
      %vm1669 = vcmp.ne.s32.totalorder %v389, 0
      %vm1670 = vcmp.ne.s32.totalorder %v418, 0
      %vm1671 = vcmp.ne.s32.totalorder %v447, 0
      %vm1672 = vcmp.ne.s32.totalorder %v476, 0
      %vm1673 = vcmp.ne.s32.totalorder %v505, 0
      %vm1674 = vcmp.ne.s32.totalorder %v534, 0
      %vm1675 = vcmp.ne.s32.totalorder %v563, 0
      %vm1676 = vcmp.ne.s32.totalorder %v592, 0
      %vm1677 = vcmp.ne.s32.totalorder %v621, 0
      %vm1678 = vcmp.ne.s32.totalorder %v650, 0
      %vm1679 = vcmp.ne.s32.totalorder %v679, 0
      %vm1680 = vcmp.ne.s32.totalorder %v708, 0
      %vm1681 = vcmp.ne.s32.totalorder %v737, 0
      %vm1682 = vcmp.ne.s32.totalorder %v766, 0
      %vm1683 = vcmp.ne.s32.totalorder %v795, 0
      %vm1684 = vcmp.ne.s32.totalorder %v824, 0
      %vm1685 = vcmp.ne.s32.totalorder %v853, 0
      %vm1686 = vcmp.ne.s32.totalorder %v882, 0
      %vm1687 = vcmp.ne.s32.totalorder %v911, 0
      %vm1688 = vcmp.ne.s32.totalorder %v940, 0
      %vm1689 = vcmp.ne.s32.totalorder %v969, 0
      %vm1690 = vcmp.ne.s32.totalorder %v998, 0
      %vm1691 = vcmp.ne.s32.totalorder %v1027, 0
      %vm1692 = vcmp.ne.s32.totalorder %v1056, 0
      %vm1693 = vcmp.ne.s32.totalorder %v1085, 0
      %vm1694 = vcmp.ne.s32.totalorder %v1114, 0
      %vm1695 = vcmp.ne.s32.totalorder %v1143, 0
      %vm1696 = vcmp.ne.s32.totalorder %v1172, 0
      %vm1697 = vcmp.ne.s32.totalorder %v1201, 0
      %vm1698 = vcmp.ne.s32.totalorder %v1230, 0
      %vm1699 = vcmp.ne.s32.totalorder %v1259, 0
      %vm1700 = vcmp.ne.s32.totalorder %v1288, 0
      %vm1701 = vcmp.ne.s32.totalorder %v1317, 0
      %vm1702 = vcmp.ne.s32.totalorder %v1346, 0
      %vm1703 = vcmp.ne.s32.totalorder %v1375, 0
      %vm1704 = vcmp.ne.s32.totalorder %v1404, 0
      %vm1705 = vcmp.ne.s32.totalorder %v1433, 0
      %vm1706 = vcmp.ne.s32.totalorder %v1462, 0
      %vm1707 = vcmp.ne.s32.totalorder %v1491, 0
      %vm1708 = vcmp.ne.s32.totalorder %v1520, 0
      %vm1709 = vcmp.ne.s32.totalorder %v1549, 0
      %vm1710 = vcmp.ne.s32.totalorder %v1578, 0
      %vm1711 = vcmp.ne.s32.totalorder %v1607, 0
      %vm1712 = vcmp.ne.s32.totalorder %v1636, 0
      %vm1713 = vcmp.ne.s32.totalorder %v1665, 0
      %vm1714 = vcmp.lt.s32.totalorder %v302, 0
      %vm1715 = vcmp.lt.s32.totalorder %v331, 0
      %vm1716 = vcmp.lt.s32.totalorder %v360, 0
      %vm1717 = vcmp.lt.s32.totalorder %v389, 0
      %vm1718 = vcmp.lt.s32.totalorder %v418, 0
      %vm1719 = vcmp.lt.s32.totalorder %v447, 0
      %vm1720 = vcmp.lt.s32.totalorder %v476, 0
      %vm1721 = vcmp.lt.s32.totalorder %v505, 0
      %vm1722 = vcmp.lt.s32.totalorder %v534, 0
      %vm1723 = vcmp.lt.s32.totalorder %v563, 0
      %vm1724 = vcmp.lt.s32.totalorder %v592, 0
      %vm1725 = vcmp.lt.s32.totalorder %v621, 0
      %vm1726 = vcmp.lt.s32.totalorder %v650, 0
      %vm1727 = vcmp.lt.s32.totalorder %v679, 0
      %vm1728 = vcmp.lt.s32.totalorder %v708, 0
      %vm1729 = vcmp.lt.s32.totalorder %v737, 0
      %vm1730 = vcmp.lt.s32.totalorder %v766, 0
      %vm1731 = vcmp.lt.s32.totalorder %v795, 0
      %vm1732 = vcmp.lt.s32.totalorder %v824, 0
      %vm1733 = vcmp.lt.s32.totalorder %v853, 0
      %vm1734 = vcmp.lt.s32.totalorder %v882, 0
      %vm1735 = vcmp.lt.s32.totalorder %v911, 0
      %vm1736 = vcmp.lt.s32.totalorder %v940, 0
      %vm1737 = vcmp.lt.s32.totalorder %v969, 0
      %vm1738 = vcmp.lt.s32.totalorder %v998, 0
      %vm1739 = vcmp.lt.s32.totalorder %v1027, 0
      %vm1740 = vcmp.lt.s32.totalorder %v1056, 0
      %vm1741 = vcmp.lt.s32.totalorder %v1085, 0
      %vm1742 = vcmp.lt.s32.totalorder %v1114, 0
      %vm1743 = vcmp.lt.s32.totalorder %v1143, 0
      %vm1744 = vcmp.lt.s32.totalorder %v1172, 0
      %vm1745 = vcmp.lt.s32.totalorder %v1201, 0
      %vm1746 = vcmp.lt.s32.totalorder %v1230, 0
      %vm1747 = vcmp.lt.s32.totalorder %v1259, 0
      %vm1748 = vcmp.lt.s32.totalorder %v1288, 0
      %vm1749 = vcmp.lt.s32.totalorder %v1317, 0
      %vm1750 = vcmp.lt.s32.totalorder %v1346, 0
      %vm1751 = vcmp.lt.s32.totalorder %v1375, 0
      %vm1752 = vcmp.lt.s32.totalorder %v1404, 0
      %vm1753 = vcmp.lt.s32.totalorder %v1433, 0
      %vm1754 = vcmp.lt.s32.totalorder %v1462, 0
      %vm1755 = vcmp.lt.s32.totalorder %v1491, 0
      %vm1756 = vcmp.lt.s32.totalorder %v1520, 0
      %vm1757 = vcmp.lt.s32.totalorder %v1549, 0
      %vm1758 = vcmp.lt.s32.totalorder %v1578, 0
      %vm1759 = vcmp.lt.s32.totalorder %v1607, 0
      %vm1760 = vcmp.lt.s32.totalorder %v1636, 0
      %vm1761 = vcmp.lt.s32.totalorder %v1665, 0
      %vm1762 = vmand %vm1714, %vm1666
      %vm1763 = vmand %vm1715, %vm1667
      %vm1764 = vmand %vm1716, %vm1668
      %vm1765 = vmand %vm1717, %vm1669
      %vm1766 = vmand %vm1718, %vm1670
      %vm1767 = vmand %vm1719, %vm1671
      %vm1768 = vmand %vm1720, %vm1672
      %vm1769 = vmand %vm1721, %vm1673
      %vm1770 = vmand %vm1722, %vm1674
      %vm1771 = vmand %vm1723, %vm1675
      %vm1772 = vmand %vm1724, %vm1676
      %vm1773 = vmand %vm1725, %vm1677
      %vm1774 = vmand %vm1726, %vm1678
      %vm1775 = vmand %vm1727, %vm1679
      %vm1776 = vmand %vm1728, %vm1680
      %vm1777 = vmand %vm1729, %vm1681
      %vm1778 = vmand %vm1730, %vm1682
      %vm1779 = vmand %vm1731, %vm1683
      %vm1780 = vmand %vm1732, %vm1684
      %vm1781 = vmand %vm1733, %vm1685
      %vm1782 = vmand %vm1734, %vm1686
      %vm1783 = vmand %vm1735, %vm1687
      %vm1784 = vmand %vm1736, %vm1688
      %vm1785 = vmand %vm1737, %vm1689
      %vm1786 = vmand %vm1738, %vm1690
      %vm1787 = vmand %vm1739, %vm1691
      %vm1788 = vmand %vm1740, %vm1692
      %vm1789 = vmand %vm1741, %vm1693
      %vm1790 = vmand %vm1742, %vm1694
      %vm1791 = vmand %vm1743, %vm1695
      %vm1792 = vmand %vm1744, %vm1696
      %vm1793 = vmand %vm1745, %vm1697
      %vm1794 = vmand %vm1746, %vm1698
      %vm1795 = vmand %vm1747, %vm1699
      %vm1796 = vmand %vm1748, %vm1700
      %vm1797 = vmand %vm1749, %vm1701
      %vm1798 = vmand %vm1750, %vm1702
      %vm1799 = vmand %vm1751, %vm1703
      %vm1800 = vmand %vm1752, %vm1704
      %vm1801 = vmand %vm1753, %vm1705
      %vm1802 = vmand %vm1754, %vm1706
      %vm1803 = vmand %vm1755, %vm1707
      %vm1804 = vmand %vm1756, %vm1708
      %vm1805 = vmand %vm1757, %vm1709
      %vm1806 = vmand %vm1758, %vm1710
      %vm1807 = vmand %vm1759, %vm1711
      %vm1808 = vmand %vm1760, %vm1712
      %vm1809 = vmand %vm1761, %vm1713
      %v1810 = vadd.s32 %v302, 24
      %v1811 = vadd.s32 %v331, 24
      %v1812 = vadd.s32 %v360, 24
      %v1813 = vadd.s32 %v389, 24
      %v1814 = vadd.s32 %v418, 24
      %v1815 = vadd.s32 %v447, 24
      %v1816 = vadd.s32 %v476, 24
      %v1817 = vadd.s32 %v505, 24
      %v1818 = vadd.s32 %v534, 24
      %v1819 = vadd.s32 %v563, 24
      %v1820 = vadd.s32 %v592, 24
      %v1821 = vadd.s32 %v621, 24
      %v1822 = vadd.s32 %v650, 24
      %v1823 = vadd.s32 %v679, 24
      %v1824 = vadd.s32 %v708, 24
      %v1825 = vadd.s32 %v737, 24
      %v1826 = vadd.s32 %v766, 24
      %v1827 = vadd.s32 %v795, 24
      %v1828 = vadd.s32 %v824, 24
      %v1829 = vadd.s32 %v853, 24
      %v1830 = vadd.s32 %v882, 24
      %v1831 = vadd.s32 %v911, 24
      %v1832 = vadd.s32 %v940, 24
      %v1833 = vadd.s32 %v969, 24
      %v1834 = vadd.s32 %v998, 24
      %v1835 = vadd.s32 %v1027, 24
      %v1836 = vadd.s32 %v1056, 24
      %v1837 = vadd.s32 %v1085, 24
      %v1838 = vadd.s32 %v1114, 24
      %v1839 = vadd.s32 %v1143, 24
      %v1840 = vadd.s32 %v1172, 24
      %v1841 = vadd.s32 %v1201, 24
      %v1842 = vadd.s32 %v1230, 24
      %v1843 = vadd.s32 %v1259, 24
      %v1844 = vadd.s32 %v1288, 24
      %v1845 = vadd.s32 %v1317, 24
      %v1846 = vadd.s32 %v1346, 24
      %v1847 = vadd.s32 %v1375, 24
      %v1848 = vadd.s32 %v1404, 24
      %v1849 = vadd.s32 %v1433, 24
      %v1850 = vadd.s32 %v1462, 24
      %v1851 = vadd.s32 %v1491, 24
      %v1852 = vadd.s32 %v1520, 24
      %v1853 = vadd.s32 %v1549, 24
      %v1854 = vadd.s32 %v1578, 24
      %v1855 = vadd.s32 %v1607, 24
      %v1856 = vadd.s32 %v1636, 24
      %v1857 = vadd.s32 %v1665, 24
      %v1858 = vsel %vm1762, %v1810, %v302
      %v1859 = vsel %vm1763, %v1811, %v331
      %v1860 = vsel %vm1764, %v1812, %v360
      %v1861 = vsel %vm1765, %v1813, %v389
      %v1862 = vsel %vm1766, %v1814, %v418
      %v1863 = vsel %vm1767, %v1815, %v447
      %v1864 = vsel %vm1768, %v1816, %v476
      %v1865 = vsel %vm1769, %v1817, %v505
      %v1866 = vsel %vm1770, %v1818, %v534
      %v1867 = vsel %vm1771, %v1819, %v563
      %v1868 = vsel %vm1772, %v1820, %v592
      %v1869 = vsel %vm1773, %v1821, %v621
      %v1870 = vsel %vm1774, %v1822, %v650
      %v1871 = vsel %vm1775, %v1823, %v679
      %v1872 = vsel %vm1776, %v1824, %v708
      %v1873 = vsel %vm1777, %v1825, %v737
      %v1874 = vsel %vm1778, %v1826, %v766
      %v1875 = vsel %vm1779, %v1827, %v795
      %v1876 = vsel %vm1780, %v1828, %v824
      %v1877 = vsel %vm1781, %v1829, %v853
      %v1878 = vsel %vm1782, %v1830, %v882
      %v1879 = vsel %vm1783, %v1831, %v911
      %v1880 = vsel %vm1784, %v1832, %v940
      %v1881 = vsel %vm1785, %v1833, %v969
      %v1882 = vsel %vm1786, %v1834, %v998
      %v1883 = vsel %vm1787, %v1835, %v1027
      %v1884 = vsel %vm1788, %v1836, %v1056
      %v1885 = vsel %vm1789, %v1837, %v1085
      %v1886 = vsel %vm1790, %v1838, %v1114
      %v1887 = vsel %vm1791, %v1839, %v1143
      %v1888 = vsel %vm1792, %v1840, %v1172
      %v1889 = vsel %vm1793, %v1841, %v1201
      %v1890 = vsel %vm1794, %v1842, %v1230
      %v1891 = vsel %vm1795, %v1843, %v1259
      %v1892 = vsel %vm1796, %v1844, %v1288
      %v1893 = vsel %vm1797, %v1845, %v1317
      %v1894 = vsel %vm1798, %v1846, %v1346
      %v1895 = vsel %vm1799, %v1847, %v1375
      %v1896 = vsel %vm1800, %v1848, %v1404
      %v1897 = vsel %vm1801, %v1849, %v1433
      %v1898 = vsel %vm1802, %v1850, %v1462
      %v1899 = vsel %vm1803, %v1851, %v1491
      %v1900 = vsel %vm1804, %v1852, %v1520
      %v1901 = vsel %vm1805, %v1853, %v1549
      %v1902 = vsel %vm1806, %v1854, %v1578
      %v1903 = vsel %vm1807, %v1855, %v1607
      %v1904 = vsel %vm1808, %v1856, %v1636
      %v1905 = vsel %vm1809, %v1857, %v1665
      %vm1906 = vcmp.lt.s32.totalorder %v1858, 16
      %vm1907 = vcmp.lt.s32.totalorder %v1859, 16
      %vm1908 = vcmp.lt.s32.totalorder %v1860, 16
      %vm1909 = vcmp.lt.s32.totalorder %v1861, 16
      %vm1910 = vcmp.lt.s32.totalorder %v1862, 16
      %vm1911 = vcmp.lt.s32.totalorder %v1863, 16
      %vm1912 = vcmp.lt.s32.totalorder %v1864, 16
      %vm1913 = vcmp.lt.s32.totalorder %v1865, 16
      %vm1914 = vcmp.lt.s32.totalorder %v1866, 16
      %vm1915 = vcmp.lt.s32.totalorder %v1867, 16
      %vm1916 = vcmp.lt.s32.totalorder %v1868, 16
      %vm1917 = vcmp.lt.s32.totalorder %v1869, 16
      %vm1918 = vcmp.lt.s32.totalorder %v1870, 16
      %vm1919 = vcmp.lt.s32.totalorder %v1871, 16
      %vm1920 = vcmp.lt.s32.totalorder %v1872, 16
      %vm1921 = vcmp.lt.s32.totalorder %v1873, 16
      %vm1922 = vcmp.lt.s32.totalorder %v1874, 16
      %vm1923 = vcmp.lt.s32.totalorder %v1875, 16
      %vm1924 = vcmp.lt.s32.totalorder %v1876, 16
      %vm1925 = vcmp.lt.s32.totalorder %v1877, 16
      %vm1926 = vcmp.lt.s32.totalorder %v1878, 16
      %vm1927 = vcmp.lt.s32.totalorder %v1879, 16
      %vm1928 = vcmp.lt.s32.totalorder %v1880, 16
      %vm1929 = vcmp.lt.s32.totalorder %v1881, 16
      %vm1930 = vcmp.lt.s32.totalorder %v1882, 16
      %vm1931 = vcmp.lt.s32.totalorder %v1883, 16
      %vm1932 = vcmp.lt.s32.totalorder %v1884, 16
      %vm1933 = vcmp.lt.s32.totalorder %v1885, 16
      %vm1934 = vcmp.lt.s32.totalorder %v1886, 16
      %vm1935 = vcmp.lt.s32.totalorder %v1887, 16
      %vm1936 = vcmp.lt.s32.totalorder %v1888, 16
      %vm1937 = vcmp.lt.s32.totalorder %v1889, 16
      %vm1938 = vcmp.lt.s32.totalorder %v1890, 16
      %vm1939 = vcmp.lt.s32.totalorder %v1891, 16
      %vm1940 = vcmp.lt.s32.totalorder %v1892, 16
      %vm1941 = vcmp.lt.s32.totalorder %v1893, 16
      %vm1942 = vcmp.lt.s32.totalorder %v1894, 16
      %vm1943 = vcmp.lt.s32.totalorder %v1895, 16
      %vm1944 = vcmp.lt.s32.totalorder %v1896, 16
      %vm1945 = vcmp.lt.s32.totalorder %v1897, 16
      %vm1946 = vcmp.lt.s32.totalorder %v1898, 16
      %vm1947 = vcmp.lt.s32.totalorder %v1899, 16
      %vm1948 = vcmp.lt.s32.totalorder %v1900, 16
      %vm1949 = vcmp.lt.s32.totalorder %v1901, 16
      %vm1950 = vcmp.lt.s32.totalorder %v1902, 16
      %vm1951 = vcmp.lt.s32.totalorder %v1903, 16
      %vm1952 = vcmp.lt.s32.totalorder %v1904, 16
      %vm1953 = vcmp.lt.s32.totalorder %v1905, 16
      %v1954 = vsel %vm1906, 1, 0
      %v1955 = vsel %vm1907, 1, 0
      %v1956 = vsel %vm1908, 1, 0
      %v1957 = vsel %vm1909, 1, 0
      %v1958 = vsel %vm1910, 1, 0
      %v1959 = vsel %vm1911, 1, 0
      %v1960 = vsel %vm1912, 1, 0
      %v1961 = vsel %vm1913, 1, 0
      %v1962 = vsel %vm1914, 1, 0
      %v1963 = vsel %vm1915, 1, 0
      %v1964 = vsel %vm1916, 1, 0
      %v1965 = vsel %vm1917, 1, 0
      %v1966 = vsel %vm1918, 1, 0
      %v1967 = vsel %vm1919, 1, 0
      %v1968 = vsel %vm1920, 1, 0
      %v1969 = vsel %vm1921, 1, 0
      %v1970 = vsel %vm1922, 1, 0
      %v1971 = vsel %vm1923, 1, 0
      %v1972 = vsel %vm1924, 1, 0
      %v1973 = vsel %vm1925, 1, 0
      %v1974 = vsel %vm1926, 1, 0
      %v1975 = vsel %vm1927, 1, 0
      %v1976 = vsel %vm1928, 1, 0
      %v1977 = vsel %vm1929, 1, 0
      %v1978 = vsel %vm1930, 1, 0
      %v1979 = vsel %vm1931, 1, 0
      %v1980 = vsel %vm1932, 1, 0
      %v1981 = vsel %vm1933, 1, 0
      %v1982 = vsel %vm1934, 1, 0
      %v1983 = vsel %vm1935, 1, 0
      %v1984 = vsel %vm1936, 1, 0
      %v1985 = vsel %vm1937, 1, 0
      %v1986 = vsel %vm1938, 1, 0
      %v1987 = vsel %vm1939, 1, 0
      %v1988 = vsel %vm1940, 1, 0
      %v1989 = vsel %vm1941, 1, 0
      %v1990 = vsel %vm1942, 1, 0
      %v1991 = vsel %vm1943, 1, 0
      %v1992 = vsel %vm1944, 1, 0
      %v1993 = vsel %vm1945, 1, 0
      %v1994 = vsel %vm1946, 1, 0
      %v1995 = vsel %vm1947, 1, 0
      %v1996 = vsel %vm1948, 1, 0
      %v1997 = vsel %vm1949, 1, 0
      %v1998 = vsel %vm1950, 1, 0
      %v1999 = vsel %vm1951, 1, 0
      %v2000 = vsel %vm1952, 1, 0
      %v2001 = vsel %vm1953, 1, 0
      %v2002 = vcvt.s32.f32 %v1954
      %v2003 = vcvt.s32.f32 %v1955
      %v2004 = vcvt.s32.f32 %v1956
      %v2005 = vcvt.s32.f32 %v1957
      %v2006 = vcvt.s32.f32 %v1958
      %v2007 = vcvt.s32.f32 %v1959
      %v2008 = vcvt.s32.f32 %v1960
      %v2009 = vcvt.s32.f32 %v1961
      %v2010 = vcvt.s32.f32 %v1962
      %v2011 = vcvt.s32.f32 %v1963
      %v2012 = vcvt.s32.f32 %v1964
      %v2013 = vcvt.s32.f32 %v1965
      %v2014 = vcvt.s32.f32 %v1966
      %v2015 = vcvt.s32.f32 %v1967
      %v2016 = vcvt.s32.f32 %v1968
      %v2017 = vcvt.s32.f32 %v1969
      %v2018 = vcvt.s32.f32 %v1970
      %v2019 = vcvt.s32.f32 %v1971
      %v2020 = vcvt.s32.f32 %v1972
      %v2021 = vcvt.s32.f32 %v1973
      %v2022 = vcvt.s32.f32 %v1974
      %v2023 = vcvt.s32.f32 %v1975
      %v2024 = vcvt.s32.f32 %v1976
      %v2025 = vcvt.s32.f32 %v1977
      %v2026 = vcvt.s32.f32 %v1978
      %v2027 = vcvt.s32.f32 %v1979
      %v2028 = vcvt.s32.f32 %v1980
      %v2029 = vcvt.s32.f32 %v1981
      %v2030 = vcvt.s32.f32 %v1982
      %v2031 = vcvt.s32.f32 %v1983
      %v2032 = vcvt.s32.f32 %v1984
      %v2033 = vcvt.s32.f32 %v1985
      %v2034 = vcvt.s32.f32 %v1986
      %v2035 = vcvt.s32.f32 %v1987
      %v2036 = vcvt.s32.f32 %v1988
      %v2037 = vcvt.s32.f32 %v1989
      %v2038 = vcvt.s32.f32 %v1990
      %v2039 = vcvt.s32.f32 %v1991
      %v2040 = vcvt.s32.f32 %v1992
      %v2041 = vcvt.s32.f32 %v1993
      %v2042 = vcvt.s32.f32 %v1994
      %v2043 = vcvt.s32.f32 %v1995
      %v2044 = vcvt.s32.f32 %v1996
      %v2045 = vcvt.s32.f32 %v1997
      %v2046 = vcvt.s32.f32 %v1998
      %v2047 = vcvt.s32.f32 %v1999
      %v2048 = vcvt.s32.f32 %v2000
      %v2049 = vcvt.s32.f32 %v2001
      %v2050 = vld [vmem:[%s207] sm:$0xf]
      %v2051 = vld [vmem:[%s207 + $0x4] sm:$0xf]
      %v2052 = vld [vmem:[%s207 + $0x8] sm:$0xf]
      %v2053 = vld [vmem:[%s207 + $0xc] sm:$0xf]
      %v2054 = vld [vmem:[%s207 + $0x10] sm:$0xf]
      %v2055 = vld [vmem:[%s207 + $0x14] sm:$0xf]
      %v2056 = vld [vmem:[%s207 + $0x18] sm:$0xf]
      %v2057 = vld [vmem:[%s207 + $0x1c] sm:$0xf]
      %v2058 = vld [vmem:[%s207 + $0x20] sm:$0xf]
      %v2059 = vld [vmem:[%s207 + $0x24] sm:$0xf]
      %v2060 = vld [vmem:[%s207 + $0x28] sm:$0xf]
      %v2061 = vld [vmem:[%s207 + $0x2c] sm:$0xf]
      %v2062 = vld [vmem:[%s207 + $0x30] sm:$0xf]
      %v2063 = vld [vmem:[%s207 + $0x34] sm:$0xf]
      %v2064 = vld [vmem:[%s207 + $0x38] sm:$0xf]
      %v2065 = vld [vmem:[%s207 + $0x3c] sm:$0xf]
      %v2066 = vld [vmem:[%s207 + $0x40] sm:$0xf]
      %v2067 = vld [vmem:[%s207 + $0x44] sm:$0xf]
      %v2068 = vld [vmem:[%s207 + $0x48] sm:$0xf]
      %v2069 = vld [vmem:[%s207 + $0x4c] sm:$0xf]
      %v2070 = vld [vmem:[%s207 + $0x50] sm:$0xf]
      %v2071 = vld [vmem:[%s207 + $0x54] sm:$0xf]
      %v2072 = vld [vmem:[%s207 + $0x58] sm:$0xf]
      %v2073 = vld [vmem:[%s207 + $0x5c] sm:$0xf]
      %v2074 = vld [vmem:[%s207 + $0x60] sm:$0xf]
      %v2075 = vld [vmem:[%s207 + $0x64] sm:$0xf]
      %v2076 = vld [vmem:[%s207 + $0x68] sm:$0xf]
      %v2077 = vld [vmem:[%s207 + $0x6c] sm:$0xf]
      %v2078 = vld [vmem:[%s207 + $0x70] sm:$0xf]
      %v2079 = vld [vmem:[%s207 + $0x74] sm:$0xf]
      %v2080 = vld [vmem:[%s207 + $0x78] sm:$0xf]
      %v2081 = vld [vmem:[%s207 + $0x7c] sm:$0xf]
      %v2082 = vld [vmem:[%s207 + $0x80] sm:$0xf]
      %v2083 = vld [vmem:[%s207 + $0x84] sm:$0xf]
      %v2084 = vld [vmem:[%s207 + $0x88] sm:$0xf]
      %v2085 = vld [vmem:[%s207 + $0x8c] sm:$0xf]
      %v2086 = vld [vmem:[%s207 + $0x90] sm:$0xf]
      %v2087 = vld [vmem:[%s207 + $0x94] sm:$0xf]
      %v2088 = vld [vmem:[%s207 + $0x98] sm:$0xf]
      %v2089 = vld [vmem:[%s207 + $0x9c] sm:$0xf]
      %v2090 = vld [vmem:[%s207 + $0xa0] sm:$0xf]
      %v2091 = vld [vmem:[%s207 + $0xa4] sm:$0xf]
      %v2092 = vld [vmem:[%s207 + $0xa8] sm:$0xf]
      %v2093 = vld [vmem:[%s207 + $0xac] sm:$0xf]
      %v2094 = vld [vmem:[%s207 + $0xb0] sm:$0xf]
      %v2095 = vld [vmem:[%s207 + $0xb4] sm:$0xf]
      %v2096 = vld [vmem:[%s207 + $0xb8] sm:$0xf]
      %v2097 = vld [vmem:[%s207 + $0xbc] sm:$0xf]
      %v2098 = vld [vmem:[%s1] sm:$0x3]
      %v2099 = vld [vmem:[%s207 + $0xc0] sm:$0x1]
      %s2100 = scalar_lea.vmem %s1, 2
      %v2101 = vld [vmem:[%s2100] sm:$0x3]
      %v2151 = vunpack.c.l.b16 %v2050
      %v2152 = vunpack.c.l.b16 %v2051
      %v2153 = vunpack.c.l.b16 %v2052
      %v2154 = vunpack.c.l.b16 %v2053
      %v2155 = vunpack.c.l.b16 %v2054
      %v2156 = vunpack.c.l.b16 %v2055
      %v2157 = vunpack.c.l.b16 %v2056
      %v2158 = vunpack.c.l.b16 %v2057
      %v2159 = vunpack.c.l.b16 %v2058
      %v2160 = vunpack.c.l.b16 %v2059
      %v2161 = vunpack.c.l.b16 %v2060
      %v2162 = vunpack.c.l.b16 %v2061
      %v2163 = vunpack.c.l.b16 %v2062
      %v2164 = vunpack.c.l.b16 %v2063
      %v2165 = vunpack.c.l.b16 %v2064
      %v2166 = vunpack.c.l.b16 %v2065
      %v2167 = vunpack.c.l.b16 %v2066
      %v2168 = vunpack.c.l.b16 %v2067
      %v2169 = vunpack.c.l.b16 %v2068
      %v2170 = vunpack.c.l.b16 %v2069
      %v2171 = vunpack.c.l.b16 %v2070
      %v2172 = vunpack.c.l.b16 %v2071
      %v2173 = vunpack.c.l.b16 %v2072
      %v2174 = vunpack.c.l.b16 %v2073
      %v2175 = vunpack.c.l.b16 %v2074
      %v2176 = vunpack.c.l.b16 %v2075
      %v2177 = vunpack.c.l.b16 %v2076
      %v2178 = vunpack.c.l.b16 %v2077
      %v2179 = vunpack.c.l.b16 %v2078
      %v2180 = vunpack.c.l.b16 %v2079
      %v2181 = vunpack.c.l.b16 %v2080
      %v2182 = vunpack.c.l.b16 %v2081
      %v2183 = vunpack.c.l.b16 %v2082
      %v2184 = vunpack.c.l.b16 %v2083
      %v2185 = vunpack.c.l.b16 %v2084
      %v2186 = vunpack.c.l.b16 %v2085
      %v2187 = vunpack.c.l.b16 %v2086
      %v2188 = vunpack.c.l.b16 %v2087
      %v2189 = vunpack.c.l.b16 %v2088
      %v2190 = vunpack.c.l.b16 %v2089
      %v2191 = vunpack.c.l.b16 %v2090
      %v2192 = vunpack.c.l.b16 %v2091
      %v2193 = vunpack.c.l.b16 %v2092
      %v2194 = vunpack.c.l.b16 %v2093
      %v2195 = vunpack.c.l.b16 %v2094
      %v2196 = vunpack.c.l.b16 %v2095
      %v2197 = vunpack.c.l.b16 %v2096
      %v2198 = vunpack.c.l.b16 %v2097
      %v2199 = vunpack.c.l.b16 %v2099
      %v2200 = vpack.c.b16 %v2152, %v2151
      %v2201 = vpack.c.b16 %v2154, %v2153
      %v2202 = vpack.c.b16 %v2156, %v2155
      %v2203 = vpack.c.b16 %v2158, %v2157
      %v2204 = vpack.c.b16 %v2160, %v2159
      %v2205 = vpack.c.b16 %v2162, %v2161
      %v2206 = vpack.c.b16 %v2164, %v2163
      %v2207 = vpack.c.b16 %v2166, %v2165
      %v2208 = vpack.c.b16 %v2168, %v2167
      %v2209 = vpack.c.b16 %v2170, %v2169
      %v2210 = vpack.c.b16 %v2172, %v2171
      %v2211 = vpack.c.b16 %v2174, %v2173
      %v2212 = vpack.c.b16 %v2176, %v2175
      %v2213 = vpack.c.b16 %v2178, %v2177
      %v2214 = vpack.c.b16 %v2180, %v2179
      %v2215 = vpack.c.b16 %v2182, %v2181
      %v2216 = vpack.c.b16 %v2184, %v2183
      %v2217 = vpack.c.b16 %v2186, %v2185
      %v2218 = vpack.c.b16 %v2188, %v2187
      %v2219 = vpack.c.b16 %v2190, %v2189
      %v2220 = vpack.c.b16 %v2192, %v2191
      %v2221 = vpack.c.b16 %v2194, %v2193
      %v2222 = vpack.c.b16 %v2196, %v2195
      %v2223 = vpack.c.b16 %v2198, %v2197
      %v2224 = vpack.c.b16 %v2199, %v2199
      %vm2225 = vsmask.f32 7424
      %v2227 = vshrl.u32 %v2200, 16
      %v2229 = vshll.u32 %v2200, 16
      %v2231 = vrot.slane %v2229, 1
      %v2232 = vor.u32 %v2227, %v2231
      %v2234 = vshll.u32 %v2201, 16
      %v2236 = vrot.slane %v2234, 1
      %v2237 = vsel %vm2225, %v2232, %v2236
      %v2238 = vshrl.u32 %v2201, 16
      %v2240 = vor.u32 %v2238, %v2236
      %v2242 = vshll.u32 %v2202, 16
      %v2244 = vrot.slane %v2242, 1
      %v2245 = vsel %vm2225, %v2240, %v2244
      %v2246 = vshrl.u32 %v2202, 16
      %v2248 = vor.u32 %v2246, %v2244
      %v2250 = vshll.u32 %v2203, 16
      %v2252 = vrot.slane %v2250, 1
      %v2253 = vsel %vm2225, %v2248, %v2252
      %v2254 = vshrl.u32 %v2203, 16
      %v2256 = vor.u32 %v2254, %v2252
      %v2258 = vshll.u32 %v2204, 16
      %v2260 = vrot.slane %v2258, 1
      %v2261 = vsel %vm2225, %v2256, %v2260
      %v2262 = vshrl.u32 %v2204, 16
      %v2264 = vor.u32 %v2262, %v2260
      %v2266 = vshll.u32 %v2205, 16
      %v2268 = vrot.slane %v2266, 1
      %v2269 = vsel %vm2225, %v2264, %v2268
      %v2270 = vshrl.u32 %v2205, 16
      %v2272 = vor.u32 %v2270, %v2268
      %v2274 = vshll.u32 %v2206, 16
      %v2276 = vrot.slane %v2274, 1
      %v2277 = vsel %vm2225, %v2272, %v2276
      %v2278 = vshrl.u32 %v2206, 16
      %v2280 = vor.u32 %v2278, %v2276
      %v2282 = vshll.u32 %v2207, 16
      %v2284 = vrot.slane %v2282, 1
      %v2285 = vsel %vm2225, %v2280, %v2284
      %v2286 = vshrl.u32 %v2207, 16
      %v2288 = vor.u32 %v2286, %v2284
      %v2290 = vshll.u32 %v2208, 16
      %v2292 = vrot.slane %v2290, 1
      %v2293 = vsel %vm2225, %v2288, %v2292
      %v2294 = vshrl.u32 %v2208, 16
      %v2296 = vor.u32 %v2294, %v2292
      %v2298 = vshll.u32 %v2209, 16
      %v2300 = vrot.slane %v2298, 1
      %v2301 = vsel %vm2225, %v2296, %v2300
      %v2302 = vshrl.u32 %v2209, 16
      %v2304 = vor.u32 %v2302, %v2300
      %v2306 = vshll.u32 %v2210, 16
      %v2308 = vrot.slane %v2306, 1
      %v2309 = vsel %vm2225, %v2304, %v2308
      %v2310 = vshrl.u32 %v2210, 16
      %v2312 = vor.u32 %v2310, %v2308
      %v2314 = vshll.u32 %v2211, 16
      %v2316 = vrot.slane %v2314, 1
      %v2317 = vsel %vm2225, %v2312, %v2316
      %v2318 = vshrl.u32 %v2211, 16
      %v2320 = vor.u32 %v2318, %v2316
      %v2322 = vshll.u32 %v2212, 16
      %v2324 = vrot.slane %v2322, 1
      %v2325 = vsel %vm2225, %v2320, %v2324
      %v2326 = vshrl.u32 %v2212, 16
      %v2328 = vor.u32 %v2326, %v2324
      %v2330 = vshll.u32 %v2213, 16
      %v2332 = vrot.slane %v2330, 1
      %v2333 = vsel %vm2225, %v2328, %v2332
      %v2334 = vshrl.u32 %v2213, 16
      %v2336 = vor.u32 %v2334, %v2332
      %v2338 = vshll.u32 %v2214, 16
      %v2340 = vrot.slane %v2338, 1
      %v2341 = vsel %vm2225, %v2336, %v2340
      %v2342 = vshrl.u32 %v2214, 16
      %v2344 = vor.u32 %v2342, %v2340
      %v2346 = vshll.u32 %v2215, 16
      %v2348 = vrot.slane %v2346, 1
      %v2349 = vsel %vm2225, %v2344, %v2348
      %v2350 = vshrl.u32 %v2215, 16
      %v2352 = vor.u32 %v2350, %v2348
      %v2354 = vshll.u32 %v2216, 16
      %v2356 = vrot.slane %v2354, 1
      %v2357 = vsel %vm2225, %v2352, %v2356
      %v2358 = vshrl.u32 %v2216, 16
      %v2360 = vor.u32 %v2358, %v2356
      %v2362 = vshll.u32 %v2217, 16
      %v2364 = vrot.slane %v2362, 1
      %v2365 = vsel %vm2225, %v2360, %v2364
      %v2366 = vshrl.u32 %v2217, 16
      %v2368 = vor.u32 %v2366, %v2364
      %v2370 = vshll.u32 %v2218, 16
      %v2372 = vrot.slane %v2370, 1
      %v2373 = vsel %vm2225, %v2368, %v2372
      %v2374 = vshrl.u32 %v2218, 16
      %v2376 = vor.u32 %v2374, %v2372
      %v2378 = vshll.u32 %v2219, 16
      %v2380 = vrot.slane %v2378, 1
      %v2381 = vsel %vm2225, %v2376, %v2380
      %v2382 = vshrl.u32 %v2219, 16
      %v2384 = vor.u32 %v2382, %v2380
      %v2386 = vshll.u32 %v2220, 16
      %v2388 = vrot.slane %v2386, 1
      %v2389 = vsel %vm2225, %v2384, %v2388
      %v2390 = vshrl.u32 %v2220, 16
      %v2392 = vor.u32 %v2390, %v2388
      %v2394 = vshll.u32 %v2221, 16
      %v2396 = vrot.slane %v2394, 1
      %v2397 = vsel %vm2225, %v2392, %v2396
      %v2398 = vshrl.u32 %v2221, 16
      %v2400 = vor.u32 %v2398, %v2396
      %v2402 = vshll.u32 %v2222, 16
      %v2404 = vrot.slane %v2402, 1
      %v2405 = vsel %vm2225, %v2400, %v2404
      %v2406 = vshrl.u32 %v2222, 16
      %v2408 = vor.u32 %v2406, %v2404
      %v2410 = vshll.u32 %v2223, 16
      %v2412 = vrot.slane %v2410, 1
      %v2413 = vsel %vm2225, %v2408, %v2412
      %v2414 = vshrl.u32 %v2223, 16
      %v2416 = vor.u32 %v2414, %v2412
      %v2418 = vshll.u32 %v2224, 16
      %v2420 = vrot.slane %v2418, 1
      %v2421 = vsel %vm2225, %v2416, %v2420
      %vm2422 = vcmask 31744
      %v2424 = vsel %vm2422, %v2237, 0
      %v2427 = vsel %vm2422, %v2245, 0
      %v2430 = vsel %vm2422, %v2253, 0
      %v2433 = vsel %vm2422, %v2261, 0
      %v2436 = vsel %vm2422, %v2269, 0
      %v2439 = vsel %vm2422, %v2277, 0
      %v2442 = vsel %vm2422, %v2285, 0
      %v2445 = vsel %vm2422, %v2293, 0
      %v2448 = vsel %vm2422, %v2301, 0
      %v2451 = vsel %vm2422, %v2309, 0
      %v2454 = vsel %vm2422, %v2317, 0
      %v2457 = vsel %vm2422, %v2325, 0
      %v2460 = vsel %vm2422, %v2333, 0
      %v2463 = vsel %vm2422, %v2341, 0
      %v2466 = vsel %vm2422, %v2349, 0
      %v2469 = vsel %vm2422, %v2357, 0
      %v2472 = vsel %vm2422, %v2365, 0
      %v2475 = vsel %vm2422, %v2373, 0
      %v2478 = vsel %vm2422, %v2381, 0
      %v2481 = vsel %vm2422, %v2389, 0
      %v2484 = vsel %vm2422, %v2397, 0
      %v2487 = vsel %vm2422, %v2405, 0
      %v2490 = vsel %vm2422, %v2413, 0
      %v2493 = vsel %vm2422, %v2421, 0
      %vm2495 = vcmask 1041408
      %v2497 = vsel %vm2495, %v2101, 0
      %2499 = vmatpush.bf16.msra.mxu0 0
      %2500 = vmatpush.bf16.msra.mxu0 0
      %2501 = vmatpush.bf16.msra.mxu0 0
      %2502 = vmatpush.bf16.msra.mxu0 0
      %2503 = vmatpush.bf16.msra.mxu0 0
      %2504 = vmatpush.bf16.msra.mxu0 0
      %2505 = vmatpush.bf16.msra.mxu0 0
      %2506 = vmatpush.bf16.msra.mxu0 %v2497
      %2507 = vmatmul.bf16.gmra.mxu0 %v2424
      %v2508 = vpop.f32.mrf.mxu0
      %v2509 = vadd.f32 0.0, %v2508
      %v2510 = vpop.f32.mrf.mxu0
      %v2511 = vadd.f32 0.0, %v2510
      %2512 = vmatmul.bf16.gmra.mxu0 %v2427
      %v2513 = vpop.f32.mrf.mxu0
      %v2514 = vadd.f32 0.0, %v2513
      %v2515 = vpop.f32.mrf.mxu0
      %v2516 = vadd.f32 0.0, %v2515
      %2517 = vmatmul.bf16.gmra.mxu0 %v2430
      %v2518 = vpop.f32.mrf.mxu0
      %v2519 = vadd.f32 0.0, %v2518
      %v2520 = vpop.f32.mrf.mxu0
      %v2521 = vadd.f32 0.0, %v2520
      %2522 = vmatmul.bf16.gmra.mxu0 %v2433
      %v2523 = vpop.f32.mrf.mxu0
      %v2524 = vadd.f32 0.0, %v2523
      %v2525 = vpop.f32.mrf.mxu0
      %v2526 = vadd.f32 0.0, %v2525
      %2527 = vmatmul.bf16.gmra.mxu0 %v2436
      %v2528 = vpop.f32.mrf.mxu0
      %v2529 = vadd.f32 0.0, %v2528
      %v2530 = vpop.f32.mrf.mxu0
      %v2531 = vadd.f32 0.0, %v2530
      %2532 = vmatmul.bf16.gmra.mxu0 %v2439
      %v2533 = vpop.f32.mrf.mxu0
      %v2534 = vadd.f32 0.0, %v2533
      %v2535 = vpop.f32.mrf.mxu0
      %v2536 = vadd.f32 0.0, %v2535
      %2537 = vmatmul.bf16.gmra.mxu0 %v2442
      %v2538 = vpop.f32.mrf.mxu0
      %v2539 = vadd.f32 0.0, %v2538
      %v2540 = vpop.f32.mrf.mxu0
      %v2541 = vadd.f32 0.0, %v2540
      %2542 = vmatmul.bf16.gmra.mxu0 %v2445
      %v2543 = vpop.f32.mrf.mxu0
      %v2544 = vadd.f32 0.0, %v2543
      %v2545 = vpop.f32.mrf.mxu0
      %v2546 = vadd.f32 0.0, %v2545
      %2547 = vmatmul.bf16.gmra.mxu0 %v2448
      %v2548 = vpop.f32.mrf.mxu0
      %v2549 = vadd.f32 0.0, %v2548
      %v2550 = vpop.f32.mrf.mxu0
      %v2551 = vadd.f32 0.0, %v2550
      %2552 = vmatmul.bf16.gmra.mxu0 %v2451
      %v2553 = vpop.f32.mrf.mxu0
      %v2554 = vadd.f32 0.0, %v2553
      %v2555 = vpop.f32.mrf.mxu0
      %v2556 = vadd.f32 0.0, %v2555
      %2557 = vmatmul.bf16.gmra.mxu0 %v2454
      %v2558 = vpop.f32.mrf.mxu0
      %v2559 = vadd.f32 0.0, %v2558
      %v2560 = vpop.f32.mrf.mxu0
      %v2561 = vadd.f32 0.0, %v2560
      %2562 = vmatmul.bf16.gmra.mxu0 %v2457
      %v2563 = vpop.f32.mrf.mxu0
      %v2564 = vadd.f32 0.0, %v2563
      %v2565 = vpop.f32.mrf.mxu0
      %v2566 = vadd.f32 0.0, %v2565
      %2567 = vmatmul.bf16.gmra.mxu0 %v2460
      %v2568 = vpop.f32.mrf.mxu0
      %v2569 = vadd.f32 0.0, %v2568
      %v2570 = vpop.f32.mrf.mxu0
      %v2571 = vadd.f32 0.0, %v2570
      %2572 = vmatmul.bf16.gmra.mxu0 %v2463
      %v2573 = vpop.f32.mrf.mxu0
      %v2574 = vadd.f32 0.0, %v2573
      %v2575 = vpop.f32.mrf.mxu0
      %v2576 = vadd.f32 0.0, %v2575
      %2577 = vmatmul.bf16.gmra.mxu0 %v2466
      %v2578 = vpop.f32.mrf.mxu0
      %v2579 = vadd.f32 0.0, %v2578
      %v2580 = vpop.f32.mrf.mxu0
      %v2581 = vadd.f32 0.0, %v2580
      %2582 = vmatmul.bf16.gmra.mxu0 %v2469
      %v2583 = vpop.f32.mrf.mxu0
      %v2584 = vadd.f32 0.0, %v2583
      %v2585 = vpop.f32.mrf.mxu0
      %v2586 = vadd.f32 0.0, %v2585
      %2587 = vmatmul.bf16.gmra.mxu0 %v2472
      %v2588 = vpop.f32.mrf.mxu0
      %v2589 = vadd.f32 0.0, %v2588
      %v2590 = vpop.f32.mrf.mxu0
      %v2591 = vadd.f32 0.0, %v2590
      %2592 = vmatmul.bf16.gmra.mxu0 %v2475
      %v2593 = vpop.f32.mrf.mxu0
      %v2594 = vadd.f32 0.0, %v2593
      %v2595 = vpop.f32.mrf.mxu0
      %v2596 = vadd.f32 0.0, %v2595
      %2597 = vmatmul.bf16.gmra.mxu0 %v2478
      %v2598 = vpop.f32.mrf.mxu0
      %v2599 = vadd.f32 0.0, %v2598
      %v2600 = vpop.f32.mrf.mxu0
      %v2601 = vadd.f32 0.0, %v2600
      %2602 = vmatmul.bf16.gmra.mxu0 %v2481
      %v2603 = vpop.f32.mrf.mxu0
      %v2604 = vadd.f32 0.0, %v2603
      %v2605 = vpop.f32.mrf.mxu0
      %v2606 = vadd.f32 0.0, %v2605
      %2607 = vmatmul.bf16.gmra.mxu0 %v2484
      %v2608 = vpop.f32.mrf.mxu0
      %v2609 = vadd.f32 0.0, %v2608
      %v2610 = vpop.f32.mrf.mxu0
      %v2611 = vadd.f32 0.0, %v2610
      %2612 = vmatmul.bf16.gmra.mxu0 %v2487
      %v2613 = vpop.f32.mrf.mxu0
      %v2614 = vadd.f32 0.0, %v2613
      %v2615 = vpop.f32.mrf.mxu0
      %v2616 = vadd.f32 0.0, %v2615
      %2617 = vmatmul.bf16.gmra.mxu0 %v2490
      %v2618 = vpop.f32.mrf.mxu0
      %v2619 = vadd.f32 0.0, %v2618
      %v2620 = vpop.f32.mrf.mxu0
      %v2621 = vadd.f32 0.0, %v2620
      %2622 = vmatmul.bf16.gmra.mxu0 %v2493
      %v2623 = vpop.f32.mrf.mxu0
      %v2624 = vadd.f32 0.0, %v2623
      %v2625 = vpop.f32.mrf.mxu0
      %v2626 = vadd.f32 0.0, %v2625
      %2627 = vdwg.mxu0
      %v2628 = vsel %vm2422, %v2200, 0
      %v2630 = vsel %vm2422, %v2201, 0
      %v2632 = vsel %vm2422, %v2202, 0
      %v2634 = vsel %vm2422, %v2203, 0
      %v2636 = vsel %vm2422, %v2204, 0
      %v2638 = vsel %vm2422, %v2205, 0
      %v2640 = vsel %vm2422, %v2206, 0
      %v2642 = vsel %vm2422, %v2207, 0
      %v2644 = vsel %vm2422, %v2208, 0
      %v2646 = vsel %vm2422, %v2209, 0
      %v2648 = vsel %vm2422, %v2210, 0
      %v2650 = vsel %vm2422, %v2211, 0
      %v2652 = vsel %vm2422, %v2212, 0
      %v2654 = vsel %vm2422, %v2213, 0
      %v2656 = vsel %vm2422, %v2214, 0
      %v2658 = vsel %vm2422, %v2215, 0
      %v2660 = vsel %vm2422, %v2216, 0
      %v2662 = vsel %vm2422, %v2217, 0
      %v2664 = vsel %vm2422, %v2218, 0
      %v2666 = vsel %vm2422, %v2219, 0
      %v2668 = vsel %vm2422, %v2220, 0
      %v2670 = vsel %vm2422, %v2221, 0
      %v2672 = vsel %vm2422, %v2222, 0
      %v2674 = vsel %vm2422, %v2223, 0
      %v2677 = vsel %vm2495, %v2098, 0
      %2679 = vmatpush.bf16.msra.mxu0 0
      %2680 = vmatpush.bf16.msra.mxu0 0
      %2681 = vmatpush.bf16.msra.mxu0 0
      %2682 = vmatpush.bf16.msra.mxu0 0
      %2683 = vmatpush.bf16.msra.mxu0 0
      %2684 = vmatpush.bf16.msra.mxu0 0
      %2685 = vmatpush.bf16.msra.mxu0 0
      %2686 = vmatpush.bf16.msra.mxu0 %v2677
      %2687 = vmatmul.bf16.gmra.mxu0 %v2628
      %v2688 = vpop.f32.mrf.mxu0
      %v2689 = vadd.f32 %v2509, %v2688
      %v2690 = vpop.f32.mrf.mxu0
      %v2691 = vadd.f32 %v2511, %v2690
      %2692 = vmatmul.bf16.gmra.mxu0 %v2630
      %v2693 = vpop.f32.mrf.mxu0
      %v2694 = vadd.f32 %v2514, %v2693
      %v2695 = vpop.f32.mrf.mxu0
      %v2696 = vadd.f32 %v2516, %v2695
      %2697 = vmatmul.bf16.gmra.mxu0 %v2632
      %v2698 = vpop.f32.mrf.mxu0
      %v2699 = vadd.f32 %v2519, %v2698
      %v2700 = vpop.f32.mrf.mxu0
      %v2701 = vadd.f32 %v2521, %v2700
      %2702 = vmatmul.bf16.gmra.mxu0 %v2634
      %v2703 = vpop.f32.mrf.mxu0
      %v2704 = vadd.f32 %v2524, %v2703
      %v2705 = vpop.f32.mrf.mxu0
      %v2706 = vadd.f32 %v2526, %v2705
      %2707 = vmatmul.bf16.gmra.mxu0 %v2636
      %v2708 = vpop.f32.mrf.mxu0
      %v2709 = vadd.f32 %v2529, %v2708
      %v2710 = vpop.f32.mrf.mxu0
      %v2711 = vadd.f32 %v2531, %v2710
      %2712 = vmatmul.bf16.gmra.mxu0 %v2638
      %v2713 = vpop.f32.mrf.mxu0
      %v2714 = vadd.f32 %v2534, %v2713
      %v2715 = vpop.f32.mrf.mxu0
      %v2716 = vadd.f32 %v2536, %v2715
      %2717 = vmatmul.bf16.gmra.mxu0 %v2640
      %v2718 = vpop.f32.mrf.mxu0
      %v2719 = vadd.f32 %v2539, %v2718
      %v2720 = vpop.f32.mrf.mxu0
      %v2721 = vadd.f32 %v2541, %v2720
      %2722 = vmatmul.bf16.gmra.mxu0 %v2642
      %v2723 = vpop.f32.mrf.mxu0
      %v2724 = vadd.f32 %v2544, %v2723
      %v2725 = vpop.f32.mrf.mxu0
      %v2726 = vadd.f32 %v2546, %v2725
      %2727 = vmatmul.bf16.gmra.mxu0 %v2644
      %v2728 = vpop.f32.mrf.mxu0
      %v2729 = vadd.f32 %v2549, %v2728
      %v2730 = vpop.f32.mrf.mxu0
      %v2731 = vadd.f32 %v2551, %v2730
      %2732 = vmatmul.bf16.gmra.mxu0 %v2646
      %v2733 = vpop.f32.mrf.mxu0
      %v2734 = vadd.f32 %v2554, %v2733
      %v2735 = vpop.f32.mrf.mxu0
      %v2736 = vadd.f32 %v2556, %v2735
      %2737 = vmatmul.bf16.gmra.mxu0 %v2648
      %v2738 = vpop.f32.mrf.mxu0
      %v2739 = vadd.f32 %v2559, %v2738
      %v2740 = vpop.f32.mrf.mxu0
      %v2741 = vadd.f32 %v2561, %v2740
      %2742 = vmatmul.bf16.gmra.mxu0 %v2650
      %v2743 = vpop.f32.mrf.mxu0
      %v2744 = vadd.f32 %v2564, %v2743
      %v2745 = vpop.f32.mrf.mxu0
      %v2746 = vadd.f32 %v2566, %v2745
      %2747 = vmatmul.bf16.gmra.mxu0 %v2652
      %v2748 = vpop.f32.mrf.mxu0
      %v2749 = vadd.f32 %v2569, %v2748
      %v2750 = vpop.f32.mrf.mxu0
      %v2751 = vadd.f32 %v2571, %v2750
      %2752 = vmatmul.bf16.gmra.mxu0 %v2654
      %v2753 = vpop.f32.mrf.mxu0
      %v2754 = vadd.f32 %v2574, %v2753
      %v2755 = vpop.f32.mrf.mxu0
      %v2756 = vadd.f32 %v2576, %v2755
      %2757 = vmatmul.bf16.gmra.mxu0 %v2656
      %v2758 = vpop.f32.mrf.mxu0
      %v2759 = vadd.f32 %v2579, %v2758
      %v2760 = vpop.f32.mrf.mxu0
      %v2761 = vadd.f32 %v2581, %v2760
      %2762 = vmatmul.bf16.gmra.mxu0 %v2658
      %v2763 = vpop.f32.mrf.mxu0
      %v2764 = vadd.f32 %v2584, %v2763
      %v2765 = vpop.f32.mrf.mxu0
      %v2766 = vadd.f32 %v2586, %v2765
      %2767 = vmatmul.bf16.gmra.mxu0 %v2660
      %v2768 = vpop.f32.mrf.mxu0
      %v2769 = vadd.f32 %v2589, %v2768
      %v2770 = vpop.f32.mrf.mxu0
      %v2771 = vadd.f32 %v2591, %v2770
      %2772 = vmatmul.bf16.gmra.mxu0 %v2662
      %v2773 = vpop.f32.mrf.mxu0
      %v2774 = vadd.f32 %v2594, %v2773
      %v2775 = vpop.f32.mrf.mxu0
      %v2776 = vadd.f32 %v2596, %v2775
      %2777 = vmatmul.bf16.gmra.mxu0 %v2664
      %v2778 = vpop.f32.mrf.mxu0
      %v2779 = vadd.f32 %v2599, %v2778
      %v2780 = vpop.f32.mrf.mxu0
      %v2781 = vadd.f32 %v2601, %v2780
      %2782 = vmatmul.bf16.gmra.mxu0 %v2666
      %v2783 = vpop.f32.mrf.mxu0
      %v2784 = vadd.f32 %v2604, %v2783
      %v2785 = vpop.f32.mrf.mxu0
      %v2786 = vadd.f32 %v2606, %v2785
      %2787 = vmatmul.bf16.gmra.mxu0 %v2668
      %v2788 = vpop.f32.mrf.mxu0
      %v2789 = vadd.f32 %v2609, %v2788
      %v2790 = vpop.f32.mrf.mxu0
      %v2791 = vadd.f32 %v2611, %v2790
      %2792 = vmatmul.bf16.gmra.mxu0 %v2670
      %v2793 = vpop.f32.mrf.mxu0
      %v2794 = vadd.f32 %v2614, %v2793
      %v2795 = vpop.f32.mrf.mxu0
      %v2796 = vadd.f32 %v2616, %v2795
      %2797 = vmatmul.bf16.gmra.mxu0 %v2672
      %v2798 = vpop.f32.mrf.mxu0
      %v2799 = vadd.f32 %v2619, %v2798
      %v2800 = vpop.f32.mrf.mxu0
      %v2801 = vadd.f32 %v2621, %v2800
      %2802 = vmatmul.bf16.gmra.mxu0 %v2674
      %v2803 = vpop.f32.mrf.mxu0
      %v2804 = vadd.f32 %v2624, %v2803
      %v2805 = vpop.f32.mrf.mxu0
      %v2806 = vadd.f32 %v2626, %v2805
      %2807 = vdwg.mxu0
      %v2808 = vld [vmem:[%s207] sm:$0xe]
      %s2809 = scalar_lea.vmem %s1, 4
      %v2810 = vld [vmem:[%s2809] sm:$0x3]
      %v2812 = vunpack.c.l.b16 %v2808
      %v2813 = vpack.c.b16 %v2152, %v2812
      %vm2814 = vcmask 1046528
      %v2815 = vrot.slane %v2813, 1
      %v2816 = vrot.slane %v2201, 1
      %v2817 = vsel %vm2814, %v2815, %v2816
      %v2818 = vrot.slane %v2202, 1
      %v2819 = vsel %vm2814, %v2816, %v2818
      %v2820 = vrot.slane %v2203, 1
      %v2821 = vsel %vm2814, %v2818, %v2820
      %v2822 = vrot.slane %v2204, 1
      %v2823 = vsel %vm2814, %v2820, %v2822
      %v2824 = vrot.slane %v2205, 1
      %v2825 = vsel %vm2814, %v2822, %v2824
      %v2826 = vrot.slane %v2206, 1
      %v2827 = vsel %vm2814, %v2824, %v2826
      %v2828 = vrot.slane %v2207, 1
      %v2829 = vsel %vm2814, %v2826, %v2828
      %v2830 = vrot.slane %v2208, 1
      %v2831 = vsel %vm2814, %v2828, %v2830
      %v2832 = vrot.slane %v2209, 1
      %v2833 = vsel %vm2814, %v2830, %v2832
      %v2834 = vrot.slane %v2210, 1
      %v2835 = vsel %vm2814, %v2832, %v2834
      %v2836 = vrot.slane %v2211, 1
      %v2837 = vsel %vm2814, %v2834, %v2836
      %v2838 = vrot.slane %v2212, 1
      %v2839 = vsel %vm2814, %v2836, %v2838
      %v2840 = vrot.slane %v2213, 1
      %v2841 = vsel %vm2814, %v2838, %v2840
      %v2842 = vrot.slane %v2214, 1
      %v2843 = vsel %vm2814, %v2840, %v2842
      %v2844 = vrot.slane %v2215, 1
      %v2845 = vsel %vm2814, %v2842, %v2844
      %v2846 = vrot.slane %v2216, 1
      %v2847 = vsel %vm2814, %v2844, %v2846
      %v2848 = vrot.slane %v2217, 1
      %v2849 = vsel %vm2814, %v2846, %v2848
      %v2850 = vrot.slane %v2218, 1
      %v2851 = vsel %vm2814, %v2848, %v2850
      %v2852 = vrot.slane %v2219, 1
      %v2853 = vsel %vm2814, %v2850, %v2852
      %v2854 = vrot.slane %v2220, 1
      %v2855 = vsel %vm2814, %v2852, %v2854
      %v2856 = vrot.slane %v2221, 1
      %v2857 = vsel %vm2814, %v2854, %v2856
      %v2858 = vrot.slane %v2222, 1
      %v2859 = vsel %vm2814, %v2856, %v2858
      %v2860 = vrot.slane %v2223, 1
      %v2861 = vsel %vm2814, %v2858, %v2860
      %v2862 = vrot.slane %v2224, 1
      %v2863 = vsel %vm2814, %v2860, %v2862
      %v2865 = vsel %vm2422, %v2817, 0
      %v2868 = vsel %vm2422, %v2819, 0
      %v2871 = vsel %vm2422, %v2821, 0
      %v2874 = vsel %vm2422, %v2823, 0
      %v2877 = vsel %vm2422, %v2825, 0
      %v2880 = vsel %vm2422, %v2827, 0
      %v2883 = vsel %vm2422, %v2829, 0
      %v2886 = vsel %vm2422, %v2831, 0
      %v2889 = vsel %vm2422, %v2833, 0
      %v2892 = vsel %vm2422, %v2835, 0
      %v2895 = vsel %vm2422, %v2837, 0
      %v2898 = vsel %vm2422, %v2839, 0
      %v2901 = vsel %vm2422, %v2841, 0
      %v2904 = vsel %vm2422, %v2843, 0
      %v2907 = vsel %vm2422, %v2845, 0
      %v2910 = vsel %vm2422, %v2847, 0
      %v2913 = vsel %vm2422, %v2849, 0
      %v2916 = vsel %vm2422, %v2851, 0
      %v2919 = vsel %vm2422, %v2853, 0
      %v2922 = vsel %vm2422, %v2855, 0
      %v2925 = vsel %vm2422, %v2857, 0
      %v2928 = vsel %vm2422, %v2859, 0
      %v2931 = vsel %vm2422, %v2861, 0
      %v2934 = vsel %vm2422, %v2863, 0
      %v2937 = vsel %vm2495, %v2810, 0
      %2939 = vmatpush.bf16.msra.mxu0 0
      %2940 = vmatpush.bf16.msra.mxu0 0
      %2941 = vmatpush.bf16.msra.mxu0 0
      %2942 = vmatpush.bf16.msra.mxu0 0
      %2943 = vmatpush.bf16.msra.mxu0 0
      %2944 = vmatpush.bf16.msra.mxu0 0
      %2945 = vmatpush.bf16.msra.mxu0 0
      %2946 = vmatpush.bf16.msra.mxu0 %v2937
      %2947 = vmatmul.bf16.gmra.mxu0 %v2865
      %v2948 = vpop.f32.mrf.mxu0
      %v2949 = vadd.f32 0.0, %v2948
      %v2950 = vpop.f32.mrf.mxu0
      %v2951 = vadd.f32 0.0, %v2950
      %2952 = vmatmul.bf16.gmra.mxu0 %v2868
      %v2953 = vpop.f32.mrf.mxu0
      %v2954 = vadd.f32 0.0, %v2953
      %v2955 = vpop.f32.mrf.mxu0
      %v2956 = vadd.f32 0.0, %v2955
      %2957 = vmatmul.bf16.gmra.mxu0 %v2871
      %v2958 = vpop.f32.mrf.mxu0
      %v2959 = vadd.f32 0.0, %v2958
      %v2960 = vpop.f32.mrf.mxu0
      %v2961 = vadd.f32 0.0, %v2960
      %2962 = vmatmul.bf16.gmra.mxu0 %v2874
      %v2963 = vpop.f32.mrf.mxu0
      %v2964 = vadd.f32 0.0, %v2963
      %v2965 = vpop.f32.mrf.mxu0
      %v2966 = vadd.f32 0.0, %v2965
      %2967 = vmatmul.bf16.gmra.mxu0 %v2877
      %v2968 = vpop.f32.mrf.mxu0
      %v2969 = vadd.f32 0.0, %v2968
      %v2970 = vpop.f32.mrf.mxu0
      %v2971 = vadd.f32 0.0, %v2970
      %2972 = vmatmul.bf16.gmra.mxu0 %v2880
      %v2973 = vpop.f32.mrf.mxu0
      %v2974 = vadd.f32 0.0, %v2973
      %v2975 = vpop.f32.mrf.mxu0
      %v2976 = vadd.f32 0.0, %v2975
      %2977 = vmatmul.bf16.gmra.mxu0 %v2883
      %v2978 = vpop.f32.mrf.mxu0
      %v2979 = vadd.f32 0.0, %v2978
      %v2980 = vpop.f32.mrf.mxu0
      %v2981 = vadd.f32 0.0, %v2980
      %2982 = vmatmul.bf16.gmra.mxu0 %v2886
      %v2983 = vpop.f32.mrf.mxu0
      %v2984 = vadd.f32 0.0, %v2983
      %v2985 = vpop.f32.mrf.mxu0
      %v2986 = vadd.f32 0.0, %v2985
      %2987 = vmatmul.bf16.gmra.mxu0 %v2889
      %v2988 = vpop.f32.mrf.mxu0
      %v2989 = vadd.f32 0.0, %v2988
      %v2990 = vpop.f32.mrf.mxu0
      %v2991 = vadd.f32 0.0, %v2990
      %2992 = vmatmul.bf16.gmra.mxu0 %v2892
      %v2993 = vpop.f32.mrf.mxu0
      %v2994 = vadd.f32 0.0, %v2993
      %v2995 = vpop.f32.mrf.mxu0
      %v2996 = vadd.f32 0.0, %v2995
      %2997 = vmatmul.bf16.gmra.mxu0 %v2895
      %v2998 = vpop.f32.mrf.mxu0
      %v2999 = vadd.f32 0.0, %v2998
      %v3000 = vpop.f32.mrf.mxu0
      %v3001 = vadd.f32 0.0, %v3000
      %3002 = vmatmul.bf16.gmra.mxu0 %v2898
      %v3003 = vpop.f32.mrf.mxu0
      %v3004 = vadd.f32 0.0, %v3003
      %v3005 = vpop.f32.mrf.mxu0
      %v3006 = vadd.f32 0.0, %v3005
      %3007 = vmatmul.bf16.gmra.mxu0 %v2901
      %v3008 = vpop.f32.mrf.mxu0
      %v3009 = vadd.f32 0.0, %v3008
      %v3010 = vpop.f32.mrf.mxu0
      %v3011 = vadd.f32 0.0, %v3010
      %3012 = vmatmul.bf16.gmra.mxu0 %v2904
      %v3013 = vpop.f32.mrf.mxu0
      %v3014 = vadd.f32 0.0, %v3013
      %v3015 = vpop.f32.mrf.mxu0
      %v3016 = vadd.f32 0.0, %v3015
      %3017 = vmatmul.bf16.gmra.mxu0 %v2907
      %v3018 = vpop.f32.mrf.mxu0
      %v3019 = vadd.f32 0.0, %v3018
      %v3020 = vpop.f32.mrf.mxu0
      %v3021 = vadd.f32 0.0, %v3020
      %3022 = vmatmul.bf16.gmra.mxu0 %v2910
      %v3023 = vpop.f32.mrf.mxu0
      %v3024 = vadd.f32 0.0, %v3023
      %v3025 = vpop.f32.mrf.mxu0
      %v3026 = vadd.f32 0.0, %v3025
      %3027 = vmatmul.bf16.gmra.mxu0 %v2913
      %v3028 = vpop.f32.mrf.mxu0
      %v3029 = vadd.f32 0.0, %v3028
      %v3030 = vpop.f32.mrf.mxu0
      %v3031 = vadd.f32 0.0, %v3030
      %3032 = vmatmul.bf16.gmra.mxu0 %v2916
      %v3033 = vpop.f32.mrf.mxu0
      %v3034 = vadd.f32 0.0, %v3033
      %v3035 = vpop.f32.mrf.mxu0
      %v3036 = vadd.f32 0.0, %v3035
      %3037 = vmatmul.bf16.gmra.mxu0 %v2919
      %v3038 = vpop.f32.mrf.mxu0
      %v3039 = vadd.f32 0.0, %v3038
      %v3040 = vpop.f32.mrf.mxu0
      %v3041 = vadd.f32 0.0, %v3040
      %3042 = vmatmul.bf16.gmra.mxu0 %v2922
      %v3043 = vpop.f32.mrf.mxu0
      %v3044 = vadd.f32 0.0, %v3043
      %v3045 = vpop.f32.mrf.mxu0
      %v3046 = vadd.f32 0.0, %v3045
      %3047 = vmatmul.bf16.gmra.mxu0 %v2925
      %v3048 = vpop.f32.mrf.mxu0
      %v3049 = vadd.f32 0.0, %v3048
      %v3050 = vpop.f32.mrf.mxu0
      %v3051 = vadd.f32 0.0, %v3050
      %3052 = vmatmul.bf16.gmra.mxu0 %v2928
      %v3053 = vpop.f32.mrf.mxu0
      %v3054 = vadd.f32 0.0, %v3053
      %v3055 = vpop.f32.mrf.mxu0
      %v3056 = vadd.f32 0.0, %v3055
      %3057 = vmatmul.bf16.gmra.mxu0 %v2931
      %v3058 = vpop.f32.mrf.mxu0
      %v3059 = vadd.f32 0.0, %v3058
      %v3060 = vpop.f32.mrf.mxu0
      %v3061 = vadd.f32 0.0, %v3060
      %3062 = vmatmul.bf16.gmra.mxu0 %v2934
      %v3063 = vpop.f32.mrf.mxu0
      %v3064 = vadd.f32 0.0, %v3063
      %v3065 = vpop.f32.mrf.mxu0
      %v3066 = vadd.f32 0.0, %v3065
      %3067 = vdwg.mxu0
      %v3068 = vadd.f32 %v2689, %v2949
      %v3069 = vadd.f32 %v2691, %v2951
      %v3070 = vadd.f32 %v2694, %v2954
      %v3071 = vadd.f32 %v2696, %v2956
      %v3072 = vadd.f32 %v2699, %v2959
      %v3073 = vadd.f32 %v2701, %v2961
      %v3074 = vadd.f32 %v2704, %v2964
      %v3075 = vadd.f32 %v2706, %v2966
      %v3076 = vadd.f32 %v2709, %v2969
      %v3077 = vadd.f32 %v2711, %v2971
      %v3078 = vadd.f32 %v2714, %v2974
      %v3079 = vadd.f32 %v2716, %v2976
      %v3080 = vadd.f32 %v2719, %v2979
      %v3081 = vadd.f32 %v2721, %v2981
      %v3082 = vadd.f32 %v2724, %v2984
      %v3083 = vadd.f32 %v2726, %v2986
      %v3084 = vadd.f32 %v2729, %v2989
      %v3085 = vadd.f32 %v2731, %v2991
      %v3086 = vadd.f32 %v2734, %v2994
      %v3087 = vadd.f32 %v2736, %v2996
      %v3088 = vadd.f32 %v2739, %v2999
      %v3089 = vadd.f32 %v2741, %v3001
      %v3090 = vadd.f32 %v2744, %v3004
      %v3091 = vadd.f32 %v2746, %v3006
      %v3092 = vadd.f32 %v2749, %v3009
      %v3093 = vadd.f32 %v2751, %v3011
      %v3094 = vadd.f32 %v2754, %v3014
      %v3095 = vadd.f32 %v2756, %v3016
      %v3096 = vadd.f32 %v2759, %v3019
      %v3097 = vadd.f32 %v2761, %v3021
      %v3098 = vadd.f32 %v2764, %v3024
      %v3099 = vadd.f32 %v2766, %v3026
      %v3100 = vadd.f32 %v2769, %v3029
      %v3101 = vadd.f32 %v2771, %v3031
      %v3102 = vadd.f32 %v2774, %v3034
      %v3103 = vadd.f32 %v2776, %v3036
      %v3104 = vadd.f32 %v2779, %v3039
      %v3105 = vadd.f32 %v2781, %v3041
      %v3106 = vadd.f32 %v2784, %v3044
      %v3107 = vadd.f32 %v2786, %v3046
      %v3108 = vadd.f32 %v2789, %v3049
      %v3109 = vadd.f32 %v2791, %v3051
      %v3110 = vadd.f32 %v2794, %v3054
      %v3111 = vadd.f32 %v2796, %v3056
      %v3112 = vadd.f32 %v2799, %v3059
      %v3113 = vadd.f32 %v2801, %v3061
      %v3114 = vadd.f32 %v2804, %v3064
      %v3115 = vadd.f32 %v2806, %v3066
      %v3116 = vld [vmem:[%s207 + $0xc] sm:$0xf]
      %v3117 = vld [vmem:[%s207 + $0x10] sm:$0xf]
      %v3118 = vld [vmem:[%s207 + $0x14] sm:$0xf]
      %v3119 = vld [vmem:[%s207 + $0x18] sm:$0xf]
      %v3120 = vld [vmem:[%s207 + $0x1c] sm:$0xf]
      %v3121 = vld [vmem:[%s207 + $0x20] sm:$0xf]
      %v3122 = vld [vmem:[%s207 + $0x24] sm:$0xf]
      %v3123 = vld [vmem:[%s207 + $0x28] sm:$0xf]
      %v3124 = vld [vmem:[%s207 + $0x2c] sm:$0xf]
      %v3125 = vld [vmem:[%s207 + $0x30] sm:$0xf]
      %v3126 = vld [vmem:[%s207 + $0x34] sm:$0xf]
      %v3127 = vld [vmem:[%s207 + $0x38] sm:$0xf]
      %v3128 = vld [vmem:[%s207 + $0x3c] sm:$0xf]
      %v3129 = vld [vmem:[%s207 + $0x40] sm:$0xf]
      %v3130 = vld [vmem:[%s207 + $0x44] sm:$0xf]
      %v3131 = vld [vmem:[%s207 + $0x48] sm:$0xf]
      %v3132 = vld [vmem:[%s207 + $0x4c] sm:$0xf]
      %v3133 = vld [vmem:[%s207 + $0x50] sm:$0xf]
      %v3134 = vld [vmem:[%s207 + $0x54] sm:$0xf]
      %v3135 = vld [vmem:[%s207 + $0x58] sm:$0xf]
      %v3136 = vld [vmem:[%s207 + $0x5c] sm:$0xf]
      %v3137 = vld [vmem:[%s207 + $0x60] sm:$0xf]
      %v3138 = vld [vmem:[%s207 + $0x64] sm:$0xf]
      %v3139 = vld [vmem:[%s207 + $0x68] sm:$0xf]
      %v3140 = vld [vmem:[%s207 + $0x6c] sm:$0xf]
      %v3141 = vld [vmem:[%s207 + $0x70] sm:$0xf]
      %v3142 = vld [vmem:[%s207 + $0x74] sm:$0xf]
      %v3143 = vld [vmem:[%s207 + $0x78] sm:$0xf]
      %v3144 = vld [vmem:[%s207 + $0x7c] sm:$0xf]
      %v3145 = vld [vmem:[%s207 + $0x80] sm:$0xf]
      %v3146 = vld [vmem:[%s207 + $0x84] sm:$0xf]
      %v3147 = vld [vmem:[%s207 + $0x88] sm:$0xf]
      %v3148 = vld [vmem:[%s207 + $0x8c] sm:$0xf]
      %v3149 = vld [vmem:[%s207 + $0x90] sm:$0xf]
      %v3150 = vld [vmem:[%s207 + $0x94] sm:$0xf]
      %v3151 = vld [vmem:[%s207 + $0x98] sm:$0xf]
      %v3152 = vld [vmem:[%s207 + $0x9c] sm:$0xf]
      %v3153 = vld [vmem:[%s207 + $0xa0] sm:$0xf]
      %v3154 = vld [vmem:[%s207 + $0xa4] sm:$0xf]
      %v3155 = vld [vmem:[%s207 + $0xa8] sm:$0xf]
      %v3156 = vld [vmem:[%s207 + $0xac] sm:$0xf]
      %v3157 = vld [vmem:[%s207 + $0xb0] sm:$0xf]
      %v3158 = vld [vmem:[%s207 + $0xb4] sm:$0xf]
      %v3159 = vld [vmem:[%s207 + $0xb8] sm:$0xf]
      %v3160 = vld [vmem:[%s207 + $0xbc] sm:$0xf]
      %v3161 = vld [vmem:[%s207 + $0xc0] sm:$0xf]
      %v3162 = vld [vmem:[%s207 + $0xc4] sm:$0xf]
      %v3163 = vld [vmem:[%s207 + $0xc8] sm:$0xf]
      %s3164 = scalar_lea.vmem %s1, 6
      %v3165 = vld [vmem:[%s3164] sm:$0x3]
      %v3214 = vunpack.c.l.b16 %v3116
      %v3215 = vunpack.c.l.b16 %v3117
      %v3216 = vunpack.c.l.b16 %v3118
      %v3217 = vunpack.c.l.b16 %v3119
      %v3218 = vunpack.c.l.b16 %v3120
      %v3219 = vunpack.c.l.b16 %v3121
      %v3220 = vunpack.c.l.b16 %v3122
      %v3221 = vunpack.c.l.b16 %v3123
      %v3222 = vunpack.c.l.b16 %v3124
      %v3223 = vunpack.c.l.b16 %v3125
      %v3224 = vunpack.c.l.b16 %v3126
      %v3225 = vunpack.c.l.b16 %v3127
      %v3226 = vunpack.c.l.b16 %v3128
      %v3227 = vunpack.c.l.b16 %v3129
      %v3228 = vunpack.c.l.b16 %v3130
      %v3229 = vunpack.c.l.b16 %v3131
      %v3230 = vunpack.c.l.b16 %v3132
      %v3231 = vunpack.c.l.b16 %v3133
      %v3232 = vunpack.c.l.b16 %v3134
      %v3233 = vunpack.c.l.b16 %v3135
      %v3234 = vunpack.c.l.b16 %v3136
      %v3235 = vunpack.c.l.b16 %v3137
      %v3236 = vunpack.c.l.b16 %v3138
      %v3237 = vunpack.c.l.b16 %v3139
      %v3238 = vunpack.c.l.b16 %v3140
      %v3239 = vunpack.c.l.b16 %v3141
      %v3240 = vunpack.c.l.b16 %v3142
      %v3241 = vunpack.c.l.b16 %v3143
      %v3242 = vunpack.c.l.b16 %v3144
      %v3243 = vunpack.c.l.b16 %v3145
      %v3244 = vunpack.c.l.b16 %v3146
      %v3245 = vunpack.c.l.b16 %v3147
      %v3246 = vunpack.c.l.b16 %v3148
      %v3247 = vunpack.c.l.b16 %v3149
      %v3248 = vunpack.c.l.b16 %v3150
      %v3249 = vunpack.c.l.b16 %v3151
      %v3250 = vunpack.c.l.b16 %v3152
      %v3251 = vunpack.c.l.b16 %v3153
      %v3252 = vunpack.c.l.b16 %v3154
      %v3253 = vunpack.c.l.b16 %v3155
      %v3254 = vunpack.c.l.b16 %v3156
      %v3255 = vunpack.c.l.b16 %v3157
      %v3256 = vunpack.c.l.b16 %v3158
      %v3257 = vunpack.c.l.b16 %v3159
      %v3258 = vunpack.c.l.b16 %v3160
      %v3259 = vunpack.c.l.b16 %v3161
      %v3260 = vunpack.c.l.b16 %v3162
      %v3261 = vunpack.c.l.b16 %v3163
      %v3262 = vpack.c.b16 %v3215, %v3214
      %v3263 = vpack.c.b16 %v3217, %v3216
      %v3264 = vpack.c.b16 %v3219, %v3218
      %v3265 = vpack.c.b16 %v3221, %v3220
      %v3266 = vpack.c.b16 %v3223, %v3222
      %v3267 = vpack.c.b16 %v3225, %v3224
      %v3268 = vpack.c.b16 %v3227, %v3226
      %v3269 = vpack.c.b16 %v3229, %v3228
      %v3270 = vpack.c.b16 %v3231, %v3230
      %v3271 = vpack.c.b16 %v3233, %v3232
      %v3272 = vpack.c.b16 %v3235, %v3234
      %v3273 = vpack.c.b16 %v3237, %v3236
      %v3274 = vpack.c.b16 %v3239, %v3238
      %v3275 = vpack.c.b16 %v3241, %v3240
      %v3276 = vpack.c.b16 %v3243, %v3242
      %v3277 = vpack.c.b16 %v3245, %v3244
      %v3278 = vpack.c.b16 %v3247, %v3246
      %v3279 = vpack.c.b16 %v3249, %v3248
      %v3280 = vpack.c.b16 %v3251, %v3250
      %v3281 = vpack.c.b16 %v3253, %v3252
      %v3282 = vpack.c.b16 %v3255, %v3254
      %v3283 = vpack.c.b16 %v3257, %v3256
      %v3284 = vpack.c.b16 %v3259, %v3258
      %v3285 = vpack.c.b16 %v3261, %v3260
      %v3287 = vsel %vm2422, %v3262, 0
      %v3290 = vsel %vm2422, %v3263, 0
      %v3293 = vsel %vm2422, %v3264, 0
      %v3296 = vsel %vm2422, %v3265, 0
      %v3299 = vsel %vm2422, %v3266, 0
      %v3302 = vsel %vm2422, %v3267, 0
      %v3305 = vsel %vm2422, %v3268, 0
      %v3308 = vsel %vm2422, %v3269, 0
      %v3311 = vsel %vm2422, %v3270, 0
      %v3314 = vsel %vm2422, %v3271, 0
      %v3317 = vsel %vm2422, %v3272, 0
      %v3320 = vsel %vm2422, %v3273, 0
      %v3323 = vsel %vm2422, %v3274, 0
      %v3326 = vsel %vm2422, %v3275, 0
      %v3329 = vsel %vm2422, %v3276, 0
      %v3332 = vsel %vm2422, %v3277, 0
      %v3335 = vsel %vm2422, %v3278, 0
      %v3338 = vsel %vm2422, %v3279, 0
      %v3341 = vsel %vm2422, %v3280, 0
      %v3344 = vsel %vm2422, %v3281, 0
      %v3347 = vsel %vm2422, %v3282, 0
      %v3350 = vsel %vm2422, %v3283, 0
      %v3353 = vsel %vm2422, %v3284, 0
      %v3356 = vsel %vm2422, %v3285, 0
      %v3359 = vsel %vm2495, %v3165, 0
      %3361 = vmatpush.bf16.msra.mxu0 0
      %3362 = vmatpush.bf16.msra.mxu0 0
      %3363 = vmatpush.bf16.msra.mxu0 0
      %3364 = vmatpush.bf16.msra.mxu0 0
      %3365 = vmatpush.bf16.msra.mxu0 0
      %3366 = vmatpush.bf16.msra.mxu0 0
      %3367 = vmatpush.bf16.msra.mxu0 0
      %3368 = vmatpush.bf16.msra.mxu0 %v3359
      %3369 = vmatmul.bf16.gmra.mxu0 %v3287
      %v3370 = vpop.f32.mrf.mxu0
      %v3371 = vadd.f32 0.0, %v3370
      %v3372 = vpop.f32.mrf.mxu0
      %v3373 = vadd.f32 0.0, %v3372
      %3374 = vmatmul.bf16.gmra.mxu0 %v3290
      %v3375 = vpop.f32.mrf.mxu0
      %v3376 = vadd.f32 0.0, %v3375
      %v3377 = vpop.f32.mrf.mxu0
      %v3378 = vadd.f32 0.0, %v3377
      %3379 = vmatmul.bf16.gmra.mxu0 %v3293
      %v3380 = vpop.f32.mrf.mxu0
      %v3381 = vadd.f32 0.0, %v3380
      %v3382 = vpop.f32.mrf.mxu0
      %v3383 = vadd.f32 0.0, %v3382
      %3384 = vmatmul.bf16.gmra.mxu0 %v3296
      %v3385 = vpop.f32.mrf.mxu0
      %v3386 = vadd.f32 0.0, %v3385
      %v3387 = vpop.f32.mrf.mxu0
      %v3388 = vadd.f32 0.0, %v3387
      %3389 = vmatmul.bf16.gmra.mxu0 %v3299
      %v3390 = vpop.f32.mrf.mxu0
      %v3391 = vadd.f32 0.0, %v3390
      %v3392 = vpop.f32.mrf.mxu0
      %v3393 = vadd.f32 0.0, %v3392
      %3394 = vmatmul.bf16.gmra.mxu0 %v3302
      %v3395 = vpop.f32.mrf.mxu0
      %v3396 = vadd.f32 0.0, %v3395
      %v3397 = vpop.f32.mrf.mxu0
      %v3398 = vadd.f32 0.0, %v3397
      %3399 = vmatmul.bf16.gmra.mxu0 %v3305
      %v3400 = vpop.f32.mrf.mxu0
      %v3401 = vadd.f32 0.0, %v3400
      %v3402 = vpop.f32.mrf.mxu0
      %v3403 = vadd.f32 0.0, %v3402
      %3404 = vmatmul.bf16.gmra.mxu0 %v3308
      %v3405 = vpop.f32.mrf.mxu0
      %v3406 = vadd.f32 0.0, %v3405
      %v3407 = vpop.f32.mrf.mxu0
      %v3408 = vadd.f32 0.0, %v3407
      %3409 = vmatmul.bf16.gmra.mxu0 %v3311
      %v3410 = vpop.f32.mrf.mxu0
      %v3411 = vadd.f32 0.0, %v3410
      %v3412 = vpop.f32.mrf.mxu0
      %v3413 = vadd.f32 0.0, %v3412
      %3414 = vmatmul.bf16.gmra.mxu0 %v3314
      %v3415 = vpop.f32.mrf.mxu0
      %v3416 = vadd.f32 0.0, %v3415
      %v3417 = vpop.f32.mrf.mxu0
      %v3418 = vadd.f32 0.0, %v3417
      %3419 = vmatmul.bf16.gmra.mxu0 %v3317
      %v3420 = vpop.f32.mrf.mxu0
      %v3421 = vadd.f32 0.0, %v3420
      %v3422 = vpop.f32.mrf.mxu0
      %v3423 = vadd.f32 0.0, %v3422
      %3424 = vmatmul.bf16.gmra.mxu0 %v3320
      %v3425 = vpop.f32.mrf.mxu0
      %v3426 = vadd.f32 0.0, %v3425
      %v3427 = vpop.f32.mrf.mxu0
      %v3428 = vadd.f32 0.0, %v3427
      %3429 = vmatmul.bf16.gmra.mxu0 %v3323
      %v3430 = vpop.f32.mrf.mxu0
      %v3431 = vadd.f32 0.0, %v3430
      %v3432 = vpop.f32.mrf.mxu0
      %v3433 = vadd.f32 0.0, %v3432
      %3434 = vmatmul.bf16.gmra.mxu0 %v3326
      %v3435 = vpop.f32.mrf.mxu0
      %v3436 = vadd.f32 0.0, %v3435
      %v3437 = vpop.f32.mrf.mxu0
      %v3438 = vadd.f32 0.0, %v3437
      %3439 = vmatmul.bf16.gmra.mxu0 %v3329
      %v3440 = vpop.f32.mrf.mxu0
      %v3441 = vadd.f32 0.0, %v3440
      %v3442 = vpop.f32.mrf.mxu0
      %v3443 = vadd.f32 0.0, %v3442
      %3444 = vmatmul.bf16.gmra.mxu0 %v3332
      %v3445 = vpop.f32.mrf.mxu0
      %v3446 = vadd.f32 0.0, %v3445
      %v3447 = vpop.f32.mrf.mxu0
      %v3448 = vadd.f32 0.0, %v3447
      %3449 = vmatmul.bf16.gmra.mxu0 %v3335
      %v3450 = vpop.f32.mrf.mxu0
      %v3451 = vadd.f32 0.0, %v3450
      %v3452 = vpop.f32.mrf.mxu0
      %v3453 = vadd.f32 0.0, %v3452
      %3454 = vmatmul.bf16.gmra.mxu0 %v3338
      %v3455 = vpop.f32.mrf.mxu0
      %v3456 = vadd.f32 0.0, %v3455
      %v3457 = vpop.f32.mrf.mxu0
      %v3458 = vadd.f32 0.0, %v3457
      %3459 = vmatmul.bf16.gmra.mxu0 %v3341
      %v3460 = vpop.f32.mrf.mxu0
      %v3461 = vadd.f32 0.0, %v3460
      %v3462 = vpop.f32.mrf.mxu0
      %v3463 = vadd.f32 0.0, %v3462
      %3464 = vmatmul.bf16.gmra.mxu0 %v3344
      %v3465 = vpop.f32.mrf.mxu0
      %v3466 = vadd.f32 0.0, %v3465
      %v3467 = vpop.f32.mrf.mxu0
      %v3468 = vadd.f32 0.0, %v3467
      %3469 = vmatmul.bf16.gmra.mxu0 %v3347
      %v3470 = vpop.f32.mrf.mxu0
      %v3471 = vadd.f32 0.0, %v3470
      %v3472 = vpop.f32.mrf.mxu0
      %v3473 = vadd.f32 0.0, %v3472
      %3474 = vmatmul.bf16.gmra.mxu0 %v3350
      %v3475 = vpop.f32.mrf.mxu0
      %v3476 = vadd.f32 0.0, %v3475
      %v3477 = vpop.f32.mrf.mxu0
      %v3478 = vadd.f32 0.0, %v3477
      %3479 = vmatmul.bf16.gmra.mxu0 %v3353
      %v3480 = vpop.f32.mrf.mxu0
      %v3481 = vadd.f32 0.0, %v3480
      %v3482 = vpop.f32.mrf.mxu0
      %v3483 = vadd.f32 0.0, %v3482
      %3484 = vmatmul.bf16.gmra.mxu0 %v3356
      %v3485 = vpop.f32.mrf.mxu0
      %v3486 = vadd.f32 0.0, %v3485
      %v3487 = vpop.f32.mrf.mxu0
      %v3488 = vadd.f32 0.0, %v3487
      %3489 = vdwg.mxu0
      %v3490 = vadd.f32 %v3068, %v3371
      %v3491 = vadd.f32 %v3069, %v3373
      %v3492 = vadd.f32 %v3070, %v3376
      %v3493 = vadd.f32 %v3071, %v3378
      %v3494 = vadd.f32 %v3072, %v3381
      %v3495 = vadd.f32 %v3073, %v3383
      %v3496 = vadd.f32 %v3074, %v3386
      %v3497 = vadd.f32 %v3075, %v3388
      %v3498 = vadd.f32 %v3076, %v3391
      %v3499 = vadd.f32 %v3077, %v3393
      %v3500 = vadd.f32 %v3078, %v3396
      %v3501 = vadd.f32 %v3079, %v3398
      %v3502 = vadd.f32 %v3080, %v3401
      %v3503 = vadd.f32 %v3081, %v3403
      %v3504 = vadd.f32 %v3082, %v3406
      %v3505 = vadd.f32 %v3083, %v3408
      %v3506 = vadd.f32 %v3084, %v3411
      %v3507 = vadd.f32 %v3085, %v3413
      %v3508 = vadd.f32 %v3086, %v3416
      %v3509 = vadd.f32 %v3087, %v3418
      %v3510 = vadd.f32 %v3088, %v3421
      %v3511 = vadd.f32 %v3089, %v3423
      %v3512 = vadd.f32 %v3090, %v3426
      %v3513 = vadd.f32 %v3091, %v3428
      %v3514 = vadd.f32 %v3092, %v3431
      %v3515 = vadd.f32 %v3093, %v3433
      %v3516 = vadd.f32 %v3094, %v3436
      %v3517 = vadd.f32 %v3095, %v3438
      %v3518 = vadd.f32 %v3096, %v3441
      %v3519 = vadd.f32 %v3097, %v3443
      %v3520 = vadd.f32 %v3098, %v3446
      %v3521 = vadd.f32 %v3099, %v3448
      %v3522 = vadd.f32 %v3100, %v3451
      %v3523 = vadd.f32 %v3101, %v3453
      %v3524 = vadd.f32 %v3102, %v3456
      %v3525 = vadd.f32 %v3103, %v3458
      %v3526 = vadd.f32 %v3104, %v3461
      %v3527 = vadd.f32 %v3105, %v3463
      %v3528 = vadd.f32 %v3106, %v3466
      %v3529 = vadd.f32 %v3107, %v3468
      %v3530 = vadd.f32 %v3108, %v3471
      %v3531 = vadd.f32 %v3109, %v3473
      %v3532 = vadd.f32 %v3110, %v3476
      %v3533 = vadd.f32 %v3111, %v3478
      %v3534 = vadd.f32 %v3112, %v3481
      %v3535 = vadd.f32 %v3113, %v3483
      %v3536 = vadd.f32 %v3114, %v3486
      %v3537 = vadd.f32 %v3115, %v3488
      %v3538 = vld [vmem:[%s207 + $0xc] sm:$0xf]
      %v3539 = vld [vmem:[%s207 + $0x10] sm:$0xf]
      %v3540 = vld [vmem:[%s207 + $0x14] sm:$0xf]
      %v3541 = vld [vmem:[%s207 + $0x18] sm:$0xf]
      %v3542 = vld [vmem:[%s207 + $0x1c] sm:$0xf]
      %v3543 = vld [vmem:[%s207 + $0x20] sm:$0xf]
      %v3544 = vld [vmem:[%s207 + $0x24] sm:$0xf]
      %v3545 = vld [vmem:[%s207 + $0x28] sm:$0xf]
      %v3546 = vld [vmem:[%s207 + $0x2c] sm:$0xf]
      %v3547 = vld [vmem:[%s207 + $0x30] sm:$0xf]
      %v3548 = vld [vmem:[%s207 + $0x34] sm:$0xf]
      %v3549 = vld [vmem:[%s207 + $0x38] sm:$0xf]
      %v3550 = vld [vmem:[%s207 + $0x3c] sm:$0xf]
      %v3551 = vld [vmem:[%s207 + $0x40] sm:$0xf]
      %v3552 = vld [vmem:[%s207 + $0x44] sm:$0xf]
      %v3553 = vld [vmem:[%s207 + $0x48] sm:$0xf]
      %v3554 = vld [vmem:[%s207 + $0x4c] sm:$0xf]
      %v3555 = vld [vmem:[%s207 + $0x50] sm:$0xf]
      %v3556 = vld [vmem:[%s207 + $0x54] sm:$0xf]
      %v3557 = vld [vmem:[%s207 + $0x58] sm:$0xf]
      %v3558 = vld [vmem:[%s207 + $0x5c] sm:$0xf]
      %v3559 = vld [vmem:[%s207 + $0x60] sm:$0xf]
      %v3560 = vld [vmem:[%s207 + $0x64] sm:$0xf]
      %v3561 = vld [vmem:[%s207 + $0x68] sm:$0xf]
      %v3562 = vld [vmem:[%s207 + $0x6c] sm:$0xf]
      %v3563 = vld [vmem:[%s207 + $0x70] sm:$0xf]
      %v3564 = vld [vmem:[%s207 + $0x74] sm:$0xf]
      %v3565 = vld [vmem:[%s207 + $0x78] sm:$0xf]
      %v3566 = vld [vmem:[%s207 + $0x7c] sm:$0xf]
      %v3567 = vld [vmem:[%s207 + $0x80] sm:$0xf]
      %v3568 = vld [vmem:[%s207 + $0x84] sm:$0xf]
      %v3569 = vld [vmem:[%s207 + $0x88] sm:$0xf]
      %v3570 = vld [vmem:[%s207 + $0x8c] sm:$0xf]
      %v3571 = vld [vmem:[%s207 + $0x90] sm:$0xf]
      %v3572 = vld [vmem:[%s207 + $0x94] sm:$0xf]
      %v3573 = vld [vmem:[%s207 + $0x98] sm:$0xf]
      %v3574 = vld [vmem:[%s207 + $0x9c] sm:$0xf]
      %v3575 = vld [vmem:[%s207 + $0xa0] sm:$0xf]
      %v3576 = vld [vmem:[%s207 + $0xa4] sm:$0xf]
      %v3577 = vld [vmem:[%s207 + $0xa8] sm:$0xf]
      %v3578 = vld [vmem:[%s207 + $0xac] sm:$0xf]
      %v3579 = vld [vmem:[%s207 + $0xb0] sm:$0xf]
      %v3580 = vld [vmem:[%s207 + $0xb4] sm:$0xf]
      %v3581 = vld [vmem:[%s207 + $0xb8] sm:$0xf]
      %v3582 = vld [vmem:[%s207 + $0xbc] sm:$0xf]
      %v3583 = vld [vmem:[%s207 + $0xc0] sm:$0xf]
      %v3584 = vld [vmem:[%s207 + $0xc4] sm:$0xf]
      %v3585 = vld [vmem:[%s207 + $0xc8] sm:$0xf]
      %v3586 = vld [vmem:[%s207 + $0xcc] sm:$0x1]
      %s3587 = scalar_lea.vmem %s1, 8
      %v3588 = vld [vmem:[%s3587] sm:$0x3]
      %v3638 = vunpack.c.l.b16 %v3538
      %v3639 = vunpack.c.l.b16 %v3539
      %v3640 = vunpack.c.l.b16 %v3540
      %v3641 = vunpack.c.l.b16 %v3541
      %v3642 = vunpack.c.l.b16 %v3542
      %v3643 = vunpack.c.l.b16 %v3543
      %v3644 = vunpack.c.l.b16 %v3544
      %v3645 = vunpack.c.l.b16 %v3545
      %v3646 = vunpack.c.l.b16 %v3546
      %v3647 = vunpack.c.l.b16 %v3547
      %v3648 = vunpack.c.l.b16 %v3548
      %v3649 = vunpack.c.l.b16 %v3549
      %v3650 = vunpack.c.l.b16 %v3550
      %v3651 = vunpack.c.l.b16 %v3551
      %v3652 = vunpack.c.l.b16 %v3552
      %v3653 = vunpack.c.l.b16 %v3553
      %v3654 = vunpack.c.l.b16 %v3554
      %v3655 = vunpack.c.l.b16 %v3555
      %v3656 = vunpack.c.l.b16 %v3556
      %v3657 = vunpack.c.l.b16 %v3557
      %v3658 = vunpack.c.l.b16 %v3558
      %v3659 = vunpack.c.l.b16 %v3559
      %v3660 = vunpack.c.l.b16 %v3560
      %v3661 = vunpack.c.l.b16 %v3561
      %v3662 = vunpack.c.l.b16 %v3562
      %v3663 = vunpack.c.l.b16 %v3563
      %v3664 = vunpack.c.l.b16 %v3564
      %v3665 = vunpack.c.l.b16 %v3565
      %v3666 = vunpack.c.l.b16 %v3566
      %v3667 = vunpack.c.l.b16 %v3567
      %v3668 = vunpack.c.l.b16 %v3568
      %v3669 = vunpack.c.l.b16 %v3569
      %v3670 = vunpack.c.l.b16 %v3570
      %v3671 = vunpack.c.l.b16 %v3571
      %v3672 = vunpack.c.l.b16 %v3572
      %v3673 = vunpack.c.l.b16 %v3573
      %v3674 = vunpack.c.l.b16 %v3574
      %v3675 = vunpack.c.l.b16 %v3575
      %v3676 = vunpack.c.l.b16 %v3576
      %v3677 = vunpack.c.l.b16 %v3577
      %v3678 = vunpack.c.l.b16 %v3578
      %v3679 = vunpack.c.l.b16 %v3579
      %v3680 = vunpack.c.l.b16 %v3580
      %v3681 = vunpack.c.l.b16 %v3581
      %v3682 = vunpack.c.l.b16 %v3582
      %v3683 = vunpack.c.l.b16 %v3583
      %v3684 = vunpack.c.l.b16 %v3584
      %v3685 = vunpack.c.l.b16 %v3585
      %v3686 = vunpack.c.l.b16 %v3586
      %v3687 = vpack.c.b16 %v3639, %v3638
      %v3688 = vpack.c.b16 %v3641, %v3640
      %v3689 = vpack.c.b16 %v3643, %v3642
      %v3690 = vpack.c.b16 %v3645, %v3644
      %v3691 = vpack.c.b16 %v3647, %v3646
      %v3692 = vpack.c.b16 %v3649, %v3648
      %v3693 = vpack.c.b16 %v3651, %v3650
      %v3694 = vpack.c.b16 %v3653, %v3652
      %v3695 = vpack.c.b16 %v3655, %v3654
      %v3696 = vpack.c.b16 %v3657, %v3656
      %v3697 = vpack.c.b16 %v3659, %v3658
      %v3698 = vpack.c.b16 %v3661, %v3660
      %v3699 = vpack.c.b16 %v3663, %v3662
      %v3700 = vpack.c.b16 %v3665, %v3664
      %v3701 = vpack.c.b16 %v3667, %v3666
      %v3702 = vpack.c.b16 %v3669, %v3668
      %v3703 = vpack.c.b16 %v3671, %v3670
      %v3704 = vpack.c.b16 %v3673, %v3672
      %v3705 = vpack.c.b16 %v3675, %v3674
      %v3706 = vpack.c.b16 %v3677, %v3676
      %v3707 = vpack.c.b16 %v3679, %v3678
      %v3708 = vpack.c.b16 %v3681, %v3680
      %v3709 = vpack.c.b16 %v3683, %v3682
      %v3710 = vpack.c.b16 %v3685, %v3684
      %v3711 = vpack.c.b16 %v3686, %v3686
      %v3713 = vshrl.u32 %v3687, 16
      %v3715 = vshll.u32 %v3687, 16
      %v3717 = vrot.slane %v3715, 1
      %v3718 = vor.u32 %v3713, %v3717
      %v3720 = vshll.u32 %v3688, 16
      %v3722 = vrot.slane %v3720, 1
      %v3723 = vsel %vm2225, %v3718, %v3722
      %v3724 = vshrl.u32 %v3688, 16
      %v3726 = vor.u32 %v3724, %v3722
      %v3728 = vshll.u32 %v3689, 16
      %v3730 = vrot.slane %v3728, 1
      %v3731 = vsel %vm2225, %v3726, %v3730
      %v3732 = vshrl.u32 %v3689, 16
      %v3734 = vor.u32 %v3732, %v3730
      %v3736 = vshll.u32 %v3690, 16
      %v3738 = vrot.slane %v3736, 1
      %v3739 = vsel %vm2225, %v3734, %v3738
      %v3740 = vshrl.u32 %v3690, 16
      %v3742 = vor.u32 %v3740, %v3738
      %v3744 = vshll.u32 %v3691, 16
      %v3746 = vrot.slane %v3744, 1
      %v3747 = vsel %vm2225, %v3742, %v3746
      %v3748 = vshrl.u32 %v3691, 16
      %v3750 = vor.u32 %v3748, %v3746
      %v3752 = vshll.u32 %v3692, 16
      %v3754 = vrot.slane %v3752, 1
      %v3755 = vsel %vm2225, %v3750, %v3754
      %v3756 = vshrl.u32 %v3692, 16
      %v3758 = vor.u32 %v3756, %v3754
      %v3760 = vshll.u32 %v3693, 16
      %v3762 = vrot.slane %v3760, 1
      %v3763 = vsel %vm2225, %v3758, %v3762
      %v3764 = vshrl.u32 %v3693, 16
      %v3766 = vor.u32 %v3764, %v3762
      %v3768 = vshll.u32 %v3694, 16
      %v3770 = vrot.slane %v3768, 1
      %v3771 = vsel %vm2225, %v3766, %v3770
      %v3772 = vshrl.u32 %v3694, 16
      %v3774 = vor.u32 %v3772, %v3770
      %v3776 = vshll.u32 %v3695, 16
      %v3778 = vrot.slane %v3776, 1
      %v3779 = vsel %vm2225, %v3774, %v3778
      %v3780 = vshrl.u32 %v3695, 16
      %v3782 = vor.u32 %v3780, %v3778
      %v3784 = vshll.u32 %v3696, 16
      %v3786 = vrot.slane %v3784, 1
      %v3787 = vsel %vm2225, %v3782, %v3786
      %v3788 = vshrl.u32 %v3696, 16
      %v3790 = vor.u32 %v3788, %v3786
      %v3792 = vshll.u32 %v3697, 16
      %v3794 = vrot.slane %v3792, 1
      %v3795 = vsel %vm2225, %v3790, %v3794
      %v3796 = vshrl.u32 %v3697, 16
      %v3798 = vor.u32 %v3796, %v3794
      %v3800 = vshll.u32 %v3698, 16
      %v3802 = vrot.slane %v3800, 1
      %v3803 = vsel %vm2225, %v3798, %v3802
      %v3804 = vshrl.u32 %v3698, 16
      %v3806 = vor.u32 %v3804, %v3802
      %v3808 = vshll.u32 %v3699, 16
      %v3810 = vrot.slane %v3808, 1
      %v3811 = vsel %vm2225, %v3806, %v3810
      %v3812 = vshrl.u32 %v3699, 16
      %v3814 = vor.u32 %v3812, %v3810
      %v3816 = vshll.u32 %v3700, 16
      %v3818 = vrot.slane %v3816, 1
      %v3819 = vsel %vm2225, %v3814, %v3818
      %v3820 = vshrl.u32 %v3700, 16
      %v3822 = vor.u32 %v3820, %v3818
      %v3824 = vshll.u32 %v3701, 16
      %v3826 = vrot.slane %v3824, 1
      %v3827 = vsel %vm2225, %v3822, %v3826
      %v3828 = vshrl.u32 %v3701, 16
      %v3830 = vor.u32 %v3828, %v3826
      %v3832 = vshll.u32 %v3702, 16
      %v3834 = vrot.slane %v3832, 1
      %v3835 = vsel %vm2225, %v3830, %v3834
      %v3836 = vshrl.u32 %v3702, 16
      %v3838 = vor.u32 %v3836, %v3834
      %v3840 = vshll.u32 %v3703, 16
      %v3842 = vrot.slane %v3840, 1
      %v3843 = vsel %vm2225, %v3838, %v3842
      %v3844 = vshrl.u32 %v3703, 16
      %v3846 = vor.u32 %v3844, %v3842
      %v3848 = vshll.u32 %v3704, 16
      %v3850 = vrot.slane %v3848, 1
      %v3851 = vsel %vm2225, %v3846, %v3850
      %v3852 = vshrl.u32 %v3704, 16
      %v3854 = vor.u32 %v3852, %v3850
      %v3856 = vshll.u32 %v3705, 16
      %v3858 = vrot.slane %v3856, 1
      %v3859 = vsel %vm2225, %v3854, %v3858
      %v3860 = vshrl.u32 %v3705, 16
      %v3862 = vor.u32 %v3860, %v3858
      %v3864 = vshll.u32 %v3706, 16
      %v3866 = vrot.slane %v3864, 1
      %v3867 = vsel %vm2225, %v3862, %v3866
      %v3868 = vshrl.u32 %v3706, 16
      %v3870 = vor.u32 %v3868, %v3866
      %v3872 = vshll.u32 %v3707, 16
      %v3874 = vrot.slane %v3872, 1
      %v3875 = vsel %vm2225, %v3870, %v3874
      %v3876 = vshrl.u32 %v3707, 16
      %v3878 = vor.u32 %v3876, %v3874
      %v3880 = vshll.u32 %v3708, 16
      %v3882 = vrot.slane %v3880, 1
      %v3883 = vsel %vm2225, %v3878, %v3882
      %v3884 = vshrl.u32 %v3708, 16
      %v3886 = vor.u32 %v3884, %v3882
      %v3888 = vshll.u32 %v3709, 16
      %v3890 = vrot.slane %v3888, 1
      %v3891 = vsel %vm2225, %v3886, %v3890
      %v3892 = vshrl.u32 %v3709, 16
      %v3894 = vor.u32 %v3892, %v3890
      %v3896 = vshll.u32 %v3710, 16
      %v3898 = vrot.slane %v3896, 1
      %v3899 = vsel %vm2225, %v3894, %v3898
      %v3900 = vshrl.u32 %v3710, 16
      %v3902 = vor.u32 %v3900, %v3898
      %v3904 = vshll.u32 %v3711, 16
      %v3906 = vrot.slane %v3904, 1
      %v3907 = vsel %vm2225, %v3902, %v3906
      %v3909 = vsel %vm2422, %v3723, 0
      %v3912 = vsel %vm2422, %v3731, 0
      %v3915 = vsel %vm2422, %v3739, 0
      %v3918 = vsel %vm2422, %v3747, 0
      %v3921 = vsel %vm2422, %v3755, 0
      %v3924 = vsel %vm2422, %v3763, 0
      %v3927 = vsel %vm2422, %v3771, 0
      %v3930 = vsel %vm2422, %v3779, 0
      %v3933 = vsel %vm2422, %v3787, 0
      %v3936 = vsel %vm2422, %v3795, 0
      %v3939 = vsel %vm2422, %v3803, 0
      %v3942 = vsel %vm2422, %v3811, 0
      %v3945 = vsel %vm2422, %v3819, 0
      %v3948 = vsel %vm2422, %v3827, 0
      %v3951 = vsel %vm2422, %v3835, 0
      %v3954 = vsel %vm2422, %v3843, 0
      %v3957 = vsel %vm2422, %v3851, 0
      %v3960 = vsel %vm2422, %v3859, 0
      %v3963 = vsel %vm2422, %v3867, 0
      %v3966 = vsel %vm2422, %v3875, 0
      %v3969 = vsel %vm2422, %v3883, 0
      %v3972 = vsel %vm2422, %v3891, 0
      %v3975 = vsel %vm2422, %v3899, 0
      %v3978 = vsel %vm2422, %v3907, 0
      %v3981 = vsel %vm2495, %v3588, 0
      %3983 = vmatpush.bf16.msra.mxu0 0
      %3984 = vmatpush.bf16.msra.mxu0 0
      %3985 = vmatpush.bf16.msra.mxu0 0
      %3986 = vmatpush.bf16.msra.mxu0 0
      %3987 = vmatpush.bf16.msra.mxu0 0
      %3988 = vmatpush.bf16.msra.mxu0 0
      %3989 = vmatpush.bf16.msra.mxu0 0
      %3990 = vmatpush.bf16.msra.mxu0 %v3981
      %3991 = vmatmul.bf16.gmra.mxu0 %v3909
      %v3992 = vpop.f32.mrf.mxu0
      %v3993 = vadd.f32 0.0, %v3992
      %v3994 = vpop.f32.mrf.mxu0
      %v3995 = vadd.f32 0.0, %v3994
      %3996 = vmatmul.bf16.gmra.mxu0 %v3912
      %v3997 = vpop.f32.mrf.mxu0
      %v3998 = vadd.f32 0.0, %v3997
      %v3999 = vpop.f32.mrf.mxu0
      %v4000 = vadd.f32 0.0, %v3999
      %4001 = vmatmul.bf16.gmra.mxu0 %v3915
      %v4002 = vpop.f32.mrf.mxu0
      %v4003 = vadd.f32 0.0, %v4002
      %v4004 = vpop.f32.mrf.mxu0
      %v4005 = vadd.f32 0.0, %v4004
      %4006 = vmatmul.bf16.gmra.mxu0 %v3918
      %v4007 = vpop.f32.mrf.mxu0
      %v4008 = vadd.f32 0.0, %v4007
      %v4009 = vpop.f32.mrf.mxu0
      %v4010 = vadd.f32 0.0, %v4009
      %4011 = vmatmul.bf16.gmra.mxu0 %v3921
      %v4012 = vpop.f32.mrf.mxu0
      %v4013 = vadd.f32 0.0, %v4012
      %v4014 = vpop.f32.mrf.mxu0
      %v4015 = vadd.f32 0.0, %v4014
      %4016 = vmatmul.bf16.gmra.mxu0 %v3924
      %v4017 = vpop.f32.mrf.mxu0
      %v4018 = vadd.f32 0.0, %v4017
      %v4019 = vpop.f32.mrf.mxu0
      %v4020 = vadd.f32 0.0, %v4019
      %4021 = vmatmul.bf16.gmra.mxu0 %v3927
      %v4022 = vpop.f32.mrf.mxu0
      %v4023 = vadd.f32 0.0, %v4022
      %v4024 = vpop.f32.mrf.mxu0
      %v4025 = vadd.f32 0.0, %v4024
      %4026 = vmatmul.bf16.gmra.mxu0 %v3930
      %v4027 = vpop.f32.mrf.mxu0
      %v4028 = vadd.f32 0.0, %v4027
      %v4029 = vpop.f32.mrf.mxu0
      %v4030 = vadd.f32 0.0, %v4029
      %4031 = vmatmul.bf16.gmra.mxu0 %v3933
      %v4032 = vpop.f32.mrf.mxu0
      %v4033 = vadd.f32 0.0, %v4032
      %v4034 = vpop.f32.mrf.mxu0
      %v4035 = vadd.f32 0.0, %v4034
      %4036 = vmatmul.bf16.gmra.mxu0 %v3936
      %v4037 = vpop.f32.mrf.mxu0
      %v4038 = vadd.f32 0.0, %v4037
      %v4039 = vpop.f32.mrf.mxu0
      %v4040 = vadd.f32 0.0, %v4039
      %4041 = vmatmul.bf16.gmra.mxu0 %v3939
      %v4042 = vpop.f32.mrf.mxu0
      %v4043 = vadd.f32 0.0, %v4042
      %v4044 = vpop.f32.mrf.mxu0
      %v4045 = vadd.f32 0.0, %v4044
      %4046 = vmatmul.bf16.gmra.mxu0 %v3942
      %v4047 = vpop.f32.mrf.mxu0
      %v4048 = vadd.f32 0.0, %v4047
      %v4049 = vpop.f32.mrf.mxu0
      %v4050 = vadd.f32 0.0, %v4049
      %4051 = vmatmul.bf16.gmra.mxu0 %v3945
      %v4052 = vpop.f32.mrf.mxu0
      %v4053 = vadd.f32 0.0, %v4052
      %v4054 = vpop.f32.mrf.mxu0
      %v4055 = vadd.f32 0.0, %v4054
      %4056 = vmatmul.bf16.gmra.mxu0 %v3948
      %v4057 = vpop.f32.mrf.mxu0
      %v4058 = vadd.f32 0.0, %v4057
      %v4059 = vpop.f32.mrf.mxu0
      %v4060 = vadd.f32 0.0, %v4059
      %4061 = vmatmul.bf16.gmra.mxu0 %v3951
      %v4062 = vpop.f32.mrf.mxu0
      %v4063 = vadd.f32 0.0, %v4062
      %v4064 = vpop.f32.mrf.mxu0
      %v4065 = vadd.f32 0.0, %v4064
      %4066 = vmatmul.bf16.gmra.mxu0 %v3954
      %v4067 = vpop.f32.mrf.mxu0
      %v4068 = vadd.f32 0.0, %v4067
      %v4069 = vpop.f32.mrf.mxu0
      %v4070 = vadd.f32 0.0, %v4069
      %4071 = vmatmul.bf16.gmra.mxu0 %v3957
      %v4072 = vpop.f32.mrf.mxu0
      %v4073 = vadd.f32 0.0, %v4072
      %v4074 = vpop.f32.mrf.mxu0
      %v4075 = vadd.f32 0.0, %v4074
      %4076 = vmatmul.bf16.gmra.mxu0 %v3960
      %v4077 = vpop.f32.mrf.mxu0
      %v4078 = vadd.f32 0.0, %v4077
      %v4079 = vpop.f32.mrf.mxu0
      %v4080 = vadd.f32 0.0, %v4079
      %4081 = vmatmul.bf16.gmra.mxu0 %v3963
      %v4082 = vpop.f32.mrf.mxu0
      %v4083 = vadd.f32 0.0, %v4082
      %v4084 = vpop.f32.mrf.mxu0
      %v4085 = vadd.f32 0.0, %v4084
      %4086 = vmatmul.bf16.gmra.mxu0 %v3966
      %v4087 = vpop.f32.mrf.mxu0
      %v4088 = vadd.f32 0.0, %v4087
      %v4089 = vpop.f32.mrf.mxu0
      %v4090 = vadd.f32 0.0, %v4089
      %4091 = vmatmul.bf16.gmra.mxu0 %v3969
      %v4092 = vpop.f32.mrf.mxu0
      %v4093 = vadd.f32 0.0, %v4092
      %v4094 = vpop.f32.mrf.mxu0
      %v4095 = vadd.f32 0.0, %v4094
      %4096 = vmatmul.bf16.gmra.mxu0 %v3972
      %v4097 = vpop.f32.mrf.mxu0
      %v4098 = vadd.f32 0.0, %v4097
      %v4099 = vpop.f32.mrf.mxu0
      %v4100 = vadd.f32 0.0, %v4099
      %4101 = vmatmul.bf16.gmra.mxu0 %v3975
      %v4102 = vpop.f32.mrf.mxu0
      %v4103 = vadd.f32 0.0, %v4102
      %v4104 = vpop.f32.mrf.mxu0
      %v4105 = vadd.f32 0.0, %v4104
      %4106 = vmatmul.bf16.gmra.mxu0 %v3978
      %v4107 = vpop.f32.mrf.mxu0
      %v4108 = vadd.f32 0.0, %v4107
      %v4109 = vpop.f32.mrf.mxu0
      %v4110 = vadd.f32 0.0, %v4109
      %4111 = vdwg.mxu0
      %v4112 = vadd.f32 %v3490, %v3993
      %v4113 = vadd.f32 %v3491, %v3995
      %v4114 = vadd.f32 %v3492, %v3998
      %v4115 = vadd.f32 %v3493, %v4000
      %v4116 = vadd.f32 %v3494, %v4003
      %v4117 = vadd.f32 %v3495, %v4005
      %v4118 = vadd.f32 %v3496, %v4008
      %v4119 = vadd.f32 %v3497, %v4010
      %v4120 = vadd.f32 %v3498, %v4013
      %v4121 = vadd.f32 %v3499, %v4015
      %v4122 = vadd.f32 %v3500, %v4018
      %v4123 = vadd.f32 %v3501, %v4020
      %v4124 = vadd.f32 %v3502, %v4023
      %v4125 = vadd.f32 %v3503, %v4025
      %v4126 = vadd.f32 %v3504, %v4028
      %v4127 = vadd.f32 %v3505, %v4030
      %v4128 = vadd.f32 %v3506, %v4033
      %v4129 = vadd.f32 %v3507, %v4035
      %v4130 = vadd.f32 %v3508, %v4038
      %v4131 = vadd.f32 %v3509, %v4040
      %v4132 = vadd.f32 %v3510, %v4043
      %v4133 = vadd.f32 %v3511, %v4045
      %v4134 = vadd.f32 %v3512, %v4048
      %v4135 = vadd.f32 %v3513, %v4050
      %v4136 = vadd.f32 %v3514, %v4053
      %v4137 = vadd.f32 %v3515, %v4055
      %v4138 = vadd.f32 %v3516, %v4058
      %v4139 = vadd.f32 %v3517, %v4060
      %v4140 = vadd.f32 %v3518, %v4063
      %v4141 = vadd.f32 %v3519, %v4065
      %v4142 = vadd.f32 %v3520, %v4068
      %v4143 = vadd.f32 %v3521, %v4070
      %v4144 = vadd.f32 %v3522, %v4073
      %v4145 = vadd.f32 %v3523, %v4075
      %v4146 = vadd.f32 %v3524, %v4078
      %v4147 = vadd.f32 %v3525, %v4080
      %v4148 = vadd.f32 %v3526, %v4083
      %v4149 = vadd.f32 %v3527, %v4085
      %v4150 = vadd.f32 %v3528, %v4088
      %v4151 = vadd.f32 %v3529, %v4090
      %v4152 = vadd.f32 %v3530, %v4093
      %v4153 = vadd.f32 %v3531, %v4095
      %v4154 = vadd.f32 %v3532, %v4098
      %v4155 = vadd.f32 %v3533, %v4100
      %v4156 = vadd.f32 %v3534, %v4103
      %v4157 = vadd.f32 %v3535, %v4105
      %v4158 = vadd.f32 %v3536, %v4108
      %v4159 = vadd.f32 %v3537, %v4110
      %v4160 = vld [vmem:[%s207 + $0xc] sm:$0xe]
      %s4161 = scalar_lea.vmem %s1, 10
      %v4162 = vld [vmem:[%s4161] sm:$0x3]
      %v4164 = vunpack.c.l.b16 %v4160
      %v4165 = vpack.c.b16 %v3639, %v4164
      %v4166 = vrot.slane %v4165, 1
      %v4167 = vrot.slane %v3688, 1
      %v4168 = vsel %vm2814, %v4166, %v4167
      %v4169 = vrot.slane %v3689, 1
      %v4170 = vsel %vm2814, %v4167, %v4169
      %v4171 = vrot.slane %v3690, 1
      %v4172 = vsel %vm2814, %v4169, %v4171
      %v4173 = vrot.slane %v3691, 1
      %v4174 = vsel %vm2814, %v4171, %v4173
      %v4175 = vrot.slane %v3692, 1
      %v4176 = vsel %vm2814, %v4173, %v4175
      %v4177 = vrot.slane %v3693, 1
      %v4178 = vsel %vm2814, %v4175, %v4177
      %v4179 = vrot.slane %v3694, 1
      %v4180 = vsel %vm2814, %v4177, %v4179
      %v4181 = vrot.slane %v3695, 1
      %v4182 = vsel %vm2814, %v4179, %v4181
      %v4183 = vrot.slane %v3696, 1
      %v4184 = vsel %vm2814, %v4181, %v4183
      %v4185 = vrot.slane %v3697, 1
      %v4186 = vsel %vm2814, %v4183, %v4185
      %v4187 = vrot.slane %v3698, 1
      %v4188 = vsel %vm2814, %v4185, %v4187
      %v4189 = vrot.slane %v3699, 1
      %v4190 = vsel %vm2814, %v4187, %v4189
      %v4191 = vrot.slane %v3700, 1
      %v4192 = vsel %vm2814, %v4189, %v4191
      %v4193 = vrot.slane %v3701, 1
      %v4194 = vsel %vm2814, %v4191, %v4193
      %v4195 = vrot.slane %v3702, 1
      %v4196 = vsel %vm2814, %v4193, %v4195
      %v4197 = vrot.slane %v3703, 1
      %v4198 = vsel %vm2814, %v4195, %v4197
      %v4199 = vrot.slane %v3704, 1
      %v4200 = vsel %vm2814, %v4197, %v4199
      %v4201 = vrot.slane %v3705, 1
      %v4202 = vsel %vm2814, %v4199, %v4201
      %v4203 = vrot.slane %v3706, 1
      %v4204 = vsel %vm2814, %v4201, %v4203
      %v4205 = vrot.slane %v3707, 1
      %v4206 = vsel %vm2814, %v4203, %v4205
      %v4207 = vrot.slane %v3708, 1
      %v4208 = vsel %vm2814, %v4205, %v4207
      %v4209 = vrot.slane %v3709, 1
      %v4210 = vsel %vm2814, %v4207, %v4209
      %v4211 = vrot.slane %v3710, 1
      %v4212 = vsel %vm2814, %v4209, %v4211
      %v4213 = vrot.slane %v3711, 1
      %v4214 = vsel %vm2814, %v4211, %v4213
      %v4216 = vsel %vm2422, %v4168, 0
      %v4219 = vsel %vm2422, %v4170, 0
      %v4222 = vsel %vm2422, %v4172, 0
      %v4225 = vsel %vm2422, %v4174, 0
      %v4228 = vsel %vm2422, %v4176, 0
      %v4231 = vsel %vm2422, %v4178, 0
      %v4234 = vsel %vm2422, %v4180, 0
      %v4237 = vsel %vm2422, %v4182, 0
      %v4240 = vsel %vm2422, %v4184, 0
      %v4243 = vsel %vm2422, %v4186, 0
      %v4246 = vsel %vm2422, %v4188, 0
      %v4249 = vsel %vm2422, %v4190, 0
      %v4252 = vsel %vm2422, %v4192, 0
      %v4255 = vsel %vm2422, %v4194, 0
      %v4258 = vsel %vm2422, %v4196, 0
      %v4261 = vsel %vm2422, %v4198, 0
      %v4264 = vsel %vm2422, %v4200, 0
      %v4267 = vsel %vm2422, %v4202, 0
      %v4270 = vsel %vm2422, %v4204, 0
      %v4273 = vsel %vm2422, %v4206, 0
      %v4276 = vsel %vm2422, %v4208, 0
      %v4279 = vsel %vm2422, %v4210, 0
      %v4282 = vsel %vm2422, %v4212, 0
      %v4285 = vsel %vm2422, %v4214, 0
      %v4288 = vsel %vm2495, %v4162, 0
      %4290 = vmatpush.bf16.msra.mxu0 0
      %4291 = vmatpush.bf16.msra.mxu0 0
      %4292 = vmatpush.bf16.msra.mxu0 0
      %4293 = vmatpush.bf16.msra.mxu0 0
      %4294 = vmatpush.bf16.msra.mxu0 0
      %4295 = vmatpush.bf16.msra.mxu0 0
      %4296 = vmatpush.bf16.msra.mxu0 0
      %4297 = vmatpush.bf16.msra.mxu0 %v4288
      %4298 = vmatmul.bf16.gmra.mxu0 %v4216
      %v4299 = vpop.f32.mrf.mxu0
      %v4300 = vadd.f32 0.0, %v4299
      %v4301 = vpop.f32.mrf.mxu0
      %v4302 = vadd.f32 0.0, %v4301
      %4303 = vmatmul.bf16.gmra.mxu0 %v4219
      %v4304 = vpop.f32.mrf.mxu0
      %v4305 = vadd.f32 0.0, %v4304
      %v4306 = vpop.f32.mrf.mxu0
      %v4307 = vadd.f32 0.0, %v4306
      %4308 = vmatmul.bf16.gmra.mxu0 %v4222
      %v4309 = vpop.f32.mrf.mxu0
      %v4310 = vadd.f32 0.0, %v4309
      %v4311 = vpop.f32.mrf.mxu0
      %v4312 = vadd.f32 0.0, %v4311
      %4313 = vmatmul.bf16.gmra.mxu0 %v4225
      %v4314 = vpop.f32.mrf.mxu0
      %v4315 = vadd.f32 0.0, %v4314
      %v4316 = vpop.f32.mrf.mxu0
      %v4317 = vadd.f32 0.0, %v4316
      %4318 = vmatmul.bf16.gmra.mxu0 %v4228
      %v4319 = vpop.f32.mrf.mxu0
      %v4320 = vadd.f32 0.0, %v4319
      %v4321 = vpop.f32.mrf.mxu0
      %v4322 = vadd.f32 0.0, %v4321
      %4323 = vmatmul.bf16.gmra.mxu0 %v4231
      %v4324 = vpop.f32.mrf.mxu0
      %v4325 = vadd.f32 0.0, %v4324
      %v4326 = vpop.f32.mrf.mxu0
      %v4327 = vadd.f32 0.0, %v4326
      %4328 = vmatmul.bf16.gmra.mxu0 %v4234
      %v4329 = vpop.f32.mrf.mxu0
      %v4330 = vadd.f32 0.0, %v4329
      %v4331 = vpop.f32.mrf.mxu0
      %v4332 = vadd.f32 0.0, %v4331
      %4333 = vmatmul.bf16.gmra.mxu0 %v4237
      %v4334 = vpop.f32.mrf.mxu0
      %v4335 = vadd.f32 0.0, %v4334
      %v4336 = vpop.f32.mrf.mxu0
      %v4337 = vadd.f32 0.0, %v4336
      %4338 = vmatmul.bf16.gmra.mxu0 %v4240
      %v4339 = vpop.f32.mrf.mxu0
      %v4340 = vadd.f32 0.0, %v4339
      %v4341 = vpop.f32.mrf.mxu0
      %v4342 = vadd.f32 0.0, %v4341
      %4343 = vmatmul.bf16.gmra.mxu0 %v4243
      %v4344 = vpop.f32.mrf.mxu0
      %v4345 = vadd.f32 0.0, %v4344
      %v4346 = vpop.f32.mrf.mxu0
      %v4347 = vadd.f32 0.0, %v4346
      %4348 = vmatmul.bf16.gmra.mxu0 %v4246
      %v4349 = vpop.f32.mrf.mxu0
      %v4350 = vadd.f32 0.0, %v4349
      %v4351 = vpop.f32.mrf.mxu0
      %v4352 = vadd.f32 0.0, %v4351
      %4353 = vmatmul.bf16.gmra.mxu0 %v4249
      %v4354 = vpop.f32.mrf.mxu0
      %v4355 = vadd.f32 0.0, %v4354
      %v4356 = vpop.f32.mrf.mxu0
      %v4357 = vadd.f32 0.0, %v4356
      %4358 = vmatmul.bf16.gmra.mxu0 %v4252
      %v4359 = vpop.f32.mrf.mxu0
      %v4360 = vadd.f32 0.0, %v4359
      %v4361 = vpop.f32.mrf.mxu0
      %v4362 = vadd.f32 0.0, %v4361
      %4363 = vmatmul.bf16.gmra.mxu0 %v4255
      %v4364 = vpop.f32.mrf.mxu0
      %v4365 = vadd.f32 0.0, %v4364
      %v4366 = vpop.f32.mrf.mxu0
      %v4367 = vadd.f32 0.0, %v4366
      %4368 = vmatmul.bf16.gmra.mxu0 %v4258
      %v4369 = vpop.f32.mrf.mxu0
      %v4370 = vadd.f32 0.0, %v4369
      %v4371 = vpop.f32.mrf.mxu0
      %v4372 = vadd.f32 0.0, %v4371
      %4373 = vmatmul.bf16.gmra.mxu0 %v4261
      %v4374 = vpop.f32.mrf.mxu0
      %v4375 = vadd.f32 0.0, %v4374
      %v4376 = vpop.f32.mrf.mxu0
      %v4377 = vadd.f32 0.0, %v4376
      %4378 = vmatmul.bf16.gmra.mxu0 %v4264
      %v4379 = vpop.f32.mrf.mxu0
      %v4380 = vadd.f32 0.0, %v4379
      %v4381 = vpop.f32.mrf.mxu0
      %v4382 = vadd.f32 0.0, %v4381
      %4383 = vmatmul.bf16.gmra.mxu0 %v4267
      %v4384 = vpop.f32.mrf.mxu0
      %v4385 = vadd.f32 0.0, %v4384
      %v4386 = vpop.f32.mrf.mxu0
      %v4387 = vadd.f32 0.0, %v4386
      %4388 = vmatmul.bf16.gmra.mxu0 %v4270
      %v4389 = vpop.f32.mrf.mxu0
      %v4390 = vadd.f32 0.0, %v4389
      %v4391 = vpop.f32.mrf.mxu0
      %v4392 = vadd.f32 0.0, %v4391
      %4393 = vmatmul.bf16.gmra.mxu0 %v4273
      %v4394 = vpop.f32.mrf.mxu0
      %v4395 = vadd.f32 0.0, %v4394
      %v4396 = vpop.f32.mrf.mxu0
      %v4397 = vadd.f32 0.0, %v4396
      %4398 = vmatmul.bf16.gmra.mxu0 %v4276
      %v4399 = vpop.f32.mrf.mxu0
      %v4400 = vadd.f32 0.0, %v4399
      %v4401 = vpop.f32.mrf.mxu0
      %v4402 = vadd.f32 0.0, %v4401
      %4403 = vmatmul.bf16.gmra.mxu0 %v4279
      %v4404 = vpop.f32.mrf.mxu0
      %v4405 = vadd.f32 0.0, %v4404
      %v4406 = vpop.f32.mrf.mxu0
      %v4407 = vadd.f32 0.0, %v4406
      %4408 = vmatmul.bf16.gmra.mxu0 %v4282
      %v4409 = vpop.f32.mrf.mxu0
      %v4410 = vadd.f32 0.0, %v4409
      %v4411 = vpop.f32.mrf.mxu0
      %v4412 = vadd.f32 0.0, %v4411
      %4413 = vmatmul.bf16.gmra.mxu0 %v4285
      %v4414 = vpop.f32.mrf.mxu0
      %v4415 = vadd.f32 0.0, %v4414
      %v4416 = vpop.f32.mrf.mxu0
      %v4417 = vadd.f32 0.0, %v4416
      %4418 = vdwg.mxu0
      %v4419 = vadd.f32 %v4112, %v4300
      %v4420 = vadd.f32 %v4113, %v4302
      %v4421 = vadd.f32 %v4114, %v4305
      %v4422 = vadd.f32 %v4115, %v4307
      %v4423 = vadd.f32 %v4116, %v4310
      %v4424 = vadd.f32 %v4117, %v4312
      %v4425 = vadd.f32 %v4118, %v4315
      %v4426 = vadd.f32 %v4119, %v4317
      %v4427 = vadd.f32 %v4120, %v4320
      %v4428 = vadd.f32 %v4121, %v4322
      %v4429 = vadd.f32 %v4122, %v4325
      %v4430 = vadd.f32 %v4123, %v4327
      %v4431 = vadd.f32 %v4124, %v4330
      %v4432 = vadd.f32 %v4125, %v4332
      %v4433 = vadd.f32 %v4126, %v4335
      %v4434 = vadd.f32 %v4127, %v4337
      %v4435 = vadd.f32 %v4128, %v4340
      %v4436 = vadd.f32 %v4129, %v4342
      %v4437 = vadd.f32 %v4130, %v4345
      %v4438 = vadd.f32 %v4131, %v4347
      %v4439 = vadd.f32 %v4132, %v4350
      %v4440 = vadd.f32 %v4133, %v4352
      %v4441 = vadd.f32 %v4134, %v4355
      %v4442 = vadd.f32 %v4135, %v4357
      %v4443 = vadd.f32 %v4136, %v4360
      %v4444 = vadd.f32 %v4137, %v4362
      %v4445 = vadd.f32 %v4138, %v4365
      %v4446 = vadd.f32 %v4139, %v4367
      %v4447 = vadd.f32 %v4140, %v4370
      %v4448 = vadd.f32 %v4141, %v4372
      %v4449 = vadd.f32 %v4142, %v4375
      %v4450 = vadd.f32 %v4143, %v4377
      %v4451 = vadd.f32 %v4144, %v4380
      %v4452 = vadd.f32 %v4145, %v4382
      %v4453 = vadd.f32 %v4146, %v4385
      %v4454 = vadd.f32 %v4147, %v4387
      %v4455 = vadd.f32 %v4148, %v4390
      %v4456 = vadd.f32 %v4149, %v4392
      %v4457 = vadd.f32 %v4150, %v4395
      %v4458 = vadd.f32 %v4151, %v4397
      %v4459 = vadd.f32 %v4152, %v4400
      %v4460 = vadd.f32 %v4153, %v4402
      %v4461 = vadd.f32 %v4154, %v4405
      %v4462 = vadd.f32 %v4155, %v4407
      %v4463 = vadd.f32 %v4156, %v4410
      %v4464 = vadd.f32 %v4157, %v4412
      %v4465 = vadd.f32 %v4158, %v4415
      %v4466 = vadd.f32 %v4159, %v4417
      %v4467 = vld [vmem:[%s207 + $0x18] sm:$0xf]
      %v4468 = vld [vmem:[%s207 + $0x1c] sm:$0xf]
      %v4469 = vld [vmem:[%s207 + $0x20] sm:$0xf]
      %v4470 = vld [vmem:[%s207 + $0x24] sm:$0xf]
      %v4471 = vld [vmem:[%s207 + $0x28] sm:$0xf]
      %v4472 = vld [vmem:[%s207 + $0x2c] sm:$0xf]
      %v4473 = vld [vmem:[%s207 + $0x30] sm:$0xf]
      %v4474 = vld [vmem:[%s207 + $0x34] sm:$0xf]
      %v4475 = vld [vmem:[%s207 + $0x38] sm:$0xf]
      %v4476 = vld [vmem:[%s207 + $0x3c] sm:$0xf]
      %v4477 = vld [vmem:[%s207 + $0x40] sm:$0xf]
      %v4478 = vld [vmem:[%s207 + $0x44] sm:$0xf]
      %v4479 = vld [vmem:[%s207 + $0x48] sm:$0xf]
      %v4480 = vld [vmem:[%s207 + $0x4c] sm:$0xf]
      %v4481 = vld [vmem:[%s207 + $0x50] sm:$0xf]
      %v4482 = vld [vmem:[%s207 + $0x54] sm:$0xf]
      %v4483 = vld [vmem:[%s207 + $0x58] sm:$0xf]
      %v4484 = vld [vmem:[%s207 + $0x5c] sm:$0xf]
      %v4485 = vld [vmem:[%s207 + $0x60] sm:$0xf]
      %v4486 = vld [vmem:[%s207 + $0x64] sm:$0xf]
      %v4487 = vld [vmem:[%s207 + $0x68] sm:$0xf]
      %v4488 = vld [vmem:[%s207 + $0x6c] sm:$0xf]
      %v4489 = vld [vmem:[%s207 + $0x70] sm:$0xf]
      %v4490 = vld [vmem:[%s207 + $0x74] sm:$0xf]
      %v4491 = vld [vmem:[%s207 + $0x78] sm:$0xf]
      %v4492 = vld [vmem:[%s207 + $0x7c] sm:$0xf]
      %v4493 = vld [vmem:[%s207 + $0x80] sm:$0xf]
      %v4494 = vld [vmem:[%s207 + $0x84] sm:$0xf]
      %v4495 = vld [vmem:[%s207 + $0x88] sm:$0xf]
      %v4496 = vld [vmem:[%s207 + $0x8c] sm:$0xf]
      %v4497 = vld [vmem:[%s207 + $0x90] sm:$0xf]
      %v4498 = vld [vmem:[%s207 + $0x94] sm:$0xf]
      %v4499 = vld [vmem:[%s207 + $0x98] sm:$0xf]
      %v4500 = vld [vmem:[%s207 + $0x9c] sm:$0xf]
      %v4501 = vld [vmem:[%s207 + $0xa0] sm:$0xf]
      %v4502 = vld [vmem:[%s207 + $0xa4] sm:$0xf]
      %v4503 = vld [vmem:[%s207 + $0xa8] sm:$0xf]
      %v4504 = vld [vmem:[%s207 + $0xac] sm:$0xf]
      %v4505 = vld [vmem:[%s207 + $0xb0] sm:$0xf]
      %v4506 = vld [vmem:[%s207 + $0xb4] sm:$0xf]
      %v4507 = vld [vmem:[%s207 + $0xb8] sm:$0xf]
      %v4508 = vld [vmem:[%s207 + $0xbc] sm:$0xf]
      %v4509 = vld [vmem:[%s207 + $0xc0] sm:$0xf]
      %v4510 = vld [vmem:[%s207 + $0xc4] sm:$0xf]
      %v4511 = vld [vmem:[%s207 + $0xc8] sm:$0xf]
      %v4512 = vld [vmem:[%s207 + $0xcc] sm:$0xf]
      %v4513 = vld [vmem:[%s207 + $0xd0] sm:$0xf]
      %v4514 = vld [vmem:[%s207 + $0xd4] sm:$0xf]
      %s4515 = scalar_lea.vmem %s1, 12
      %v4516 = vld [vmem:[%s4515] sm:$0x3]
      %v4565 = vunpack.c.l.b16 %v4467
      %v4566 = vunpack.c.l.b16 %v4468
      %v4567 = vunpack.c.l.b16 %v4469
      %v4568 = vunpack.c.l.b16 %v4470
      %v4569 = vunpack.c.l.b16 %v4471
      %v4570 = vunpack.c.l.b16 %v4472
      %v4571 = vunpack.c.l.b16 %v4473
      %v4572 = vunpack.c.l.b16 %v4474
      %v4573 = vunpack.c.l.b16 %v4475
      %v4574 = vunpack.c.l.b16 %v4476
      %v4575 = vunpack.c.l.b16 %v4477
      %v4576 = vunpack.c.l.b16 %v4478
      %v4577 = vunpack.c.l.b16 %v4479
      %v4578 = vunpack.c.l.b16 %v4480
      %v4579 = vunpack.c.l.b16 %v4481
      %v4580 = vunpack.c.l.b16 %v4482
      %v4581 = vunpack.c.l.b16 %v4483
      %v4582 = vunpack.c.l.b16 %v4484
      %v4583 = vunpack.c.l.b16 %v4485
      %v4584 = vunpack.c.l.b16 %v4486
      %v4585 = vunpack.c.l.b16 %v4487
      %v4586 = vunpack.c.l.b16 %v4488
      %v4587 = vunpack.c.l.b16 %v4489
      %v4588 = vunpack.c.l.b16 %v4490
      %v4589 = vunpack.c.l.b16 %v4491
      %v4590 = vunpack.c.l.b16 %v4492
      %v4591 = vunpack.c.l.b16 %v4493
      %v4592 = vunpack.c.l.b16 %v4494
      %v4593 = vunpack.c.l.b16 %v4495
      %v4594 = vunpack.c.l.b16 %v4496
      %v4595 = vunpack.c.l.b16 %v4497
      %v4596 = vunpack.c.l.b16 %v4498
      %v4597 = vunpack.c.l.b16 %v4499
      %v4598 = vunpack.c.l.b16 %v4500
      %v4599 = vunpack.c.l.b16 %v4501
      %v4600 = vunpack.c.l.b16 %v4502
      %v4601 = vunpack.c.l.b16 %v4503
      %v4602 = vunpack.c.l.b16 %v4504
      %v4603 = vunpack.c.l.b16 %v4505
      %v4604 = vunpack.c.l.b16 %v4506
      %v4605 = vunpack.c.l.b16 %v4507
      %v4606 = vunpack.c.l.b16 %v4508
      %v4607 = vunpack.c.l.b16 %v4509
      %v4608 = vunpack.c.l.b16 %v4510
      %v4609 = vunpack.c.l.b16 %v4511
      %v4610 = vunpack.c.l.b16 %v4512
      %v4611 = vunpack.c.l.b16 %v4513
      %v4612 = vunpack.c.l.b16 %v4514
      %v4613 = vpack.c.b16 %v4566, %v4565
      %v4614 = vpack.c.b16 %v4568, %v4567
      %v4615 = vpack.c.b16 %v4570, %v4569
      %v4616 = vpack.c.b16 %v4572, %v4571
      %v4617 = vpack.c.b16 %v4574, %v4573
      %v4618 = vpack.c.b16 %v4576, %v4575
      %v4619 = vpack.c.b16 %v4578, %v4577
      %v4620 = vpack.c.b16 %v4580, %v4579
      %v4621 = vpack.c.b16 %v4582, %v4581
      %v4622 = vpack.c.b16 %v4584, %v4583
      %v4623 = vpack.c.b16 %v4586, %v4585
      %v4624 = vpack.c.b16 %v4588, %v4587
      %v4625 = vpack.c.b16 %v4590, %v4589
      %v4626 = vpack.c.b16 %v4592, %v4591
      %v4627 = vpack.c.b16 %v4594, %v4593
      %v4628 = vpack.c.b16 %v4596, %v4595
      %v4629 = vpack.c.b16 %v4598, %v4597
      %v4630 = vpack.c.b16 %v4600, %v4599
      %v4631 = vpack.c.b16 %v4602, %v4601
      %v4632 = vpack.c.b16 %v4604, %v4603
      %v4633 = vpack.c.b16 %v4606, %v4605
      %v4634 = vpack.c.b16 %v4608, %v4607
      %v4635 = vpack.c.b16 %v4610, %v4609
      %v4636 = vpack.c.b16 %v4612, %v4611
      %v4638 = vsel %vm2422, %v4613, 0
      %v4641 = vsel %vm2422, %v4614, 0
      %v4644 = vsel %vm2422, %v4615, 0
      %v4647 = vsel %vm2422, %v4616, 0
      %v4650 = vsel %vm2422, %v4617, 0
      %v4653 = vsel %vm2422, %v4618, 0
      %v4656 = vsel %vm2422, %v4619, 0
      %v4659 = vsel %vm2422, %v4620, 0
      %v4662 = vsel %vm2422, %v4621, 0
      %v4665 = vsel %vm2422, %v4622, 0
      %v4668 = vsel %vm2422, %v4623, 0
      %v4671 = vsel %vm2422, %v4624, 0
      %v4674 = vsel %vm2422, %v4625, 0
      %v4677 = vsel %vm2422, %v4626, 0
      %v4680 = vsel %vm2422, %v4627, 0
      %v4683 = vsel %vm2422, %v4628, 0
      %v4686 = vsel %vm2422, %v4629, 0
      %v4689 = vsel %vm2422, %v4630, 0
      %v4692 = vsel %vm2422, %v4631, 0
      %v4695 = vsel %vm2422, %v4632, 0
      %v4698 = vsel %vm2422, %v4633, 0
      %v4701 = vsel %vm2422, %v4634, 0
      %v4704 = vsel %vm2422, %v4635, 0
      %v4707 = vsel %vm2422, %v4636, 0
      %v4710 = vsel %vm2495, %v4516, 0
      %4712 = vmatpush.bf16.msra.mxu0 0
      %4713 = vmatpush.bf16.msra.mxu0 0
      %4714 = vmatpush.bf16.msra.mxu0 0
      %4715 = vmatpush.bf16.msra.mxu0 0
      %4716 = vmatpush.bf16.msra.mxu0 0
      %4717 = vmatpush.bf16.msra.mxu0 0
      %4718 = vmatpush.bf16.msra.mxu0 0
      %4719 = vmatpush.bf16.msra.mxu0 %v4710
      %4720 = vmatmul.bf16.gmra.mxu0 %v4638
      %v4721 = vpop.f32.mrf.mxu0
      %v4722 = vadd.f32 0.0, %v4721
      %v4723 = vpop.f32.mrf.mxu0
      %v4724 = vadd.f32 0.0, %v4723
      %4725 = vmatmul.bf16.gmra.mxu0 %v4641
      %v4726 = vpop.f32.mrf.mxu0
      %v4727 = vadd.f32 0.0, %v4726
      %v4728 = vpop.f32.mrf.mxu0
      %v4729 = vadd.f32 0.0, %v4728
      %4730 = vmatmul.bf16.gmra.mxu0 %v4644
      %v4731 = vpop.f32.mrf.mxu0
      %v4732 = vadd.f32 0.0, %v4731
      %v4733 = vpop.f32.mrf.mxu0
      %v4734 = vadd.f32 0.0, %v4733
      %4735 = vmatmul.bf16.gmra.mxu0 %v4647
      %v4736 = vpop.f32.mrf.mxu0
      %v4737 = vadd.f32 0.0, %v4736
      %v4738 = vpop.f32.mrf.mxu0
      %v4739 = vadd.f32 0.0, %v4738
      %4740 = vmatmul.bf16.gmra.mxu0 %v4650
      %v4741 = vpop.f32.mrf.mxu0
      %v4742 = vadd.f32 0.0, %v4741
      %v4743 = vpop.f32.mrf.mxu0
      %v4744 = vadd.f32 0.0, %v4743
      %4745 = vmatmul.bf16.gmra.mxu0 %v4653
      %v4746 = vpop.f32.mrf.mxu0
      %v4747 = vadd.f32 0.0, %v4746
      %v4748 = vpop.f32.mrf.mxu0
      %v4749 = vadd.f32 0.0, %v4748
      %4750 = vmatmul.bf16.gmra.mxu0 %v4656
      %v4751 = vpop.f32.mrf.mxu0
      %v4752 = vadd.f32 0.0, %v4751
      %v4753 = vpop.f32.mrf.mxu0
      %v4754 = vadd.f32 0.0, %v4753
      %4755 = vmatmul.bf16.gmra.mxu0 %v4659
      %v4756 = vpop.f32.mrf.mxu0
      %v4757 = vadd.f32 0.0, %v4756
      %v4758 = vpop.f32.mrf.mxu0
      %v4759 = vadd.f32 0.0, %v4758
      %4760 = vmatmul.bf16.gmra.mxu0 %v4662
      %v4761 = vpop.f32.mrf.mxu0
      %v4762 = vadd.f32 0.0, %v4761
      %v4763 = vpop.f32.mrf.mxu0
      %v4764 = vadd.f32 0.0, %v4763
      %4765 = vmatmul.bf16.gmra.mxu0 %v4665
      %v4766 = vpop.f32.mrf.mxu0
      %v4767 = vadd.f32 0.0, %v4766
      %v4768 = vpop.f32.mrf.mxu0
      %v4769 = vadd.f32 0.0, %v4768
      %4770 = vmatmul.bf16.gmra.mxu0 %v4668
      %v4771 = vpop.f32.mrf.mxu0
      %v4772 = vadd.f32 0.0, %v4771
      %v4773 = vpop.f32.mrf.mxu0
      %v4774 = vadd.f32 0.0, %v4773
      %4775 = vmatmul.bf16.gmra.mxu0 %v4671
      %v4776 = vpop.f32.mrf.mxu0
      %v4777 = vadd.f32 0.0, %v4776
      %v4778 = vpop.f32.mrf.mxu0
      %v4779 = vadd.f32 0.0, %v4778
      %4780 = vmatmul.bf16.gmra.mxu0 %v4674
      %v4781 = vpop.f32.mrf.mxu0
      %v4782 = vadd.f32 0.0, %v4781
      %v4783 = vpop.f32.mrf.mxu0
      %v4784 = vadd.f32 0.0, %v4783
      %4785 = vmatmul.bf16.gmra.mxu0 %v4677
      %v4786 = vpop.f32.mrf.mxu0
      %v4787 = vadd.f32 0.0, %v4786
      %v4788 = vpop.f32.mrf.mxu0
      %v4789 = vadd.f32 0.0, %v4788
      %4790 = vmatmul.bf16.gmra.mxu0 %v4680
      %v4791 = vpop.f32.mrf.mxu0
      %v4792 = vadd.f32 0.0, %v4791
      %v4793 = vpop.f32.mrf.mxu0
      %v4794 = vadd.f32 0.0, %v4793
      %4795 = vmatmul.bf16.gmra.mxu0 %v4683
      %v4796 = vpop.f32.mrf.mxu0
      %v4797 = vadd.f32 0.0, %v4796
      %v4798 = vpop.f32.mrf.mxu0
      %v4799 = vadd.f32 0.0, %v4798
      %4800 = vmatmul.bf16.gmra.mxu0 %v4686
      %v4801 = vpop.f32.mrf.mxu0
      %v4802 = vadd.f32 0.0, %v4801
      %v4803 = vpop.f32.mrf.mxu0
      %v4804 = vadd.f32 0.0, %v4803
      %4805 = vmatmul.bf16.gmra.mxu0 %v4689
      %v4806 = vpop.f32.mrf.mxu0
      %v4807 = vadd.f32 0.0, %v4806
      %v4808 = vpop.f32.mrf.mxu0
      %v4809 = vadd.f32 0.0, %v4808
      %4810 = vmatmul.bf16.gmra.mxu0 %v4692
      %v4811 = vpop.f32.mrf.mxu0
      %v4812 = vadd.f32 0.0, %v4811
      %v4813 = vpop.f32.mrf.mxu0
      %v4814 = vadd.f32 0.0, %v4813
      %4815 = vmatmul.bf16.gmra.mxu0 %v4695
      %v4816 = vpop.f32.mrf.mxu0
      %v4817 = vadd.f32 0.0, %v4816
      %v4818 = vpop.f32.mrf.mxu0
      %v4819 = vadd.f32 0.0, %v4818
      %4820 = vmatmul.bf16.gmra.mxu0 %v4698
      %v4821 = vpop.f32.mrf.mxu0
      %v4822 = vadd.f32 0.0, %v4821
      %v4823 = vpop.f32.mrf.mxu0
      %v4824 = vadd.f32 0.0, %v4823
      %4825 = vmatmul.bf16.gmra.mxu0 %v4701
      %v4826 = vpop.f32.mrf.mxu0
      %v4827 = vadd.f32 0.0, %v4826
      %v4828 = vpop.f32.mrf.mxu0
      %v4829 = vadd.f32 0.0, %v4828
      %4830 = vmatmul.bf16.gmra.mxu0 %v4704
      %v4831 = vpop.f32.mrf.mxu0
      %v4832 = vadd.f32 0.0, %v4831
      %v4833 = vpop.f32.mrf.mxu0
      %v4834 = vadd.f32 0.0, %v4833
      %4835 = vmatmul.bf16.gmra.mxu0 %v4707
      %v4836 = vpop.f32.mrf.mxu0
      %v4837 = vadd.f32 0.0, %v4836
      %v4838 = vpop.f32.mrf.mxu0
      %v4839 = vadd.f32 0.0, %v4838
      %4840 = vdwg.mxu0
      %v4841 = vadd.f32 %v4419, %v4722
      %v4842 = vadd.f32 %v4420, %v4724
      %v4843 = vadd.f32 %v4421, %v4727
      %v4844 = vadd.f32 %v4422, %v4729
      %v4845 = vadd.f32 %v4423, %v4732
      %v4846 = vadd.f32 %v4424, %v4734
      %v4847 = vadd.f32 %v4425, %v4737
      %v4848 = vadd.f32 %v4426, %v4739
      %v4849 = vadd.f32 %v4427, %v4742
      %v4850 = vadd.f32 %v4428, %v4744
      %v4851 = vadd.f32 %v4429, %v4747
      %v4852 = vadd.f32 %v4430, %v4749
      %v4853 = vadd.f32 %v4431, %v4752
      %v4854 = vadd.f32 %v4432, %v4754
      %v4855 = vadd.f32 %v4433, %v4757
      %v4856 = vadd.f32 %v4434, %v4759
      %v4857 = vadd.f32 %v4435, %v4762
      %v4858 = vadd.f32 %v4436, %v4764
      %v4859 = vadd.f32 %v4437, %v4767
      %v4860 = vadd.f32 %v4438, %v4769
      %v4861 = vadd.f32 %v4439, %v4772
      %v4862 = vadd.f32 %v4440, %v4774
      %v4863 = vadd.f32 %v4441, %v4777
      %v4864 = vadd.f32 %v4442, %v4779
      %v4865 = vadd.f32 %v4443, %v4782
      %v4866 = vadd.f32 %v4444, %v4784
      %v4867 = vadd.f32 %v4445, %v4787
      %v4868 = vadd.f32 %v4446, %v4789
      %v4869 = vadd.f32 %v4447, %v4792
      %v4870 = vadd.f32 %v4448, %v4794
      %v4871 = vadd.f32 %v4449, %v4797
      %v4872 = vadd.f32 %v4450, %v4799
      %v4873 = vadd.f32 %v4451, %v4802
      %v4874 = vadd.f32 %v4452, %v4804
      %v4875 = vadd.f32 %v4453, %v4807
      %v4876 = vadd.f32 %v4454, %v4809
      %v4877 = vadd.f32 %v4455, %v4812
      %v4878 = vadd.f32 %v4456, %v4814
      %v4879 = vadd.f32 %v4457, %v4817
      %v4880 = vadd.f32 %v4458, %v4819
      %v4881 = vadd.f32 %v4459, %v4822
      %v4882 = vadd.f32 %v4460, %v4824
      %v4883 = vadd.f32 %v4461, %v4827
      %v4884 = vadd.f32 %v4462, %v4829
      %v4885 = vadd.f32 %v4463, %v4832
      %v4886 = vadd.f32 %v4464, %v4834
      %v4887 = vadd.f32 %v4465, %v4837
      %v4888 = vadd.f32 %v4466, %v4839
      %v4889 = vld [vmem:[%s207 + $0x18] sm:$0xf]
      %v4890 = vld [vmem:[%s207 + $0x1c] sm:$0xf]
      %v4891 = vld [vmem:[%s207 + $0x20] sm:$0xf]
      %v4892 = vld [vmem:[%s207 + $0x24] sm:$0xf]
      %v4893 = vld [vmem:[%s207 + $0x28] sm:$0xf]
      %v4894 = vld [vmem:[%s207 + $0x2c] sm:$0xf]
      %v4895 = vld [vmem:[%s207 + $0x30] sm:$0xf]
      %v4896 = vld [vmem:[%s207 + $0x34] sm:$0xf]
      %v4897 = vld [vmem:[%s207 + $0x38] sm:$0xf]
      %v4898 = vld [vmem:[%s207 + $0x3c] sm:$0xf]
      %v4899 = vld [vmem:[%s207 + $0x40] sm:$0xf]
      %v4900 = vld [vmem:[%s207 + $0x44] sm:$0xf]
      %v4901 = vld [vmem:[%s207 + $0x48] sm:$0xf]
      %v4902 = vld [vmem:[%s207 + $0x4c] sm:$0xf]
      %v4903 = vld [vmem:[%s207 + $0x50] sm:$0xf]
      %v4904 = vld [vmem:[%s207 + $0x54] sm:$0xf]
      %v4905 = vld [vmem:[%s207 + $0x58] sm:$0xf]
      %v4906 = vld [vmem:[%s207 + $0x5c] sm:$0xf]
      %v4907 = vld [vmem:[%s207 + $0x60] sm:$0xf]
      %v4908 = vld [vmem:[%s207 + $0x64] sm:$0xf]
      %v4909 = vld [vmem:[%s207 + $0x68] sm:$0xf]
      %v4910 = vld [vmem:[%s207 + $0x6c] sm:$0xf]
      %v4911 = vld [vmem:[%s207 + $0x70] sm:$0xf]
      %v4912 = vld [vmem:[%s207 + $0x74] sm:$0xf]
      %v4913 = vld [vmem:[%s207 + $0x78] sm:$0xf]
      %v4914 = vld [vmem:[%s207 + $0x7c] sm:$0xf]
      %v4915 = vld [vmem:[%s207 + $0x80] sm:$0xf]
      %v4916 = vld [vmem:[%s207 + $0x84] sm:$0xf]
      %v4917 = vld [vmem:[%s207 + $0x88] sm:$0xf]
      %v4918 = vld [vmem:[%s207 + $0x8c] sm:$0xf]
      %v4919 = vld [vmem:[%s207 + $0x90] sm:$0xf]
      %v4920 = vld [vmem:[%s207 + $0x94] sm:$0xf]
      %v4921 = vld [vmem:[%s207 + $0x98] sm:$0xf]
      %v4922 = vld [vmem:[%s207 + $0x9c] sm:$0xf]
      %v4923 = vld [vmem:[%s207 + $0xa0] sm:$0xf]
      %v4924 = vld [vmem:[%s207 + $0xa4] sm:$0xf]
      %v4925 = vld [vmem:[%s207 + $0xa8] sm:$0xf]
      %v4926 = vld [vmem:[%s207 + $0xac] sm:$0xf]
      %v4927 = vld [vmem:[%s207 + $0xb0] sm:$0xf]
      %v4928 = vld [vmem:[%s207 + $0xb4] sm:$0xf]
      %v4929 = vld [vmem:[%s207 + $0xb8] sm:$0xf]
      %v4930 = vld [vmem:[%s207 + $0xbc] sm:$0xf]
      %v4931 = vld [vmem:[%s207 + $0xc0] sm:$0xf]
      %v4932 = vld [vmem:[%s207 + $0xc4] sm:$0xf]
      %v4933 = vld [vmem:[%s207 + $0xc8] sm:$0xf]
      %v4934 = vld [vmem:[%s207 + $0xcc] sm:$0xf]
      %v4935 = vld [vmem:[%s207 + $0xd0] sm:$0xf]
      %v4936 = vld [vmem:[%s207 + $0xd4] sm:$0xf]
      %v4937 = vld [vmem:[%s207 + $0xd8] sm:$0x1]
      %s4938 = scalar_lea.vmem %s1, 14
      %v4939 = vld [vmem:[%s4938] sm:$0x3]
      %v4989 = vunpack.c.l.b16 %v4889
      %v4990 = vunpack.c.l.b16 %v4890
      %v4991 = vunpack.c.l.b16 %v4891
      %v4992 = vunpack.c.l.b16 %v4892
      %v4993 = vunpack.c.l.b16 %v4893
      %v4994 = vunpack.c.l.b16 %v4894
      %v4995 = vunpack.c.l.b16 %v4895
      %v4996 = vunpack.c.l.b16 %v4896
      %v4997 = vunpack.c.l.b16 %v4897
      %v4998 = vunpack.c.l.b16 %v4898
      %v4999 = vunpack.c.l.b16 %v4899
      %v5000 = vunpack.c.l.b16 %v4900
      %v5001 = vunpack.c.l.b16 %v4901
      %v5002 = vunpack.c.l.b16 %v4902
      %v5003 = vunpack.c.l.b16 %v4903
      %v5004 = vunpack.c.l.b16 %v4904
      %v5005 = vunpack.c.l.b16 %v4905
      %v5006 = vunpack.c.l.b16 %v4906
      %v5007 = vunpack.c.l.b16 %v4907
      %v5008 = vunpack.c.l.b16 %v4908
      %v5009 = vunpack.c.l.b16 %v4909
      %v5010 = vunpack.c.l.b16 %v4910
      %v5011 = vunpack.c.l.b16 %v4911
      %v5012 = vunpack.c.l.b16 %v4912
      %v5013 = vunpack.c.l.b16 %v4913
      %v5014 = vunpack.c.l.b16 %v4914
      %v5015 = vunpack.c.l.b16 %v4915
      %v5016 = vunpack.c.l.b16 %v4916
      %v5017 = vunpack.c.l.b16 %v4917
      %v5018 = vunpack.c.l.b16 %v4918
      %v5019 = vunpack.c.l.b16 %v4919
      %v5020 = vunpack.c.l.b16 %v4920
      %v5021 = vunpack.c.l.b16 %v4921
      %v5022 = vunpack.c.l.b16 %v4922
      %v5023 = vunpack.c.l.b16 %v4923
      %v5024 = vunpack.c.l.b16 %v4924
      %v5025 = vunpack.c.l.b16 %v4925
      %v5026 = vunpack.c.l.b16 %v4926
      %v5027 = vunpack.c.l.b16 %v4927
      %v5028 = vunpack.c.l.b16 %v4928
      %v5029 = vunpack.c.l.b16 %v4929
      %v5030 = vunpack.c.l.b16 %v4930
      %v5031 = vunpack.c.l.b16 %v4931
      %v5032 = vunpack.c.l.b16 %v4932
      %v5033 = vunpack.c.l.b16 %v4933
      %v5034 = vunpack.c.l.b16 %v4934
      %v5035 = vunpack.c.l.b16 %v4935
      %v5036 = vunpack.c.l.b16 %v4936
      %v5037 = vunpack.c.l.b16 %v4937
      %v5038 = vpack.c.b16 %v4990, %v4989
      %v5039 = vpack.c.b16 %v4992, %v4991
      %v5040 = vpack.c.b16 %v4994, %v4993
      %v5041 = vpack.c.b16 %v4996, %v4995
      %v5042 = vpack.c.b16 %v4998, %v4997
      %v5043 = vpack.c.b16 %v5000, %v4999
      %v5044 = vpack.c.b16 %v5002, %v5001
      %v5045 = vpack.c.b16 %v5004, %v5003
      %v5046 = vpack.c.b16 %v5006, %v5005
      %v5047 = vpack.c.b16 %v5008, %v5007
      %v5048 = vpack.c.b16 %v5010, %v5009
      %v5049 = vpack.c.b16 %v5012, %v5011
      %v5050 = vpack.c.b16 %v5014, %v5013
      %v5051 = vpack.c.b16 %v5016, %v5015
      %v5052 = vpack.c.b16 %v5018, %v5017
      %v5053 = vpack.c.b16 %v5020, %v5019
      %v5054 = vpack.c.b16 %v5022, %v5021
      %v5055 = vpack.c.b16 %v5024, %v5023
      %v5056 = vpack.c.b16 %v5026, %v5025
      %v5057 = vpack.c.b16 %v5028, %v5027
      %v5058 = vpack.c.b16 %v5030, %v5029
      %v5059 = vpack.c.b16 %v5032, %v5031
      %v5060 = vpack.c.b16 %v5034, %v5033
      %v5061 = vpack.c.b16 %v5036, %v5035
      %v5062 = vpack.c.b16 %v5037, %v5037
      %v5064 = vshrl.u32 %v5038, 16
      %v5066 = vshll.u32 %v5038, 16
      %v5068 = vrot.slane %v5066, 1
      %v5069 = vor.u32 %v5064, %v5068
      %v5071 = vshll.u32 %v5039, 16
      %v5073 = vrot.slane %v5071, 1
      %v5074 = vsel %vm2225, %v5069, %v5073
      %v5075 = vshrl.u32 %v5039, 16
      %v5077 = vor.u32 %v5075, %v5073
      %v5079 = vshll.u32 %v5040, 16
      %v5081 = vrot.slane %v5079, 1
      %v5082 = vsel %vm2225, %v5077, %v5081
      %v5083 = vshrl.u32 %v5040, 16
      %v5085 = vor.u32 %v5083, %v5081
      %v5087 = vshll.u32 %v5041, 16
      %v5089 = vrot.slane %v5087, 1
      %v5090 = vsel %vm2225, %v5085, %v5089
      %v5091 = vshrl.u32 %v5041, 16
      %v5093 = vor.u32 %v5091, %v5089
      %v5095 = vshll.u32 %v5042, 16
      %v5097 = vrot.slane %v5095, 1
      %v5098 = vsel %vm2225, %v5093, %v5097
      %v5099 = vshrl.u32 %v5042, 16
      %v5101 = vor.u32 %v5099, %v5097
      %v5103 = vshll.u32 %v5043, 16
      %v5105 = vrot.slane %v5103, 1
      %v5106 = vsel %vm2225, %v5101, %v5105
      %v5107 = vshrl.u32 %v5043, 16
      %v5109 = vor.u32 %v5107, %v5105
      %v5111 = vshll.u32 %v5044, 16
      %v5113 = vrot.slane %v5111, 1
      %v5114 = vsel %vm2225, %v5109, %v5113
      %v5115 = vshrl.u32 %v5044, 16
      %v5117 = vor.u32 %v5115, %v5113
      %v5119 = vshll.u32 %v5045, 16
      %v5121 = vrot.slane %v5119, 1
      %v5122 = vsel %vm2225, %v5117, %v5121
      %v5123 = vshrl.u32 %v5045, 16
      %v5125 = vor.u32 %v5123, %v5121
      %v5127 = vshll.u32 %v5046, 16
      %v5129 = vrot.slane %v5127, 1
      %v5130 = vsel %vm2225, %v5125, %v5129
      %v5131 = vshrl.u32 %v5046, 16
      %v5133 = vor.u32 %v5131, %v5129
      %v5135 = vshll.u32 %v5047, 16
      %v5137 = vrot.slane %v5135, 1
      %v5138 = vsel %vm2225, %v5133, %v5137
      %v5139 = vshrl.u32 %v5047, 16
      %v5141 = vor.u32 %v5139, %v5137
      %v5143 = vshll.u32 %v5048, 16
      %v5145 = vrot.slane %v5143, 1
      %v5146 = vsel %vm2225, %v5141, %v5145
      %v5147 = vshrl.u32 %v5048, 16
      %v5149 = vor.u32 %v5147, %v5145
      %v5151 = vshll.u32 %v5049, 16
      %v5153 = vrot.slane %v5151, 1
      %v5154 = vsel %vm2225, %v5149, %v5153
      %v5155 = vshrl.u32 %v5049, 16
      %v5157 = vor.u32 %v5155, %v5153
      %v5159 = vshll.u32 %v5050, 16
      %v5161 = vrot.slane %v5159, 1
      %v5162 = vsel %vm2225, %v5157, %v5161
      %v5163 = vshrl.u32 %v5050, 16
      %v5165 = vor.u32 %v5163, %v5161
      %v5167 = vshll.u32 %v5051, 16
      %v5169 = vrot.slane %v5167, 1
      %v5170 = vsel %vm2225, %v5165, %v5169
      %v5171 = vshrl.u32 %v5051, 16
      %v5173 = vor.u32 %v5171, %v5169
      %v5175 = vshll.u32 %v5052, 16
      %v5177 = vrot.slane %v5175, 1
      %v5178 = vsel %vm2225, %v5173, %v5177
      %v5179 = vshrl.u32 %v5052, 16
      %v5181 = vor.u32 %v5179, %v5177
      %v5183 = vshll.u32 %v5053, 16
      %v5185 = vrot.slane %v5183, 1
      %v5186 = vsel %vm2225, %v5181, %v5185
      %v5187 = vshrl.u32 %v5053, 16
      %v5189 = vor.u32 %v5187, %v5185
      %v5191 = vshll.u32 %v5054, 16
      %v5193 = vrot.slane %v5191, 1
      %v5194 = vsel %vm2225, %v5189, %v5193
      %v5195 = vshrl.u32 %v5054, 16
      %v5197 = vor.u32 %v5195, %v5193
      %v5199 = vshll.u32 %v5055, 16
      %v5201 = vrot.slane %v5199, 1
      %v5202 = vsel %vm2225, %v5197, %v5201
      %v5203 = vshrl.u32 %v5055, 16
      %v5205 = vor.u32 %v5203, %v5201
      %v5207 = vshll.u32 %v5056, 16
      %v5209 = vrot.slane %v5207, 1
      %v5210 = vsel %vm2225, %v5205, %v5209
      %v5211 = vshrl.u32 %v5056, 16
      %v5213 = vor.u32 %v5211, %v5209
      %v5215 = vshll.u32 %v5057, 16
      %v5217 = vrot.slane %v5215, 1
      %v5218 = vsel %vm2225, %v5213, %v5217
      %v5219 = vshrl.u32 %v5057, 16
      %v5221 = vor.u32 %v5219, %v5217
      %v5223 = vshll.u32 %v5058, 16
      %v5225 = vrot.slane %v5223, 1
      %v5226 = vsel %vm2225, %v5221, %v5225
      %v5227 = vshrl.u32 %v5058, 16
      %v5229 = vor.u32 %v5227, %v5225
      %v5231 = vshll.u32 %v5059, 16
      %v5233 = vrot.slane %v5231, 1
      %v5234 = vsel %vm2225, %v5229, %v5233
      %v5235 = vshrl.u32 %v5059, 16
      %v5237 = vor.u32 %v5235, %v5233
      %v5239 = vshll.u32 %v5060, 16
      %v5241 = vrot.slane %v5239, 1
      %v5242 = vsel %vm2225, %v5237, %v5241
      %v5243 = vshrl.u32 %v5060, 16
      %v5245 = vor.u32 %v5243, %v5241
      %v5247 = vshll.u32 %v5061, 16
      %v5249 = vrot.slane %v5247, 1
      %v5250 = vsel %vm2225, %v5245, %v5249
      %v5251 = vshrl.u32 %v5061, 16
      %v5253 = vor.u32 %v5251, %v5249
      %v5255 = vshll.u32 %v5062, 16
      %v5257 = vrot.slane %v5255, 1
      %v5258 = vsel %vm2225, %v5253, %v5257
      %v5260 = vsel %vm2422, %v5074, 0
      %v5263 = vsel %vm2422, %v5082, 0
      %v5266 = vsel %vm2422, %v5090, 0
      %v5269 = vsel %vm2422, %v5098, 0
      %v5272 = vsel %vm2422, %v5106, 0
      %v5275 = vsel %vm2422, %v5114, 0
      %v5278 = vsel %vm2422, %v5122, 0
      %v5281 = vsel %vm2422, %v5130, 0
      %v5284 = vsel %vm2422, %v5138, 0
      %v5287 = vsel %vm2422, %v5146, 0
      %v5290 = vsel %vm2422, %v5154, 0
      %v5293 = vsel %vm2422, %v5162, 0
      %v5296 = vsel %vm2422, %v5170, 0
      %v5299 = vsel %vm2422, %v5178, 0
      %v5302 = vsel %vm2422, %v5186, 0
      %v5305 = vsel %vm2422, %v5194, 0
      %v5308 = vsel %vm2422, %v5202, 0
      %v5311 = vsel %vm2422, %v5210, 0
      %v5314 = vsel %vm2422, %v5218, 0
      %v5317 = vsel %vm2422, %v5226, 0
      %v5320 = vsel %vm2422, %v5234, 0
      %v5323 = vsel %vm2422, %v5242, 0
      %v5326 = vsel %vm2422, %v5250, 0
      %v5329 = vsel %vm2422, %v5258, 0
      %v5332 = vsel %vm2495, %v4939, 0
      %5334 = vmatpush.bf16.msra.mxu0 0
      %5335 = vmatpush.bf16.msra.mxu0 0
      %5336 = vmatpush.bf16.msra.mxu0 0
      %5337 = vmatpush.bf16.msra.mxu0 0
      %5338 = vmatpush.bf16.msra.mxu0 0
      %5339 = vmatpush.bf16.msra.mxu0 0
      %5340 = vmatpush.bf16.msra.mxu0 0
      %5341 = vmatpush.bf16.msra.mxu0 %v5332
      %5342 = vmatmul.bf16.gmra.mxu0 %v5260
      %v5343 = vpop.f32.mrf.mxu0
      %v5344 = vadd.f32 0.0, %v5343
      %v5345 = vpop.f32.mrf.mxu0
      %v5346 = vadd.f32 0.0, %v5345
      %5347 = vmatmul.bf16.gmra.mxu0 %v5263
      %v5348 = vpop.f32.mrf.mxu0
      %v5349 = vadd.f32 0.0, %v5348
      %v5350 = vpop.f32.mrf.mxu0
      %v5351 = vadd.f32 0.0, %v5350
      %5352 = vmatmul.bf16.gmra.mxu0 %v5266
      %v5353 = vpop.f32.mrf.mxu0
      %v5354 = vadd.f32 0.0, %v5353
      %v5355 = vpop.f32.mrf.mxu0
      %v5356 = vadd.f32 0.0, %v5355
      %5357 = vmatmul.bf16.gmra.mxu0 %v5269
      %v5358 = vpop.f32.mrf.mxu0
      %v5359 = vadd.f32 0.0, %v5358
      %v5360 = vpop.f32.mrf.mxu0
      %v5361 = vadd.f32 0.0, %v5360
      %5362 = vmatmul.bf16.gmra.mxu0 %v5272
      %v5363 = vpop.f32.mrf.mxu0
      %v5364 = vadd.f32 0.0, %v5363
      %v5365 = vpop.f32.mrf.mxu0
      %v5366 = vadd.f32 0.0, %v5365
      %5367 = vmatmul.bf16.gmra.mxu0 %v5275
      %v5368 = vpop.f32.mrf.mxu0
      %v5369 = vadd.f32 0.0, %v5368
      %v5370 = vpop.f32.mrf.mxu0
      %v5371 = vadd.f32 0.0, %v5370
      %5372 = vmatmul.bf16.gmra.mxu0 %v5278
      %v5373 = vpop.f32.mrf.mxu0
      %v5374 = vadd.f32 0.0, %v5373
      %v5375 = vpop.f32.mrf.mxu0
      %v5376 = vadd.f32 0.0, %v5375
      %5377 = vmatmul.bf16.gmra.mxu0 %v5281
      %v5378 = vpop.f32.mrf.mxu0
      %v5379 = vadd.f32 0.0, %v5378
      %v5380 = vpop.f32.mrf.mxu0
      %v5381 = vadd.f32 0.0, %v5380
      %5382 = vmatmul.bf16.gmra.mxu0 %v5284
      %v5383 = vpop.f32.mrf.mxu0
      %v5384 = vadd.f32 0.0, %v5383
      %v5385 = vpop.f32.mrf.mxu0
      %v5386 = vadd.f32 0.0, %v5385
      %5387 = vmatmul.bf16.gmra.mxu0 %v5287
      %v5388 = vpop.f32.mrf.mxu0
      %v5389 = vadd.f32 0.0, %v5388
      %v5390 = vpop.f32.mrf.mxu0
      %v5391 = vadd.f32 0.0, %v5390
      %5392 = vmatmul.bf16.gmra.mxu0 %v5290
      %v5393 = vpop.f32.mrf.mxu0
      %v5394 = vadd.f32 0.0, %v5393
      %v5395 = vpop.f32.mrf.mxu0
      %v5396 = vadd.f32 0.0, %v5395
      %5397 = vmatmul.bf16.gmra.mxu0 %v5293
      %v5398 = vpop.f32.mrf.mxu0
      %v5399 = vadd.f32 0.0, %v5398
      %v5400 = vpop.f32.mrf.mxu0
      %v5401 = vadd.f32 0.0, %v5400
      %5402 = vmatmul.bf16.gmra.mxu0 %v5296
      %v5403 = vpop.f32.mrf.mxu0
      %v5404 = vadd.f32 0.0, %v5403
      %v5405 = vpop.f32.mrf.mxu0
      %v5406 = vadd.f32 0.0, %v5405
      %5407 = vmatmul.bf16.gmra.mxu0 %v5299
      %v5408 = vpop.f32.mrf.mxu0
      %v5409 = vadd.f32 0.0, %v5408
      %v5410 = vpop.f32.mrf.mxu0
      %v5411 = vadd.f32 0.0, %v5410
      %5412 = vmatmul.bf16.gmra.mxu0 %v5302
      %v5413 = vpop.f32.mrf.mxu0
      %v5414 = vadd.f32 0.0, %v5413
      %v5415 = vpop.f32.mrf.mxu0
      %v5416 = vadd.f32 0.0, %v5415
      %5417 = vmatmul.bf16.gmra.mxu0 %v5305
      %v5418 = vpop.f32.mrf.mxu0
      %v5419 = vadd.f32 0.0, %v5418
      %v5420 = vpop.f32.mrf.mxu0
      %v5421 = vadd.f32 0.0, %v5420
      %5422 = vmatmul.bf16.gmra.mxu0 %v5308
      %v5423 = vpop.f32.mrf.mxu0
      %v5424 = vadd.f32 0.0, %v5423
      %v5425 = vpop.f32.mrf.mxu0
      %v5426 = vadd.f32 0.0, %v5425
      %5427 = vmatmul.bf16.gmra.mxu0 %v5311
      %v5428 = vpop.f32.mrf.mxu0
      %v5429 = vadd.f32 0.0, %v5428
      %v5430 = vpop.f32.mrf.mxu0
      %v5431 = vadd.f32 0.0, %v5430
      %5432 = vmatmul.bf16.gmra.mxu0 %v5314
      %v5433 = vpop.f32.mrf.mxu0
      %v5434 = vadd.f32 0.0, %v5433
      %v5435 = vpop.f32.mrf.mxu0
      %v5436 = vadd.f32 0.0, %v5435
      %5437 = vmatmul.bf16.gmra.mxu0 %v5317
      %v5438 = vpop.f32.mrf.mxu0
      %v5439 = vadd.f32 0.0, %v5438
      %v5440 = vpop.f32.mrf.mxu0
      %v5441 = vadd.f32 0.0, %v5440
      %5442 = vmatmul.bf16.gmra.mxu0 %v5320
      %v5443 = vpop.f32.mrf.mxu0
      %v5444 = vadd.f32 0.0, %v5443
      %v5445 = vpop.f32.mrf.mxu0
      %v5446 = vadd.f32 0.0, %v5445
      %5447 = vmatmul.bf16.gmra.mxu0 %v5323
      %v5448 = vpop.f32.mrf.mxu0
      %v5449 = vadd.f32 0.0, %v5448
      %v5450 = vpop.f32.mrf.mxu0
      %v5451 = vadd.f32 0.0, %v5450
      %5452 = vmatmul.bf16.gmra.mxu0 %v5326
      %v5453 = vpop.f32.mrf.mxu0
      %v5454 = vadd.f32 0.0, %v5453
      %v5455 = vpop.f32.mrf.mxu0
      %v5456 = vadd.f32 0.0, %v5455
      %5457 = vmatmul.bf16.gmra.mxu0 %v5329
      %v5458 = vpop.f32.mrf.mxu0
      %v5459 = vadd.f32 0.0, %v5458
      %v5460 = vpop.f32.mrf.mxu0
      %v5461 = vadd.f32 0.0, %v5460
      %5462 = vdwg.mxu0
      %v5463 = vadd.f32 %v4841, %v5344
      %v5464 = vadd.f32 %v4842, %v5346
      %v5465 = vadd.f32 %v4843, %v5349
      %v5466 = vadd.f32 %v4844, %v5351
      %v5467 = vadd.f32 %v4845, %v5354
      %v5468 = vadd.f32 %v4846, %v5356
      %v5469 = vadd.f32 %v4847, %v5359
      %v5470 = vadd.f32 %v4848, %v5361
      %v5471 = vadd.f32 %v4849, %v5364
      %v5472 = vadd.f32 %v4850, %v5366
      %v5473 = vadd.f32 %v4851, %v5369
      %v5474 = vadd.f32 %v4852, %v5371
      %v5475 = vadd.f32 %v4853, %v5374
      %v5476 = vadd.f32 %v4854, %v5376
      %v5477 = vadd.f32 %v4855, %v5379
      %v5478 = vadd.f32 %v4856, %v5381
      %v5479 = vadd.f32 %v4857, %v5384
      %v5480 = vadd.f32 %v4858, %v5386
      %v5481 = vadd.f32 %v4859, %v5389
      %v5482 = vadd.f32 %v4860, %v5391
      %v5483 = vadd.f32 %v4861, %v5394
      %v5484 = vadd.f32 %v4862, %v5396
      %v5485 = vadd.f32 %v4863, %v5399
      %v5486 = vadd.f32 %v4864, %v5401
      %v5487 = vadd.f32 %v4865, %v5404
      %v5488 = vadd.f32 %v4866, %v5406
      %v5489 = vadd.f32 %v4867, %v5409
      %v5490 = vadd.f32 %v4868, %v5411
      %v5491 = vadd.f32 %v4869, %v5414
      %v5492 = vadd.f32 %v4870, %v5416
      %v5493 = vadd.f32 %v4871, %v5419
      %v5494 = vadd.f32 %v4872, %v5421
      %v5495 = vadd.f32 %v4873, %v5424
      %v5496 = vadd.f32 %v4874, %v5426
      %v5497 = vadd.f32 %v4875, %v5429
      %v5498 = vadd.f32 %v4876, %v5431
      %v5499 = vadd.f32 %v4877, %v5434
      %v5500 = vadd.f32 %v4878, %v5436
      %v5501 = vadd.f32 %v4879, %v5439
      %v5502 = vadd.f32 %v4880, %v5441
      %v5503 = vadd.f32 %v4881, %v5444
      %v5504 = vadd.f32 %v4882, %v5446
      %v5505 = vadd.f32 %v4883, %v5449
      %v5506 = vadd.f32 %v4884, %v5451
      %v5507 = vadd.f32 %v4885, %v5454
      %v5508 = vadd.f32 %v4886, %v5456
      %v5509 = vadd.f32 %v4887, %v5459
      %v5510 = vadd.f32 %v4888, %v5461
      %v5511 = vld [vmem:[%s207 + $0x18] sm:$0xe]
      %s5512 = scalar_lea.vmem %s1, 16
      %v5513 = vld [vmem:[%s5512] sm:$0x3]
      %v5515 = vunpack.c.l.b16 %v5511
      %v5516 = vpack.c.b16 %v4990, %v5515
      %v5517 = vrot.slane %v5516, 1
      %v5518 = vrot.slane %v5039, 1
      %v5519 = vsel %vm2814, %v5517, %v5518
      %v5520 = vrot.slane %v5040, 1
      %v5521 = vsel %vm2814, %v5518, %v5520
      %v5522 = vrot.slane %v5041, 1
      %v5523 = vsel %vm2814, %v5520, %v5522
      %v5524 = vrot.slane %v5042, 1
      %v5525 = vsel %vm2814, %v5522, %v5524
      %v5526 = vrot.slane %v5043, 1
      %v5527 = vsel %vm2814, %v5524, %v5526
      %v5528 = vrot.slane %v5044, 1
      %v5529 = vsel %vm2814, %v5526, %v5528
      %v5530 = vrot.slane %v5045, 1
      %v5531 = vsel %vm2814, %v5528, %v5530
      %v5532 = vrot.slane %v5046, 1
      %v5533 = vsel %vm2814, %v5530, %v5532
      %v5534 = vrot.slane %v5047, 1
      %v5535 = vsel %vm2814, %v5532, %v5534
      %v5536 = vrot.slane %v5048, 1
      %v5537 = vsel %vm2814, %v5534, %v5536
      %v5538 = vrot.slane %v5049, 1
      %v5539 = vsel %vm2814, %v5536, %v5538
      %v5540 = vrot.slane %v5050, 1
      %v5541 = vsel %vm2814, %v5538, %v5540
      %v5542 = vrot.slane %v5051, 1
      %v5543 = vsel %vm2814, %v5540, %v5542
      %v5544 = vrot.slane %v5052, 1
      %v5545 = vsel %vm2814, %v5542, %v5544
      %v5546 = vrot.slane %v5053, 1
      %v5547 = vsel %vm2814, %v5544, %v5546
      %v5548 = vrot.slane %v5054, 1
      %v5549 = vsel %vm2814, %v5546, %v5548
      %v5550 = vrot.slane %v5055, 1
      %v5551 = vsel %vm2814, %v5548, %v5550
      %v5552 = vrot.slane %v5056, 1
      %v5553 = vsel %vm2814, %v5550, %v5552
      %v5554 = vrot.slane %v5057, 1
      %v5555 = vsel %vm2814, %v5552, %v5554
      %v5556 = vrot.slane %v5058, 1
      %v5557 = vsel %vm2814, %v5554, %v5556
      %v5558 = vrot.slane %v5059, 1
      %v5559 = vsel %vm2814, %v5556, %v5558
      %v5560 = vrot.slane %v5060, 1
      %v5561 = vsel %vm2814, %v5558, %v5560
      %v5562 = vrot.slane %v5061, 1
      %v5563 = vsel %vm2814, %v5560, %v5562
      %v5564 = vrot.slane %v5062, 1
      %v5565 = vsel %vm2814, %v5562, %v5564
      %v5567 = vsel %vm2422, %v5519, 0
      %v5570 = vsel %vm2422, %v5521, 0
      %v5573 = vsel %vm2422, %v5523, 0
      %v5576 = vsel %vm2422, %v5525, 0
      %v5579 = vsel %vm2422, %v5527, 0
      %v5582 = vsel %vm2422, %v5529, 0
      %v5585 = vsel %vm2422, %v5531, 0
      %v5588 = vsel %vm2422, %v5533, 0
      %v5591 = vsel %vm2422, %v5535, 0
      %v5594 = vsel %vm2422, %v5537, 0
      %v5597 = vsel %vm2422, %v5539, 0
      %v5600 = vsel %vm2422, %v5541, 0
      %v5603 = vsel %vm2422, %v5543, 0
      %v5606 = vsel %vm2422, %v5545, 0
      %v5609 = vsel %vm2422, %v5547, 0
      %v5612 = vsel %vm2422, %v5549, 0
      %v5615 = vsel %vm2422, %v5551, 0
      %v5618 = vsel %vm2422, %v5553, 0
      %v5621 = vsel %vm2422, %v5555, 0
      %v5624 = vsel %vm2422, %v5557, 0
      %v5627 = vsel %vm2422, %v5559, 0
      %v5630 = vsel %vm2422, %v5561, 0
      %v5633 = vsel %vm2422, %v5563, 0
      %v5636 = vsel %vm2422, %v5565, 0
      %v5639 = vsel %vm2495, %v5513, 0
      %5641 = vmatpush.bf16.msra.mxu0 0
      %5642 = vmatpush.bf16.msra.mxu0 0
      %5643 = vmatpush.bf16.msra.mxu0 0
      %5644 = vmatpush.bf16.msra.mxu0 0
      %5645 = vmatpush.bf16.msra.mxu0 0
      %5646 = vmatpush.bf16.msra.mxu0 0
      %5647 = vmatpush.bf16.msra.mxu0 0
      %5648 = vmatpush.bf16.msra.mxu0 %v5639
      %5649 = vmatmul.bf16.gmra.mxu0 %v5567
      %v5650 = vpop.f32.mrf.mxu0
      %v5651 = vadd.f32 0.0, %v5650
      %v5652 = vpop.f32.mrf.mxu0
      %v5653 = vadd.f32 0.0, %v5652
      %5654 = vmatmul.bf16.gmra.mxu0 %v5570
      %v5655 = vpop.f32.mrf.mxu0
      %v5656 = vadd.f32 0.0, %v5655
      %v5657 = vpop.f32.mrf.mxu0
      %v5658 = vadd.f32 0.0, %v5657
      %5659 = vmatmul.bf16.gmra.mxu0 %v5573
      %v5660 = vpop.f32.mrf.mxu0
      %v5661 = vadd.f32 0.0, %v5660
      %v5662 = vpop.f32.mrf.mxu0
      %v5663 = vadd.f32 0.0, %v5662
      %5664 = vmatmul.bf16.gmra.mxu0 %v5576
      %v5665 = vpop.f32.mrf.mxu0
      %v5666 = vadd.f32 0.0, %v5665
      %v5667 = vpop.f32.mrf.mxu0
      %v5668 = vadd.f32 0.0, %v5667
      %5669 = vmatmul.bf16.gmra.mxu0 %v5579
      %v5670 = vpop.f32.mrf.mxu0
      %v5671 = vadd.f32 0.0, %v5670
      %v5672 = vpop.f32.mrf.mxu0
      %v5673 = vadd.f32 0.0, %v5672
      %5674 = vmatmul.bf16.gmra.mxu0 %v5582
      %v5675 = vpop.f32.mrf.mxu0
      %v5676 = vadd.f32 0.0, %v5675
      %v5677 = vpop.f32.mrf.mxu0
      %v5678 = vadd.f32 0.0, %v5677
      %5679 = vmatmul.bf16.gmra.mxu0 %v5585
      %v5680 = vpop.f32.mrf.mxu0
      %v5681 = vadd.f32 0.0, %v5680
      %v5682 = vpop.f32.mrf.mxu0
      %v5683 = vadd.f32 0.0, %v5682
      %5684 = vmatmul.bf16.gmra.mxu0 %v5588
      %v5685 = vpop.f32.mrf.mxu0
      %v5686 = vadd.f32 0.0, %v5685
      %v5687 = vpop.f32.mrf.mxu0
      %v5688 = vadd.f32 0.0, %v5687
      %5689 = vmatmul.bf16.gmra.mxu0 %v5591
      %v5690 = vpop.f32.mrf.mxu0
      %v5691 = vadd.f32 0.0, %v5690
      %v5692 = vpop.f32.mrf.mxu0
      %v5693 = vadd.f32 0.0, %v5692
      %5694 = vmatmul.bf16.gmra.mxu0 %v5594
      %v5695 = vpop.f32.mrf.mxu0
      %v5696 = vadd.f32 0.0, %v5695
      %v5697 = vpop.f32.mrf.mxu0
      %v5698 = vadd.f32 0.0, %v5697
      %5699 = vmatmul.bf16.gmra.mxu0 %v5597
      %v5700 = vpop.f32.mrf.mxu0
      %v5701 = vadd.f32 0.0, %v5700
      %v5702 = vpop.f32.mrf.mxu0
      %v5703 = vadd.f32 0.0, %v5702
      %5704 = vmatmul.bf16.gmra.mxu0 %v5600
      %v5705 = vpop.f32.mrf.mxu0
      %v5706 = vadd.f32 0.0, %v5705
      %v5707 = vpop.f32.mrf.mxu0
      %v5708 = vadd.f32 0.0, %v5707
      %5709 = vmatmul.bf16.gmra.mxu0 %v5603
      %v5710 = vpop.f32.mrf.mxu0
      %v5711 = vadd.f32 0.0, %v5710
      %v5712 = vpop.f32.mrf.mxu0
      %v5713 = vadd.f32 0.0, %v5712
      %5714 = vmatmul.bf16.gmra.mxu0 %v5606
      %v5715 = vpop.f32.mrf.mxu0
      %v5716 = vadd.f32 0.0, %v5715
      %v5717 = vpop.f32.mrf.mxu0
      %v5718 = vadd.f32 0.0, %v5717
      %5719 = vmatmul.bf16.gmra.mxu0 %v5609
      %v5720 = vpop.f32.mrf.mxu0
      %v5721 = vadd.f32 0.0, %v5720
      %v5722 = vpop.f32.mrf.mxu0
      %v5723 = vadd.f32 0.0, %v5722
      %5724 = vmatmul.bf16.gmra.mxu0 %v5612
      %v5725 = vpop.f32.mrf.mxu0
      %v5726 = vadd.f32 0.0, %v5725
      %v5727 = vpop.f32.mrf.mxu0
      %v5728 = vadd.f32 0.0, %v5727
      %5729 = vmatmul.bf16.gmra.mxu0 %v5615
      %v5730 = vpop.f32.mrf.mxu0
      %v5731 = vadd.f32 0.0, %v5730
      %v5732 = vpop.f32.mrf.mxu0
      %v5733 = vadd.f32 0.0, %v5732
      %5734 = vmatmul.bf16.gmra.mxu0 %v5618
      %v5735 = vpop.f32.mrf.mxu0
      %v5736 = vadd.f32 0.0, %v5735
      %v5737 = vpop.f32.mrf.mxu0
      %v5738 = vadd.f32 0.0, %v5737
      %5739 = vmatmul.bf16.gmra.mxu0 %v5621
      %v5740 = vpop.f32.mrf.mxu0
      %v5741 = vadd.f32 0.0, %v5740
      %v5742 = vpop.f32.mrf.mxu0
      %v5743 = vadd.f32 0.0, %v5742
      %5744 = vmatmul.bf16.gmra.mxu0 %v5624
      %v5745 = vpop.f32.mrf.mxu0
      %v5746 = vadd.f32 0.0, %v5745
      %v5747 = vpop.f32.mrf.mxu0
      %v5748 = vadd.f32 0.0, %v5747
      %5749 = vmatmul.bf16.gmra.mxu0 %v5627
      %v5750 = vpop.f32.mrf.mxu0
      %v5751 = vadd.f32 0.0, %v5750
      %v5752 = vpop.f32.mrf.mxu0
      %v5753 = vadd.f32 0.0, %v5752
      %5754 = vmatmul.bf16.gmra.mxu0 %v5630
      %v5755 = vpop.f32.mrf.mxu0
      %v5756 = vadd.f32 0.0, %v5755
      %v5757 = vpop.f32.mrf.mxu0
      %v5758 = vadd.f32 0.0, %v5757
      %5759 = vmatmul.bf16.gmra.mxu0 %v5633
      %v5760 = vpop.f32.mrf.mxu0
      %v5761 = vadd.f32 0.0, %v5760
      %v5762 = vpop.f32.mrf.mxu0
      %v5763 = vadd.f32 0.0, %v5762
      %5764 = vmatmul.bf16.gmra.mxu0 %v5636
      %v5765 = vpop.f32.mrf.mxu0
      %v5766 = vadd.f32 0.0, %v5765
      %v5767 = vpop.f32.mrf.mxu0
      %v5768 = vadd.f32 0.0, %v5767
      %5769 = vdwg.mxu0
      %v5770 = vadd.f32 %v5463, %v5651
      %v5771 = vadd.f32 %v5464, %v5653
      %v5772 = vadd.f32 %v5465, %v5656
      %v5773 = vadd.f32 %v5466, %v5658
      %v5774 = vadd.f32 %v5467, %v5661
      %v5775 = vadd.f32 %v5468, %v5663
      %v5776 = vadd.f32 %v5469, %v5666
      %v5777 = vadd.f32 %v5470, %v5668
      %v5778 = vadd.f32 %v5471, %v5671
      %v5779 = vadd.f32 %v5472, %v5673
      %v5780 = vadd.f32 %v5473, %v5676
      %v5781 = vadd.f32 %v5474, %v5678
      %v5782 = vadd.f32 %v5475, %v5681
      %v5783 = vadd.f32 %v5476, %v5683
      %v5784 = vadd.f32 %v5477, %v5686
      %v5785 = vadd.f32 %v5478, %v5688
      %v5786 = vadd.f32 %v5479, %v5691
      %v5787 = vadd.f32 %v5480, %v5693
      %v5788 = vadd.f32 %v5481, %v5696
      %v5789 = vadd.f32 %v5482, %v5698
      %v5790 = vadd.f32 %v5483, %v5701
      %v5791 = vadd.f32 %v5484, %v5703
      %v5792 = vadd.f32 %v5485, %v5706
      %v5793 = vadd.f32 %v5486, %v5708
      %v5794 = vadd.f32 %v5487, %v5711
      %v5795 = vadd.f32 %v5488, %v5713
      %v5796 = vadd.f32 %v5489, %v5716
      %v5797 = vadd.f32 %v5490, %v5718
      %v5798 = vadd.f32 %v5491, %v5721
      %v5799 = vadd.f32 %v5492, %v5723
      %v5800 = vadd.f32 %v5493, %v5726
      %v5801 = vadd.f32 %v5494, %v5728
      %v5802 = vadd.f32 %v5495, %v5731
      %v5803 = vadd.f32 %v5496, %v5733
      %v5804 = vadd.f32 %v5497, %v5736
      %v5805 = vadd.f32 %v5498, %v5738
      %v5806 = vadd.f32 %v5499, %v5741
      %v5807 = vadd.f32 %v5500, %v5743
      %v5808 = vadd.f32 %v5501, %v5746
      %v5809 = vadd.f32 %v5502, %v5748
      %v5810 = vadd.f32 %v5503, %v5751
      %v5811 = vadd.f32 %v5504, %v5753
      %v5812 = vadd.f32 %v5505, %v5756
      %v5813 = vadd.f32 %v5506, %v5758
      %v5814 = vadd.f32 %v5507, %v5761
      %v5815 = vadd.f32 %v5508, %v5763
      %v5816 = vadd.f32 %v5509, %v5766
      %v5817 = vadd.f32 %v5510, %v5768
      %v5818 = vmul.f32 %v5770, %v2002
      %v5819 = vmul.f32 %v5771, %v2003
      %v5820 = vmul.f32 %v5772, %v2004
      %v5821 = vmul.f32 %v5773, %v2005
      %v5822 = vmul.f32 %v5774, %v2006
      %v5823 = vmul.f32 %v5775, %v2007
      %v5824 = vmul.f32 %v5776, %v2008
      %v5825 = vmul.f32 %v5777, %v2009
      %v5826 = vmul.f32 %v5778, %v2010
      %v5827 = vmul.f32 %v5779, %v2011
      %v5828 = vmul.f32 %v5780, %v2012
      %v5829 = vmul.f32 %v5781, %v2013
      %v5830 = vmul.f32 %v5782, %v2014
      %v5831 = vmul.f32 %v5783, %v2015
      %v5832 = vmul.f32 %v5784, %v2016
      %v5833 = vmul.f32 %v5785, %v2017
      %v5834 = vmul.f32 %v5786, %v2018
      %v5835 = vmul.f32 %v5787, %v2019
      %v5836 = vmul.f32 %v5788, %v2020
      %v5837 = vmul.f32 %v5789, %v2021
      %v5838 = vmul.f32 %v5790, %v2022
      %v5839 = vmul.f32 %v5791, %v2023
      %v5840 = vmul.f32 %v5792, %v2024
      %v5841 = vmul.f32 %v5793, %v2025
      %v5842 = vmul.f32 %v5794, %v2026
      %v5843 = vmul.f32 %v5795, %v2027
      %v5844 = vmul.f32 %v5796, %v2028
      %v5845 = vmul.f32 %v5797, %v2029
      %v5846 = vmul.f32 %v5798, %v2030
      %v5847 = vmul.f32 %v5799, %v2031
      %v5848 = vmul.f32 %v5800, %v2032
      %v5849 = vmul.f32 %v5801, %v2033
      %v5850 = vmul.f32 %v5802, %v2034
      %v5851 = vmul.f32 %v5803, %v2035
      %v5852 = vmul.f32 %v5804, %v2036
      %v5853 = vmul.f32 %v5805, %v2037
      %v5854 = vmul.f32 %v5806, %v2038
      %v5855 = vmul.f32 %v5807, %v2039
      %v5856 = vmul.f32 %v5808, %v2040
      %v5857 = vmul.f32 %v5809, %v2041
      %v5858 = vmul.f32 %v5810, %v2042
      %v5859 = vmul.f32 %v5811, %v2043
      %v5860 = vmul.f32 %v5812, %v2044
      %v5861 = vmul.f32 %v5813, %v2045
      %v5862 = vmul.f32 %v5814, %v2046
      %v5863 = vmul.f32 %v5815, %v2047
      %v5864 = vmul.f32 %v5816, %v2048
      %v5865 = vmul.f32 %v5817, %v2049
      %v5866 = vadd.f32 %v5818, %v5819
      %v5867 = vadd.f32 %v5866, %v5820
      %v5868 = vadd.f32 %v5867, %v5821
      %v5869 = vadd.f32 %v5868, %v5822
      %v5870 = vadd.f32 %v5869, %v5823
      %v5871 = vadd.f32 %v5870, %v5824
      %v5872 = vadd.f32 %v5871, %v5825
      %v5873 = vadd.f32 %v5872, %v5826
      %v5874 = vadd.f32 %v5873, %v5827
      %v5875 = vadd.f32 %v5874, %v5828
      %v5876 = vadd.f32 %v5875, %v5829
      %v5877 = vadd.f32 %v5876, %v5830
      %v5878 = vadd.f32 %v5877, %v5831
      %v5879 = vadd.f32 %v5878, %v5832
      %v5880 = vadd.f32 %v5879, %v5833
      %v5881 = vadd.f32 %v5880, %v5834
      %v5882 = vadd.f32 %v5881, %v5835
      %v5883 = vadd.f32 %v5882, %v5836
      %v5884 = vadd.f32 %v5883, %v5837
      %v5885 = vadd.f32 %v5884, %v5838
      %v5886 = vadd.f32 %v5885, %v5839
      %v5887 = vadd.f32 %v5886, %v5840
      %v5888 = vadd.f32 %v5887, %v5841
      %v5889 = vadd.f32 %v5888, %v5842
      %v5890 = vadd.f32 %v5889, %v5843
      %v5891 = vadd.f32 %v5890, %v5844
      %v5892 = vadd.f32 %v5891, %v5845
      %v5893 = vadd.f32 %v5892, %v5846
      %v5894 = vadd.f32 %v5893, %v5847
      %v5895 = vadd.f32 %v5894, %v5848
      %v5896 = vadd.f32 %v5895, %v5849
      %v5897 = vadd.f32 %v5896, %v5850
      %v5898 = vadd.f32 %v5897, %v5851
      %v5899 = vadd.f32 %v5898, %v5852
      %v5900 = vadd.f32 %v5899, %v5853
      %v5901 = vadd.f32 %v5900, %v5854
      %v5902 = vadd.f32 %v5901, %v5855
      %v5903 = vadd.f32 %v5902, %v5856
      %v5904 = vadd.f32 %v5903, %v5857
      %v5905 = vadd.f32 %v5904, %v5858
      %v5906 = vadd.f32 %v5905, %v5859
      %v5907 = vadd.f32 %v5906, %v5860
      %v5908 = vadd.f32 %v5907, %v5861
      %v5909 = vadd.f32 %v5908, %v5862
      %v5910 = vadd.f32 %v5909, %v5863
      %v5911 = vadd.f32 %v5910, %v5864
      %v5912 = vadd.f32 %v5911, %v5865
      %v5913 = vrot.slane %v5912, 4
      %v5914 = vadd.f32 %v5912, %v5913
      %v5915 = vrot.slane %v5914, 2
      %v5916 = vadd.f32 %v5914, %v5915
      %v5917 = vrot.slane %v5916, 1
      %v5918 = vadd.f32 %v5916, %v5917
      %v5919 = vadd.f32 %v5918, 0.0
      %v5920 = vmul.f32 %v5818, %v5770
      %v5921 = vmul.f32 %v5819, %v5771
      %v5922 = vmul.f32 %v5820, %v5772
      %v5923 = vmul.f32 %v5821, %v5773
      %v5924 = vmul.f32 %v5822, %v5774
      %v5925 = vmul.f32 %v5823, %v5775
      %v5926 = vmul.f32 %v5824, %v5776
      %v5927 = vmul.f32 %v5825, %v5777
      %v5928 = vmul.f32 %v5826, %v5778
      %v5929 = vmul.f32 %v5827, %v5779
      %v5930 = vmul.f32 %v5828, %v5780
      %v5931 = vmul.f32 %v5829, %v5781
      %v5932 = vmul.f32 %v5830, %v5782
      %v5933 = vmul.f32 %v5831, %v5783
      %v5934 = vmul.f32 %v5832, %v5784
      %v5935 = vmul.f32 %v5833, %v5785
      %v5936 = vmul.f32 %v5834, %v5786
      %v5937 = vmul.f32 %v5835, %v5787
      %v5938 = vmul.f32 %v5836, %v5788
      %v5939 = vmul.f32 %v5837, %v5789
      %v5940 = vmul.f32 %v5838, %v5790
      %v5941 = vmul.f32 %v5839, %v5791
      %v5942 = vmul.f32 %v5840, %v5792
      %v5943 = vmul.f32 %v5841, %v5793
      %v5944 = vmul.f32 %v5842, %v5794
      %v5945 = vmul.f32 %v5843, %v5795
      %v5946 = vmul.f32 %v5844, %v5796
      %v5947 = vmul.f32 %v5845, %v5797
      %v5948 = vmul.f32 %v5846, %v5798
      %v5949 = vmul.f32 %v5847, %v5799
      %v5950 = vmul.f32 %v5848, %v5800
      %v5951 = vmul.f32 %v5849, %v5801
      %v5952 = vmul.f32 %v5850, %v5802
      %v5953 = vmul.f32 %v5851, %v5803
      %v5954 = vmul.f32 %v5852, %v5804
      %v5955 = vmul.f32 %v5853, %v5805
      %v5956 = vmul.f32 %v5854, %v5806
      %v5957 = vmul.f32 %v5855, %v5807
      %v5958 = vmul.f32 %v5856, %v5808
      %v5959 = vmul.f32 %v5857, %v5809
      %v5960 = vmul.f32 %v5858, %v5810
      %v5961 = vmul.f32 %v5859, %v5811
      %v5962 = vmul.f32 %v5860, %v5812
      %v5963 = vmul.f32 %v5861, %v5813
      %v5964 = vmul.f32 %v5862, %v5814
      %v5965 = vmul.f32 %v5863, %v5815
      %v5966 = vmul.f32 %v5864, %v5816
      %v5967 = vmul.f32 %v5865, %v5817
      %v5968 = vadd.f32 %v5920, %v5921
      %v5969 = vadd.f32 %v5968, %v5922
      %v5970 = vadd.f32 %v5969, %v5923
      %v5971 = vadd.f32 %v5970, %v5924
      %v5972 = vadd.f32 %v5971, %v5925
      %v5973 = vadd.f32 %v5972, %v5926
      %v5974 = vadd.f32 %v5973, %v5927
      %v5975 = vadd.f32 %v5974, %v5928
      %v5976 = vadd.f32 %v5975, %v5929
      %v5977 = vadd.f32 %v5976, %v5930
      %v5978 = vadd.f32 %v5977, %v5931
      %v5979 = vadd.f32 %v5978, %v5932
      %v5980 = vadd.f32 %v5979, %v5933
      %v5981 = vadd.f32 %v5980, %v5934
      %v5982 = vadd.f32 %v5981, %v5935
      %v5983 = vadd.f32 %v5982, %v5936
      %v5984 = vadd.f32 %v5983, %v5937
      %v5985 = vadd.f32 %v5984, %v5938
      %v5986 = vadd.f32 %v5985, %v5939
      %v5987 = vadd.f32 %v5986, %v5940
      %v5988 = vadd.f32 %v5987, %v5941
      %v5989 = vadd.f32 %v5988, %v5942
      %v5990 = vadd.f32 %v5989, %v5943
      %v5991 = vadd.f32 %v5990, %v5944
      %v5992 = vadd.f32 %v5991, %v5945
      %v5993 = vadd.f32 %v5992, %v5946
      %v5994 = vadd.f32 %v5993, %v5947
      %v5995 = vadd.f32 %v5994, %v5948
      %v5996 = vadd.f32 %v5995, %v5949
      %v5997 = vadd.f32 %v5996, %v5950
      %v5998 = vadd.f32 %v5997, %v5951
      %v5999 = vadd.f32 %v5998, %v5952
      %v6000 = vadd.f32 %v5999, %v5953
      %v6001 = vadd.f32 %v6000, %v5954
      %v6002 = vadd.f32 %v6001, %v5955
      %v6003 = vadd.f32 %v6002, %v5956
      %v6004 = vadd.f32 %v6003, %v5957
      %v6005 = vadd.f32 %v6004, %v5958
      %v6006 = vadd.f32 %v6005, %v5959
      %v6007 = vadd.f32 %v6006, %v5960
      %v6008 = vadd.f32 %v6007, %v5961
      %v6009 = vadd.f32 %v6008, %v5962
      %v6010 = vadd.f32 %v6009, %v5963
      %v6011 = vadd.f32 %v6010, %v5964
      %v6012 = vadd.f32 %v6011, %v5965
      %v6013 = vadd.f32 %v6012, %v5966
      %v6014 = vadd.f32 %v6013, %v5967
      %v6015 = vrot.slane %v6014, 4
      %v6016 = vadd.f32 %v6014, %v6015
      %v6017 = vrot.slane %v6016, 2
      %v6018 = vadd.f32 %v6016, %v6017
      %v6019 = vrot.slane %v6018, 1
      %v6020 = vadd.f32 %v6018, %v6019
      %v6021 = vadd.f32 %v6020, 0.0
      %6022 = vst [vmem:[#allocation2] sm:$0xff] %v5770
      %6023 = vst [vmem:[#allocation2 + $0x8] sm:$0xff] %v5771
      %6024 = vst [vmem:[#allocation2 + $0x10] sm:$0xff] %v5772
      %6025 = vst [vmem:[#allocation2 + $0x18] sm:$0xff] %v5773
      %6026 = vst [vmem:[#allocation2 + $0x20] sm:$0xff] %v5774
      %6027 = vst [vmem:[#allocation2 + $0x28] sm:$0xff] %v5775
      %6028 = vst [vmem:[#allocation2 + $0x30] sm:$0xff] %v5776
      %6029 = vst [vmem:[#allocation2 + $0x38] sm:$0xff] %v5777
      %6030 = vst [vmem:[#allocation2 + $0x40] sm:$0xff] %v5778
      %6031 = vst [vmem:[#allocation2 + $0x48] sm:$0xff] %v5779
      %6032 = vst [vmem:[#allocation2 + $0x50] sm:$0xff] %v5780
      %6033 = vst [vmem:[#allocation2 + $0x58] sm:$0xff] %v5781
      %6034 = vst [vmem:[#allocation2 + $0x60] sm:$0xff] %v5782
      %6035 = vst [vmem:[#allocation2 + $0x68] sm:$0xff] %v5783
      %6036 = vst [vmem:[#allocation2 + $0x70] sm:$0xff] %v5784
      %6037 = vst [vmem:[#allocation2 + $0x78] sm:$0xff] %v5785
      %6038 = vst [vmem:[#allocation2 + $0x80] sm:$0xff] %v5786
      %6039 = vst [vmem:[#allocation2 + $0x88] sm:$0xff] %v5787
      %6040 = vst [vmem:[#allocation2 + $0x90] sm:$0xff] %v5788
      %6041 = vst [vmem:[#allocation2 + $0x98] sm:$0xff] %v5789
      %6042 = vst [vmem:[#allocation2 + $0xa0] sm:$0xff] %v5790
      %6043 = vst [vmem:[#allocation2 + $0xa8] sm:$0xff] %v5791
      %6044 = vst [vmem:[#allocation2 + $0xb0] sm:$0xff] %v5792
      %6045 = vst [vmem:[#allocation2 + $0xb8] sm:$0xff] %v5793
      %6046 = vst [vmem:[#allocation2 + $0xc0] sm:$0xff] %v5794
      %6047 = vst [vmem:[#allocation2 + $0xc8] sm:$0xff] %v5795
      %6048 = vst [vmem:[#allocation2 + $0xd0] sm:$0xff] %v5796
      %6049 = vst [vmem:[#allocation2 + $0xd8] sm:$0xff] %v5797
      %6050 = vst [vmem:[#allocation2 + $0xe0] sm:$0xff] %v5798
      %6051 = vst [vmem:[#allocation2 + $0xe8] sm:$0xff] %v5799
      %6052 = vst [vmem:[#allocation2 + $0xf0] sm:$0xff] %v5800
      %6053 = vst [vmem:[#allocation2 + $0xf8] sm:$0xff] %v5801
      %6054 = vst [vmem:[#allocation2 + $0x100] sm:$0xff] %v5802
      %6055 = vst [vmem:[#allocation2 + $0x108] sm:$0xff] %v5803
      %6056 = vst [vmem:[#allocation2 + $0x110] sm:$0xff] %v5804
      %6057 = vst [vmem:[#allocation2 + $0x118] sm:$0xff] %v5805
      %6058 = vst [vmem:[#allocation2 + $0x120] sm:$0xff] %v5806
      %6059 = vst [vmem:[#allocation2 + $0x128] sm:$0xff] %v5807
      %6060 = vst [vmem:[#allocation2 + $0x130] sm:$0xff] %v5808
      %6061 = vst [vmem:[#allocation2 + $0x138] sm:$0xff] %v5809
      %6062 = vst [vmem:[#allocation2 + $0x140] sm:$0xff] %v5810
      %6063 = vst [vmem:[#allocation2 + $0x148] sm:$0xff] %v5811
      %6064 = vst [vmem:[#allocation2 + $0x150] sm:$0xff] %v5812
      %6065 = vst [vmem:[#allocation2 + $0x158] sm:$0xff] %v5813
      %6066 = vst [vmem:[#allocation2 + $0x160] sm:$0xff] %v5814
      %6067 = vst [vmem:[#allocation2 + $0x168] sm:$0xff] %v5815
      %6068 = vst [vmem:[#allocation2 + $0x170] sm:$0xff] %v5816
      %6069 = vst [vmem:[#allocation2 + $0x178] sm:$0xff] %v5817
      %v6070 = vld [vmem:[#allocation2] ss:$2 sm:$0xff]
      %s6071 = scalar_lea.vmem [#allocation2], 24
      %v6072 = vld [vmem:[%s6071] ss:$2 sm:$0xff]
      %s6073 = scalar_lea.vmem [#allocation2], 48
      %v6074 = vld [vmem:[%s6073] ss:$2 sm:$0xff]
      %s6075 = scalar_lea.vmem [#allocation2], 72
      %v6076 = vld [vmem:[%s6075] ss:$2 sm:$0xff]
      %s6077 = scalar_lea.vmem [#allocation2], 96
      %v6078 = vld [vmem:[%s6077] ss:$2 sm:$0xff]
      %s6079 = scalar_lea.vmem [#allocation2], 120
      %v6080 = vld [vmem:[%s6079] ss:$2 sm:$0xff]
      %s6081 = scalar_lea.vmem [#allocation2], 144
      %v6082 = vld [vmem:[%s6081] ss:$2 sm:$0xff]
      %s6083 = scalar_lea.vmem [#allocation2], 168
      %v6084 = vld [vmem:[%s6083] ss:$2 sm:$0xff]
      %s6085 = scalar_lea.vmem [#allocation2], 192
      %v6086 = vld [vmem:[%s6085] ss:$2 sm:$0xff]
      %s6087 = scalar_lea.vmem [#allocation2], 216
      %v6088 = vld [vmem:[%s6087] ss:$2 sm:$0xff]
      %s6089 = scalar_lea.vmem [#allocation2], 240
      %v6090 = vld [vmem:[%s6089] ss:$2 sm:$0xff]
      %s6091 = scalar_lea.vmem [#allocation2], 264
      %v6092 = vld [vmem:[%s6091] ss:$2 sm:$0xff]
      %s6093 = scalar_lea.vmem [#allocation2], 288
      %v6094 = vld [vmem:[%s6093] ss:$2 sm:$0xff]
      %s6095 = scalar_lea.vmem [#allocation2], 312
      %v6096 = vld [vmem:[%s6095] ss:$2 sm:$0xff]
      %s6097 = scalar_lea.vmem [#allocation2], 336
      %v6098 = vld [vmem:[%s6097] ss:$2 sm:$0xff]
      %s6099 = scalar_lea.vmem [#allocation2], 360
      %v6100 = vld [vmem:[%s6099] ss:$2 sm:$0xff]
      %s6101 = scalar_lea.vmem [#allocation2], 1
      %v6102 = vld [vmem:[%s6101] ss:$2 sm:$0xff]
      %s6103 = scalar_lea.vmem [#allocation2], 25
      %v6104 = vld [vmem:[%s6103] ss:$2 sm:$0xff]
      %s6105 = scalar_lea.vmem [#allocation2], 49
      %v6106 = vld [vmem:[%s6105] ss:$2 sm:$0xff]
      %s6107 = scalar_lea.vmem [#allocation2], 73
      %v6108 = vld [vmem:[%s6107] ss:$2 sm:$0xff]
      %s6109 = scalar_lea.vmem [#allocation2], 97
      %v6110 = vld [vmem:[%s6109] ss:$2 sm:$0xff]
      %s6111 = scalar_lea.vmem [#allocation2], 121
      %v6112 = vld [vmem:[%s6111] ss:$2 sm:$0xff]
      %s6113 = scalar_lea.vmem [#allocation2], 145
      %v6114 = vld [vmem:[%s6113] ss:$2 sm:$0xff]
      %s6115 = scalar_lea.vmem [#allocation2], 169
      %v6116 = vld [vmem:[%s6115] ss:$2 sm:$0xff]
      %s6117 = scalar_lea.vmem [#allocation2], 193
      %v6118 = vld [vmem:[%s6117] ss:$2 sm:$0xff]
      %s6119 = scalar_lea.vmem [#allocation2], 217
      %v6120 = vld [vmem:[%s6119] ss:$2 sm:$0xff]
      %s6121 = scalar_lea.vmem [#allocation2], 241
      %v6122 = vld [vmem:[%s6121] ss:$2 sm:$0xff]
      %s6123 = scalar_lea.vmem [#allocation2], 265
      %v6124 = vld [vmem:[%s6123] ss:$2 sm:$0xff]
      %s6125 = scalar_lea.vmem [#allocation2], 289
      %v6126 = vld [vmem:[%s6125] ss:$2 sm:$0xff]
      %s6127 = scalar_lea.vmem [#allocation2], 313
      %v6128 = vld [vmem:[%s6127] ss:$2 sm:$0xff]
      %s6129 = scalar_lea.vmem [#allocation2], 337
      %v6130 = vld [vmem:[%s6129] ss:$2 sm:$0xff]
      %s6131 = scalar_lea.vmem [#allocation2], 361
      %v6132 = vld [vmem:[%s6131] ss:$2 sm:$0xff]
      %v6133 = vmax.f32 %v6070, %v6102
      %v6134 = vmax.f32 %v6072, %v6104
      %v6135 = vmax.f32 %v6074, %v6106
      %v6136 = vmax.f32 %v6076, %v6108
      %v6137 = vmax.f32 %v6078, %v6110
      %v6138 = vmax.f32 %v6080, %v6112
      %v6139 = vmax.f32 %v6082, %v6114
      %v6140 = vmax.f32 %v6084, %v6116
      %v6141 = vmax.f32 %v6086, %v6118
      %v6142 = vmax.f32 %v6088, %v6120
      %v6143 = vmax.f32 %v6090, %v6122
      %v6144 = vmax.f32 %v6092, %v6124
      %v6145 = vmax.f32 %v6094, %v6126
      %v6146 = vmax.f32 %v6096, %v6128
      %v6147 = vmax.f32 %v6098, %v6130
      %v6148 = vmax.f32 %v6100, %v6132
      %v6149 = vmin.f32 %v6070, %v6102
      %v6150 = vmin.f32 %v6072, %v6104
      %v6151 = vmin.f32 %v6074, %v6106
      %v6152 = vmin.f32 %v6076, %v6108
      %v6153 = vmin.f32 %v6078, %v6110
      %v6154 = vmin.f32 %v6080, %v6112
      %v6155 = vmin.f32 %v6082, %v6114
      %v6156 = vmin.f32 %v6084, %v6116
      %v6157 = vmin.f32 %v6086, %v6118
      %v6158 = vmin.f32 %v6088, %v6120
      %v6159 = vmin.f32 %v6090, %v6122
      %v6160 = vmin.f32 %v6092, %v6124
      %v6161 = vmin.f32 %v6094, %v6126
      %v6162 = vmin.f32 %v6096, %v6128
      %v6163 = vmin.f32 %v6098, %v6130
      %v6164 = vmin.f32 %v6100, %v6132
      %v6165 = vmax.f32 %v6133, %v6134
      %v6166 = vmax.f32 %v6135, %v6136
      %v6167 = vmax.f32 %v6137, %v6138
      %v6168 = vmax.f32 %v6139, %v6140
      %v6169 = vmax.f32 %v6141, %v6142
      %v6170 = vmax.f32 %v6143, %v6144
      %v6171 = vmax.f32 %v6145, %v6146
      %v6172 = vmax.f32 %v6147, %v6148
      %v6173 = vmin.f32 %v6149, %v6150
      %v6174 = vmin.f32 %v6151, %v6152
      %v6175 = vmin.f32 %v6153, %v6154
      %v6176 = vmin.f32 %v6155, %v6156
      %v6177 = vmin.f32 %v6157, %v6158
      %v6178 = vmin.f32 %v6159, %v6160
      %v6179 = vmin.f32 %v6161, %v6162
      %v6180 = vmin.f32 %v6163, %v6164
      %v6181 = vpack.c.bf16 %v6165, %v6165
      %v6182 = vpack.c.bf16 %v6166, %v6166
      %v6183 = vpack.c.bf16 %v6167, %v6167
      %v6184 = vpack.c.bf16 %v6168, %v6168
      %v6185 = vpack.c.bf16 %v6169, %v6169
      %v6186 = vpack.c.bf16 %v6170, %v6170
      %v6187 = vpack.c.bf16 %v6171, %v6171
      %v6188 = vpack.c.bf16 %v6172, %v6172
      %6189 = vst [vmem:[%s212] sm:$0xf] %v6181
      %6190 = vst [vmem:[%s212 + $0x4] sm:$0xf] %v6182
      %6191 = vst [vmem:[%s212 + $0x8] sm:$0xf] %v6183
      %6192 = vst [vmem:[%s212 + $0xc] sm:$0xf] %v6184
      %6193 = vst [vmem:[%s212 + $0x10] sm:$0xf] %v6185
      %6194 = vst [vmem:[%s212 + $0x14] sm:$0xf] %v6186
      %6195 = vst [vmem:[%s212 + $0x18] sm:$0xf] %v6187
      %6196 = vst [vmem:[%s212 + $0x1c] sm:$0xf] %v6188
      %v6197 = vpack.c.bf16 %v6173, %v6173
      %v6198 = vpack.c.bf16 %v6174, %v6174
      %v6199 = vpack.c.bf16 %v6175, %v6175
      %v6200 = vpack.c.bf16 %v6176, %v6176
      %v6201 = vpack.c.bf16 %v6177, %v6177
      %v6202 = vpack.c.bf16 %v6178, %v6178
      %v6203 = vpack.c.bf16 %v6179, %v6179
      %v6204 = vpack.c.bf16 %v6180, %v6180
      %6205 = vst [vmem:[%s217] sm:$0xf] %v6197
      %6206 = vst [vmem:[%s217 + $0x4] sm:$0xf] %v6198
      %6207 = vst [vmem:[%s217 + $0x8] sm:$0xf] %v6199
      %6208 = vst [vmem:[%s217 + $0xc] sm:$0xf] %v6200
      %6209 = vst [vmem:[%s217 + $0x10] sm:$0xf] %v6201
      %6210 = vst [vmem:[%s217 + $0x14] sm:$0xf] %v6202
      %6211 = vst [vmem:[%s217 + $0x18] sm:$0xf] %v6203
      %6212 = vst [vmem:[%s217 + $0x1c] sm:$0xf] %v6204
      %6213 = vst [vmem:[%s222] sm:$0xff] %v5919
      %6214 = vst [vmem:[%s222 + $0x8] sm:$0xff] %v6021
      %p6215 = scmp.lt.s32.totalorder %s16, 1
      %s6216 = scalar_select %p6215, %s16, 1
      %s6217 = smul.addr %s6216, 8
      %s6218 = smul.addr %s6217, 4
      %s6219 = scalar_lea.vmem %s2, %s6218
      %p6220 = scmp.lt.s32.totalorder %s16, 1
      %s6221 = scalar_select %p6220, %s16, 1
      %s6222 = smul.addr %s6221, 8
      %s6223 = smul.addr %s6222, 4
      %s6224 = scalar_lea.vmem %s3, %s6223
      %s6225 = smul.u32 2, %s16
      %p6226 = scmp.lt.s32.totalorder %s6225, 3
      %s6227 = scalar_select %p6226, %s6225, 3
      %s6228 = smul.addr %s6227, 8
      %s6229 = scalar_lea.vmem %s4, %s6228
      // Predicated region
      $region29: #{conv_block_forward.2} parent=27 // pred_check
        %p6230 = pneg %p81
      $region30: #{conv_block_forward.2} parent=27 // pred_check_branch
        %6232 = sbr.rel (%p6230) target = $region32
      $region31: #{conv_block_forward.2} parent=27 // pred_region
        _
      $region32: #{conv_block_forward.2} parent=27 // pred_fallthru
        _
      // Predicated region
      $region33: #{conv_block_forward.2} parent=27 // pred_check
        %p6233 = pneg %p107
      $region34: #{conv_block_forward.2} parent=27 // pred_check_branch
        %6235 = sbr.rel (%p6233) target = $region36
      $region35: #{conv_block_forward.2} parent=27 // pred_region
        _
      $region36: #{conv_block_forward.2} parent=27 // pred_fallthru
        _
      // Predicated region
      $region37: #{conv_block_forward.2} parent=27 // pred_check
        %p6236 = pneg %p133
      $region38: #{conv_block_forward.2} parent=27 // pred_check_branch
        %6238 = sbr.rel (%p6236) target = $region40
      $region39: #{conv_block_forward.2} parent=27 // pred_region
        %s6239 = smul.u32 2, %s16
      $region40: #{conv_block_forward.2} parent=27 // pred_fallthru
        _
    $region28: #{conv_block_forward.2} parent=5 // pred_fallthru
      _
    %p6240 = scmp.le.s32.totalorder 2, %s11
    // Predicated region
    $region41: #{conv_block_forward.2} parent=5 // pred_check
      %p6241 = pneg %p6240
    $region42: #{conv_block_forward.2} parent=5 // pred_check_branch
      %6243 = sbr.rel (%p6241) target = $region44
    $region43: #{conv_block_forward.2} parent=5 // pred_region
      %s6244 = ssub.s32 %s11, 2
      // Predicated region
      $region45: #{conv_block_forward.2} parent=43 // pred_check
        %p6245 = pneg %p87
      $region46: #{conv_block_forward.2} parent=43 // pred_check_branch
        %6247 = sbr.rel (%p6245) target = $region48
      $region47: #{conv_block_forward.2} parent=43 // pred_region
        %p6248 = scmp.lt.s32.totalorder %s17, 1
        %s6249 = scalar_select %p6248, %s17, 1
        %s6250 = smul.addr %s6249, 8
        %s6251 = smul.addr %s6250, 4
        %s6252 = scalar_lea.vmem %s2, %s6251
      $region48: #{conv_block_forward.2} parent=43 // pred_fallthru
        _
      // Predicated region
      $region49: #{conv_block_forward.2} parent=43 // pred_check
        %p6253 = pneg %p113
      $region50: #{conv_block_forward.2} parent=43 // pred_check_branch
        %6255 = sbr.rel (%p6253) target = $region52
      $region51: #{conv_block_forward.2} parent=43 // pred_region
        %p6256 = scmp.lt.s32.totalorder %s17, 1
        %s6257 = scalar_select %p6256, %s17, 1
        %s6258 = smul.addr %s6257, 8
        %s6259 = smul.addr %s6258, 4
        %s6260 = scalar_lea.vmem %s3, %s6259
      $region52: #{conv_block_forward.2} parent=43 // pred_fallthru
        _
      // Predicated region
      $region53: #{conv_block_forward.2} parent=43 // pred_check
        %p6261 = pneg %p139
      $region54: #{conv_block_forward.2} parent=43 // pred_check_branch
        %6263 = sbr.rel (%p6261) target = $region56
      $region55: #{conv_block_forward.2} parent=43 // pred_region
        %s6264 = smul.u32 2, %s17
        %p6265 = scmp.lt.s32.totalorder %s6264, 3
        %s6266 = scalar_select %p6265, %s6264, 3
        %s6267 = smul.addr %s6266, 8
        %s6268 = scalar_lea.vmem %s4, %s6267
      $region56: #{conv_block_forward.2} parent=43 // pred_fallthru
        _
    $region44: #{conv_block_forward.2} parent=5 // pred_fallthru
      _
  $region6: #{conv_block_forward.2} parent=0 // loop_footer
    %s15 = sadd.s32 1, %s11
  $region7: #{conv_block_forward.2} parent=0 // loop_footer_branch
    %10 = sbr.rel target = $region3
  $region8: #{conv_block_forward.2} parent=0 // loop_exit
    _

</llo_original>
